<compile_context>
chip_gen: v6e
topology: v6e:2x2x1
jax: 0.10.0
libtpu: 0.0.40
codegen_flags: <defaults>
</compile_context>

<pallas_src>
import functools

import jax
import jax.numpy as jnp
import numpy as np
from jax.experimental import pallas as pl
from jax.experimental.pallas import tpu as pltpu

_LANE = 128


def _round_up(x, m):
    return (x + m - 1) // m * m


# ----------------------------------------------------------------------------
# Fused BasicBlock kernel: conv1+bn1+relu -> conv2+bn2 -> (+shortcut) -> relu
# One grid step == one image.  All convolutions are implicit-im2col matmuls.
# ----------------------------------------------------------------------------
def _basic_block_kernel(*refs, stride, has_projection, Ho, Wo):
    # Unpack refs according to the static configuration.
    if stride == 1:
        x_refs, rest = refs[:1], refs[1:]
    else:  # stride == 2: 4 polyphase views of the spatially padded input
        x_refs, rest = refs[:4], refs[4:]
    if has_projection:
        w1_ref, b1_ref, w2_ref, b2_ref, ws_ref, bs_ref, o_ref, pad_ref = rest
    else:
        w1_ref, b1_ref, w2_ref, b2_ref, o_ref, pad_ref = rest

    M = Ho * Wo
    cout = o_ref.shape[-1]

    def tap_x(kh, kw):
        # Pixels feeding conv1 tap (kh, kw): x_pad[s*ho + kh, s*wo + kw, :].
        if stride == 1:
            return x_refs[0][kh:kh + Ho, kw:kw + Wo, :]
        ph = x_refs[(kh % 2) * 2 + (kw % 2)]
        dh, dw = kh // 2, kw // 2
        return ph[dh:dh + Ho, dw:dw + Wo, :]

    def conv3x3(tap_fn, w_ref):
        acc = jnp.zeros((M, w_ref.shape[-1]), jnp.float32)
        for kh in range(3):
            for kw in range(3):
                xs = tap_fn(kh, kw)
                xs = xs.reshape(M, xs.shape[-1]).astype(jnp.bfloat16)
                acc = acc + jnp.dot(xs, w_ref[kh, kw],
                                    preferred_element_type=jnp.float32)
        return acc

    # --- conv1 + bn1 (folded into w1/b1) + relu ---
    out1 = jnp.maximum(conv3x3(tap_x, w1_ref) + b1_ref[...], 0.0)

    # Keep conv1's output resident in VMEM (with its zero halo) for conv2.
    pad_ref[...] = jnp.zeros_like(pad_ref)
    pad_ref[1:1 + Ho, 1:1 + Wo, :] = out1.reshape(Ho, Wo, cout)

    def tap_mid(kh, kw):
        return pad_ref[kh:kh + Ho, kw:kw + Wo, :]

    # --- conv2 + bn2 (folded into w2/b2) ---
    out2 = conv3x3(tap_mid, w2_ref) + b2_ref[...]

    # --- shortcut ---
    if has_projection:
        if stride == 1:
            xs = x_refs[0][1:1 + Ho, 1:1 + Wo, :]
        else:
            xs = x_refs[3][0:Ho, 0:Wo, :]       # phase (1,1) == x[s*ho, s*wo]
        xs = xs.reshape(M, xs.shape[-1]).astype(jnp.bfloat16)
        sc = jnp.dot(xs, ws_ref[...],
                     preferred_element_type=jnp.float32) + bs_ref[...]
    else:
        sc = x_refs[0][1:1 + Ho, 1:1 + Wo, :].reshape(M, x_refs[0].shape[-1])

    o_ref[...] = jnp.maximum(out2 + sc, 0.0).astype(o_ref.dtype)


# ----------------------------------------------------------------------------
# Wrapper: BN folding, lane padding, polyphase split for stride 2, pallas_call
# ----------------------------------------------------------------------------
def _fold_bn_into_conv(w_oihw, gamma, beta, mean, var, cin_p, cout_p, eps=1e-5):
    """Fold eval-mode BN into the conv weight; pad channels to lane multiples."""
    scale = gamma / jnp.sqrt(var + eps)                       # (Cout,)
    bias = beta - mean * scale                                # (Cout,)
    w = jnp.transpose(w_oihw, (2, 3, 1, 0)) * scale           # (kh, kw, Cin, Cout)
    kh, kw, ci, co = w.shape
    w = jnp.pad(w, ((0, 0), (0, 0), (0, cin_p - ci), (0, cout_p - co)))
    bias = jnp.pad(bias, (0, cout_p - co)).reshape(1, cout_p)
    return w.astype(jnp.bfloat16), bias.astype(jnp.float32)


@functools.partial(jax.jit, static_argnums=(2,))
def basic_block_forward(x_nchw, params, stride):
    assert stride in (1, 2), "ResNet BasicBlock uses stride 1 or 2"
    x = jnp.transpose(x_nchw, (0, 2, 3, 1)).astype(jnp.float32)   # NHWC
    N, H, W, Cin = x.shape
    Cout = params["w1"].shape[0]
    Ho = (H + 2 - 3) // stride + 1
    Wo = (W + 2 - 3) // stride + 1
    Cin_p = _round_up(Cin, _LANE)
    Cout_p = _round_up(Cout, _LANE)
    Hp, Wp = H + 2, W + 2

    # Spatial zero halo of 1 + channel padding to a lane-dense multiple of 128.
    x_pad = jnp.pad(x, ((0, 0), (1, 1), (1, 1), (0, Cin_p - Cin)))

    w1, b1 = _fold_bn_into_conv(params["w1"], params["bn1_g"], params["bn1_b"],
                                params["bn1_m"], params["bn1_v"], Cin_p, Cout_p)
    w2, b2 = _fold_bn_into_conv(params["w2"], params["bn2_g"], params["bn2_b"],
                                params["bn2_m"], params["bn2_v"], Cout_p, Cout_p)

    has_projection = (stride != 1) or (Cin != Cout)

    if stride == 1:
        x_inputs = [x_pad]
        x_specs = [pl.BlockSpec((None, Hp, Wp, Cin_p), lambda n: (n, 0, 0, 0))]
    else:
        # Polyphase (space-to-depth) split: the kernel's stride-2 taps become
        # plain contiguous static slices of one of these four views.
        assert Hp % 2 == 0 and Wp % 2 == 0
        Hh, Wh = Hp // 2, Wp // 2
        x_inputs = [x_pad[:, i::2, j::2, :] for i in range(2) for j in range(2)]
        x_specs = [pl.BlockSpec((None, Hh, Wh, Cin_p), lambda n: (n, 0, 0, 0))
                   for _ in range(4)]

    inputs = x_inputs + [w1, b1, w2, b2]
    in_specs = x_specs + [
        pl.BlockSpec((3, 3, Cin_p, Cout_p), lambda n: (0, 0, 0, 0)),
        pl.BlockSpec((1, Cout_p), lambda n: (0, 0)),
        pl.BlockSpec((3, 3, Cout_p, Cout_p), lambda n: (0, 0, 0, 0)),
        pl.BlockSpec((1, Cout_p), lambda n: (0, 0)),
    ]
    if has_projection:
        ws, bs = _fold_bn_into_conv(params["ws"], params["bns_g"], params["bns_b"],
                                    params["bns_m"], params["bns_v"], Cin_p, Cout_p)
        inputs += [ws.reshape(Cin_p, Cout_p), bs]
        in_specs += [
            pl.BlockSpec((Cin_p, Cout_p), lambda n: (0, 0)),
            pl.BlockSpec((1, Cout_p), lambda n: (0, 0)),
        ]

    kernel = functools.partial(_basic_block_kernel, stride=stride,
                               has_projection=has_projection, Ho=Ho, Wo=Wo)

    out = pl.pallas_call(
        kernel,
        out_shape=jax.ShapeDtypeStruct((N, Ho * Wo, Cout_p), jnp.float32),
        grid=(N,),
        in_specs=in_specs,
        out_specs=pl.BlockSpec((None, Ho * Wo, Cout_p), lambda n: (n, 0, 0)),
        scratch_shapes=[pltpu.VMEM((Ho + 2, Wo + 2, Cout_p), jnp.float32)],
        compiler_params=pltpu.CompilerParams(
            dimension_semantics=("parallel",),
            vmem_limit_bytes=32 * 1024 * 1024),
    )(*inputs)

    out = out.reshape(N, Ho, Wo, Cout_p)[..., :Cout]
    return jnp.transpose(out, (0, 3, 1, 2))                      # back to NCHW


# ----------------------------------------------------------------------------
# Deterministic parameters + pure-JAX reference (eval-mode BN) for validation
# ----------------------------------------------------------------------------
def make_params(key, in_channels, out_channels):
    ks = jax.random.split(key, 8)
    p = {
        "w1": 0.1 * jax.random.normal(ks[0], (out_channels, in_channels, 3, 3), jnp.float32),
        "w2": 0.1 * jax.random.normal(ks[1], (out_channels, out_channels, 3, 3), jnp.float32),
        "bn1_g": 1.0 + 0.1 * jax.random.normal(ks[2], (out_channels,), jnp.float32),
        "bn1_b": 0.1 * jax.random.normal(ks[3], (out_channels,), jnp.float32),
        "bn1_m": 0.05 * jax.random.normal(ks[4], (out_channels,), jnp.float32),
        "bn1_v": 1.0 + 0.1 * jnp.abs(jax.random.normal(ks[5], (out_channels,), jnp.float32)),
        "bn2_g": 1.0 + 0.1 * jax.random.normal(ks[6], (out_channels,), jnp.float32),
        "bn2_b": 0.1 * jax.random.normal(ks[7], (out_channels,), jnp.float32),
        "bn2_m": jnp.linspace(-0.05, 0.05, out_channels, dtype=jnp.float32),
        "bn2_v": jnp.linspace(0.9, 1.1, out_channels, dtype=jnp.float32),
        "ws": 0.1 * jax.random.normal(jax.random.PRNGKey(123),
                                      (out_channels, in_channels, 1, 1), jnp.float32),
        "bns_g": jnp.linspace(0.9, 1.1, out_channels, dtype=jnp.float32),
        "bns_b": jnp.linspace(-0.1, 0.1, out_channels, dtype=jnp.float32),
        "bns_m": jnp.linspace(-0.02, 0.02, out_channels, dtype=jnp.float32),
        "bns_v": jnp.linspace(0.95, 1.05, out_channels, dtype=jnp.float32),
    }
    return p


def reference_forward(x, params, stride):
    def conv(x, w, s):
        pad = ((1, 1), (1, 1)) if w.shape[-1] == 3 else ((0, 0), (0, 0))
        return jax.lax.conv_general_dilated(
            x, w, window_strides=(s, s), padding=pad,
            dimension_numbers=("NCHW", "OIHW", "NCHW"),
            precision=jax.lax.Precision.HIGHEST)

    def bn(x, g, b, m, v, eps=1e-5):
        sc = (g / jnp.sqrt(v + eps))[None, :, None, None]
        bi = (b - m * g / jnp.sqrt(v + eps))[None, :, None, None]
        return x * sc + bi

    out = jax.nn.relu(bn(conv(x, params["w1"], stride),
                         params["bn1_g"], params["bn1_b"], params["bn1_m"], params["bn1_v"]))
    out = bn(conv(out, params["w2"], 1),
             params["bn2_g"], params["bn2_b"], params["bn2_m"], params["bn2_v"])
    Cin, Cout = x.shape[1], params["w1"].shape[0]
    if stride != 1 or Cin != Cout:
        sc = bn(conv(x, params["ws"], stride),
                params["bns_g"], params["bns_b"], params["bns_m"], params["bns_v"])
    else:
        sc = x
    return jax.nn.relu(out + sc)


if __name__ == "__main__":
    key = jax.random.PRNGKey(0)
    kx1, kp1, kx2, kp2 = jax.random.split(key, 4)

    # Config 1 (projection shortcut): batch=2, in=4, out=8, 16x16, stride=2.
    N, Cin, H, W, Cout, stride = 2, 4, 16, 16, 8, 2
    x1 = jax.random.normal(kx1, (N, Cin, H, W), jnp.float32)
    p1 = make_params(kp1, Cin, Cout)
    y1 = jax.block_until_ready(basic_block_forward(x1, p1, stride))
    y1_ref = jax.block_until_ready(reference_forward(x1, p1, stride))
    np.testing.assert_allclose(np.asarray(y1), np.asarray(y1_ref), rtol=3e-2, atol=3e-2)
    assert y1.shape == (N, Cout, H // stride, W // stride)

    # Config 2 (identity shortcut): batch=2, in=out=8, 8x8, stride=1.
    x2 = jax.random.normal(kx2, (2, 8, 8, 8), jnp.float32)
    p2 = make_params(kp2, 8, 8)
    y2 = jax.block_until_ready(basic_block_forward(x2, p2, 1))
    y2_ref = jax.block_until_ready(reference_forward(x2, p2, 1))
    np.testing.assert_allclose(np.asarray(y2), np.asarray(y2_ref), rtol=3e-2, atol=3e-2)
    assert y2.shape == (2, 8, 8, 8)

    print("KERNEL_OK")
</pallas_src>

<mosaic_0001>
module attributes {stable_mosaic.version = 11 : i64} {
  func.func @_basic_block_kernel(%arg0: i32, %arg1: memref<1x9x9x128xf32, #tpu.memory_space<vmem>>, %arg2: memref<1x9x9x128xf32, #tpu.memory_space<vmem>>, %arg3: memref<1x9x9x128xf32, #tpu.memory_space<vmem>>, %arg4: memref<1x9x9x128xf32, #tpu.memory_space<vmem>>, %arg5: memref<3x3x128x128xbf16, #tpu.memory_space<vmem>>, %arg6: memref<1x128xf32, #tpu.memory_space<vmem>>, %arg7: memref<3x3x128x128xbf16, #tpu.memory_space<vmem>>, %arg8: memref<1x128xf32, #tpu.memory_space<vmem>>, %arg9: memref<128x128xbf16, #tpu.memory_space<vmem>>, %arg10: memref<1x128xf32, #tpu.memory_space<vmem>>, %arg11: memref<1x64x128xf32, #tpu.memory_space<vmem>>, %arg12: memref<10x10x128xf32, #tpu.memory_space<vmem>>) attributes {dimension_semantics = [#tpu.dimension_semantics<parallel>], iteration_bounds = array<i64: 2>, scalar_prefetch = 0 : i64, scratch_operands = 1 : i64, tpu.core_type = #tpu.core_type<tc>, window_params = [{transform_indices = @transform_0, window_bounds = array<i64: 1, 9, 9, 128>}, {transform_indices = @transform_1, window_bounds = array<i64: 1, 9, 9, 128>}, {transform_indices = @transform_2, window_bounds = array<i64: 1, 9, 9, 128>}, {transform_indices = @transform_3, window_bounds = array<i64: 1, 9, 9, 128>}, {pipeline_mode = #tpu.pipeline_mode<synchronous>, transform_indices = @transform_4, window_bounds = array<i64: 3, 3, 128, 128>}, {pipeline_mode = #tpu.pipeline_mode<synchronous>, transform_indices = @transform_5, window_bounds = array<i64: 1, 128>}, {pipeline_mode = #tpu.pipeline_mode<synchronous>, transform_indices = @transform_6, window_bounds = array<i64: 3, 3, 128, 128>}, {pipeline_mode = #tpu.pipeline_mode<synchronous>, transform_indices = @transform_7, window_bounds = array<i64: 1, 128>}, {pipeline_mode = #tpu.pipeline_mode<synchronous>, transform_indices = @transform_8, window_bounds = array<i64: 128, 128>}, {pipeline_mode = #tpu.pipeline_mode<synchronous>, transform_indices = @transform_9, window_bounds = array<i64: 1, 128>}, {transform_indices = @transform_10, window_bounds = array<i64: 1, 64, 128>}]} {
    %cst = arith.constant 0.000000e+00 : f32
    %0 = vector.broadcast %cst : f32 to vector<64x128xf32>
    %c0 = arith.constant 0 : index
    %c0_0 = arith.constant 0 : index
    %c0_1 = arith.constant 0 : index
    %c0_2 = arith.constant 0 : index
    %1 = vector.load %arg1[%c0, %c0_0, %c0_1, %c0_2] : memref<1x9x9x128xf32, #tpu.memory_space<vmem>>, vector<1x8x8x128xf32>
    %2 = vector.shape_cast %1 : vector<1x8x8x128xf32> to vector<8x8x128xf32>
    %3 = vector.shape_cast %2 : vector<8x8x128xf32> to vector<64x128xf32>
    %4 = arith.truncf %3 : vector<64x128xf32> to vector<64x128xbf16>
    %c0_3 = arith.constant 0 : index
    %c0_4 = arith.constant 0 : index
    %c0_5 = arith.constant 0 : index
    %c0_6 = arith.constant 0 : index
    %5 = vector.load %arg5[%c0_3, %c0_4, %c0_5, %c0_6] : memref<3x3x128x128xbf16, #tpu.memory_space<vmem>>, vector<1x1x128x128xbf16>
    %6 = vector.shape_cast %5 : vector<1x1x128x128xbf16> to vector<128x128xbf16>
    %cst_7 = arith.constant dense<0.000000e+00> : vector<64x128xf32>
    %7 = tpu.matmul %4, %6, %cst_7 {dimension_numbers = #tpu.dot_dimension_numbers<[1], [0], [0], [1], [0, 0, 1, 1], [], []>} : vector<64x128xbf16>, vector<128x128xbf16>, vector<64x128xf32> -> vector<64x128xf32>
    %8 = arith.addf %0, %7 : vector<64x128xf32>
    %c0_8 = arith.constant 0 : index
    %c0_9 = arith.constant 0 : index
    %c0_10 = arith.constant 0 : index
    %c0_11 = arith.constant 0 : index
    %9 = vector.load %arg2[%c0_8, %c0_9, %c0_10, %c0_11] : memref<1x9x9x128xf32, #tpu.memory_space<vmem>>, vector<1x8x8x128xf32>
    %10 = vector.shape_cast %9 : vector<1x8x8x128xf32> to vector<8x8x128xf32>
    %11 = vector.shape_cast %10 : vector<8x8x128xf32> to vector<64x128xf32>
    %12 = arith.truncf %11 : vector<64x128xf32> to vector<64x128xbf16>
    %c0_12 = arith.constant 0 : index
    %c1 = arith.constant 1 : index
    %c0_13 = arith.constant 0 : index
    %c0_14 = arith.constant 0 : index
    %13 = vector.load %arg5[%c0_12, %c1, %c0_13, %c0_14] : memref<3x3x128x128xbf16, #tpu.memory_space<vmem>>, vector<1x1x128x128xbf16>
    %14 = vector.shape_cast %13 : vector<1x1x128x128xbf16> to vector<128x128xbf16>
    %cst_15 = arith.constant dense<0.000000e+00> : vector<64x128xf32>
    %15 = tpu.matmul %12, %14, %cst_15 {dimension_numbers = #tpu.dot_dimension_numbers<[1], [0], [0], [1], [0, 0, 1, 1], [], []>} : vector<64x128xbf16>, vector<128x128xbf16>, vector<64x128xf32> -> vector<64x128xf32>
    %16 = arith.addf %8, %15 : vector<64x128xf32>
    %c0_16 = arith.constant 0 : index
    %c0_17 = arith.constant 0 : index
    %c1_18 = arith.constant 1 : index
    %c0_19 = arith.constant 0 : index
    %17 = vector.load %arg1[%c0_16, %c0_17, %c1_18, %c0_19] : memref<1x9x9x128xf32, #tpu.memory_space<vmem>>, vector<1x8x8x128xf32>
    %18 = vector.shape_cast %17 : vector<1x8x8x128xf32> to vector<8x8x128xf32>
    %19 = vector.shape_cast %18 : vector<8x8x128xf32> to vector<64x128xf32>
    %20 = arith.truncf %19 : vector<64x128xf32> to vector<64x128xbf16>
    %c0_20 = arith.constant 0 : index
    %c2 = arith.constant 2 : index
    %c0_21 = arith.constant 0 : index
    %c0_22 = arith.constant 0 : index
    %21 = vector.load %arg5[%c0_20, %c2, %c0_21, %c0_22] : memref<3x3x128x128xbf16, #tpu.memory_space<vmem>>, vector<1x1x128x128xbf16>
    %22 = vector.shape_cast %21 : vector<1x1x128x128xbf16> to vector<128x128xbf16>
    %cst_23 = arith.constant dense<0.000000e+00> : vector<64x128xf32>
    %23 = tpu.matmul %20, %22, %cst_23 {dimension_numbers = #tpu.dot_dimension_numbers<[1], [0], [0], [1], [0, 0, 1, 1], [], []>} : vector<64x128xbf16>, vector<128x128xbf16>, vector<64x128xf32> -> vector<64x128xf32>
    %24 = arith.addf %16, %23 : vector<64x128xf32>
    %c0_24 = arith.constant 0 : index
    %c0_25 = arith.constant 0 : index
    %c0_26 = arith.constant 0 : index
    %c0_27 = arith.constant 0 : index
    %25 = vector.load %arg3[%c0_24, %c0_25, %c0_26, %c0_27] : memref<1x9x9x128xf32, #tpu.memory_space<vmem>>, vector<1x8x8x128xf32>
    %26 = vector.shape_cast %25 : vector<1x8x8x128xf32> to vector<8x8x128xf32>
    %27 = vector.shape_cast %26 : vector<8x8x128xf32> to vector<64x128xf32>
    %28 = arith.truncf %27 : vector<64x128xf32> to vector<64x128xbf16>
    %c1_28 = arith.constant 1 : index
    %c0_29 = arith.constant 0 : index
    %c0_30 = arith.constant 0 : index
    %c0_31 = arith.constant 0 : index
    %29 = vector.load %arg5[%c1_28, %c0_29, %c0_30, %c0_31] : memref<3x3x128x128xbf16, #tpu.memory_space<vmem>>, vector<1x1x128x128xbf16>
    %30 = vector.shape_cast %29 : vector<1x1x128x128xbf16> to vector<128x128xbf16>
    %cst_32 = arith.constant dense<0.000000e+00> : vector<64x128xf32>
    %31 = tpu.matmul %28, %30, %cst_32 {dimension_numbers = #tpu.dot_dimension_numbers<[1], [0], [0], [1], [0, 0, 1, 1], [], []>} : vector<64x128xbf16>, vector<128x128xbf16>, vector<64x128xf32> -> vector<64x128xf32>
    %32 = arith.addf %24, %31 : vector<64x128xf32>
    %c0_33 = arith.constant 0 : index
    %c0_34 = arith.constant 0 : index
    %c0_35 = arith.constant 0 : index
    %c0_36 = arith.constant 0 : index
    %33 = vector.load %arg4[%c0_33, %c0_34, %c0_35, %c0_36] : memref<1x9x9x128xf32, #tpu.memory_space<vmem>>, vector<1x8x8x128xf32>
    %34 = vector.shape_cast %33 : vector<1x8x8x128xf32> to vector<8x8x128xf32>
    %35 = vector.shape_cast %34 : vector<8x8x128xf32> to vector<64x128xf32>
    %36 = arith.truncf %35 : vector<64x128xf32> to vector<64x128xbf16>
    %c1_37 = arith.constant 1 : index
    %c1_38 = arith.constant 1 : index
    %c0_39 = arith.constant 0 : index
    %c0_40 = arith.constant 0 : index
    %37 = vector.load %arg5[%c1_37, %c1_38, %c0_39, %c0_40] : memref<3x3x128x128xbf16, #tpu.memory_space<vmem>>, vector<1x1x128x128xbf16>
    %38 = vector.shape_cast %37 : vector<1x1x128x128xbf16> to vector<128x128xbf16>
    %cst_41 = arith.constant dense<0.000000e+00> : vector<64x128xf32>
    %39 = tpu.matmul %36, %38, %cst_41 {dimension_numbers = #tpu.dot_dimension_numbers<[1], [0], [0], [1], [0, 0, 1, 1], [], []>} : vector<64x128xbf16>, vector<128x128xbf16>, vector<64x128xf32> -> vector<64x128xf32>
    %40 = arith.addf %32, %39 : vector<64x128xf32>
    %c0_42 = arith.constant 0 : index
    %c0_43 = arith.constant 0 : index
    %c1_44 = arith.constant 1 : index
    %c0_45 = arith.constant 0 : index
    %41 = vector.load %arg3[%c0_42, %c0_43, %c1_44, %c0_45] : memref<1x9x9x128xf32, #tpu.memory_space<vmem>>, vector<1x8x8x128xf32>
    %42 = vector.shape_cast %41 : vector<1x8x8x128xf32> to vector<8x8x128xf32>
    %43 = vector.shape_cast %42 : vector<8x8x128xf32> to vector<64x128xf32>
    %44 = arith.truncf %43 : vector<64x128xf32> to vector<64x128xbf16>
    %c1_46 = arith.constant 1 : index
    %c2_47 = arith.constant 2 : index
    %c0_48 = arith.constant 0 : index
    %c0_49 = arith.constant 0 : index
    %45 = vector.load %arg5[%c1_46, %c2_47, %c0_48, %c0_49] : memref<3x3x128x128xbf16, #tpu.memory_space<vmem>>, vector<1x1x128x128xbf16>
    %46 = vector.shape_cast %45 : vector<1x1x128x128xbf16> to vector<128x128xbf16>
    %cst_50 = arith.constant dense<0.000000e+00> : vector<64x128xf32>
    %47 = tpu.matmul %44, %46, %cst_50 {dimension_numbers = #tpu.dot_dimension_numbers<[1], [0], [0], [1], [0, 0, 1, 1], [], []>} : vector<64x128xbf16>, vector<128x128xbf16>, vector<64x128xf32> -> vector<64x128xf32>
    %48 = arith.addf %40, %47 : vector<64x128xf32>
    %c0_51 = arith.constant 0 : index
    %c1_52 = arith.constant 1 : index
    %c0_53 = arith.constant 0 : index
    %c0_54 = arith.constant 0 : index
    %49 = vector.load %arg1[%c0_51, %c1_52, %c0_53, %c0_54] : memref<1x9x9x128xf32, #tpu.memory_space<vmem>>, vector<1x8x8x128xf32>
    %50 = vector.shape_cast %49 : vector<1x8x8x128xf32> to vector<8x8x128xf32>
    %51 = vector.shape_cast %50 : vector<8x8x128xf32> to vector<64x128xf32>
    %52 = arith.truncf %51 : vector<64x128xf32> to vector<64x128xbf16>
    %c2_55 = arith.constant 2 : index
    %c0_56 = arith.constant 0 : index
    %c0_57 = arith.constant 0 : index
    %c0_58 = arith.constant 0 : index
    %53 = vector.load %arg5[%c2_55, %c0_56, %c0_57, %c0_58] : memref<3x3x128x128xbf16, #tpu.memory_space<vmem>>, vector<1x1x128x128xbf16>
    %54 = vector.shape_cast %53 : vector<1x1x128x128xbf16> to vector<128x128xbf16>
    %cst_59 = arith.constant dense<0.000000e+00> : vector<64x128xf32>
    %55 = tpu.matmul %52, %54, %cst_59 {dimension_numbers = #tpu.dot_dimension_numbers<[1], [0], [0], [1], [0, 0, 1, 1], [], []>} : vector<64x128xbf16>, vector<128x128xbf16>, vector<64x128xf32> -> vector<64x128xf32>
    %56 = arith.addf %48, %55 : vector<64x128xf32>
    %c0_60 = arith.constant 0 : index
    %c1_61 = arith.constant 1 : index
    %c0_62 = arith.constant 0 : index
    %c0_63 = arith.constant 0 : index
    %57 = vector.load %arg2[%c0_60, %c1_61, %c0_62, %c0_63] : memref<1x9x9x128xf32, #tpu.memory_space<vmem>>, vector<1x8x8x128xf32>
    %58 = vector.shape_cast %57 : vector<1x8x8x128xf32> to vector<8x8x128xf32>
    %59 = vector.shape_cast %58 : vector<8x8x128xf32> to vector<64x128xf32>
    %60 = arith.truncf %59 : vector<64x128xf32> to vector<64x128xbf16>
    %c2_64 = arith.constant 2 : index
    %c1_65 = arith.constant 1 : index
    %c0_66 = arith.constant 0 : index
    %c0_67 = arith.constant 0 : index
    %61 = vector.load %arg5[%c2_64, %c1_65, %c0_66, %c0_67] : memref<3x3x128x128xbf16, #tpu.memory_space<vmem>>, vector<1x1x128x128xbf16>
    %62 = vector.shape_cast %61 : vector<1x1x128x128xbf16> to vector<128x128xbf16>
    %cst_68 = arith.constant dense<0.000000e+00> : vector<64x128xf32>
    %63 = tpu.matmul %60, %62, %cst_68 {dimension_numbers = #tpu.dot_dimension_numbers<[1], [0], [0], [1], [0, 0, 1, 1], [], []>} : vector<64x128xbf16>, vector<128x128xbf16>, vector<64x128xf32> -> vector<64x128xf32>
    %64 = arith.addf %56, %63 : vector<64x128xf32>
    %c0_69 = arith.constant 0 : index
    %c1_70 = arith.constant 1 : index
    %c1_71 = arith.constant 1 : index
    %c0_72 = arith.constant 0 : index
    %65 = vector.load %arg1[%c0_69, %c1_70, %c1_71, %c0_72] : memref<1x9x9x128xf32, #tpu.memory_space<vmem>>, vector<1x8x8x128xf32>
    %66 = vector.shape_cast %65 : vector<1x8x8x128xf32> to vector<8x8x128xf32>
    %67 = vector.shape_cast %66 : vector<8x8x128xf32> to vector<64x128xf32>
    %68 = arith.truncf %67 : vector<64x128xf32> to vector<64x128xbf16>
    %c2_73 = arith.constant 2 : index
    %c2_74 = arith.constant 2 : index
    %c0_75 = arith.constant 0 : index
    %c0_76 = arith.constant 0 : index
    %69 = vector.load %arg5[%c2_73, %c2_74, %c0_75, %c0_76] : memref<3x3x128x128xbf16, #tpu.memory_space<vmem>>, vector<1x1x128x128xbf16>
    %70 = vector.shape_cast %69 : vector<1x1x128x128xbf16> to vector<128x128xbf16>
    %cst_77 = arith.constant dense<0.000000e+00> : vector<64x128xf32>
    %71 = tpu.matmul %68, %70, %cst_77 {dimension_numbers = #tpu.dot_dimension_numbers<[1], [0], [0], [1], [0, 0, 1, 1], [], []>} : vector<64x128xbf16>, vector<128x128xbf16>, vector<64x128xf32> -> vector<64x128xf32>
    %72 = arith.addf %64, %71 : vector<64x128xf32>
    %c0_78 = arith.constant 0 : index
    %c0_79 = arith.constant 0 : index
    %73 = vector.load %arg6[%c0_78, %c0_79] : memref<1x128xf32, #tpu.memory_space<vmem>>, vector<1x128xf32>
    %74 = vector.broadcast %73 : vector<1x128xf32> to vector<64x128xf32>
    %75 = arith.addf %72, %74 : vector<64x128xf32>
    %cst_80 = arith.constant 0.000000e+00 : f32
    %76 = vector.broadcast %cst_80 : f32 to vector<64x128xf32>
    %77 = arith.maximumf %75, %76 : vector<64x128xf32>
    %cst_81 = arith.constant 0.000000e+00 : f32
    %78 = vector.broadcast %cst_81 : f32 to vector<10x10x128xf32>
    %c0_82 = arith.constant 0 : index
    %c0_83 = arith.constant 0 : index
    %c0_84 = arith.constant 0 : index
    %79 = vector.load %arg12[%c0_82, %c0_83, %c0_84] : memref<10x10x128xf32, #tpu.memory_space<vmem>>, vector<10x10x128xf32>
    tpu.vector_store %arg12[%c0_82, %c0_83, %c0_84], %78 {strides = array<i32>} : memref<10x10x128xf32, #tpu.memory_space<vmem>>, vector<10x10x128xf32>,
    %80 = vector.shape_cast %77 : vector<64x128xf32> to vector<8x8x128xf32>
    %c1_85 = arith.constant 1 : index
    %c1_86 = arith.constant 1 : index
    %c0_87 = arith.constant 0 : index
    %81 = vector.load %arg12[%c1_85, %c1_86, %c0_87] : memref<10x10x128xf32, #tpu.memory_space<vmem>>, vector<8x8x128xf32>
    tpu.vector_store %arg12[%c1_85, %c1_86, %c0_87], %80 {strides = array<i32>} : memref<10x10x128xf32, #tpu.memory_space<vmem>>, vector<8x8x128xf32>,
    %cst_88 = arith.constant 0.000000e+00 : f32
    %82 = vector.broadcast %cst_88 : f32 to vector<64x128xf32>
    %c0_89 = arith.constant 0 : index
    %c0_90 = arith.constant 0 : index
    %c0_91 = arith.constant 0 : index
    %83 = vector.load %arg12[%c0_89, %c0_90, %c0_91] : memref<10x10x128xf32, #tpu.memory_space<vmem>>, vector<8x8x128xf32>
    %84 = vector.shape_cast %83 : vector<8x8x128xf32> to vector<64x128xf32>
    %85 = arith.truncf %84 : vector<64x128xf32> to vector<64x128xbf16>
    %c0_92 = arith.constant 0 : index
    %c0_93 = arith.constant 0 : index
    %c0_94 = arith.constant 0 : index
    %c0_95 = arith.constant 0 : index
    %86 = vector.load %arg7[%c0_92, %c0_93, %c0_94, %c0_95] : memref<3x3x128x128xbf16, #tpu.memory_space<vmem>>, vector<1x1x128x128xbf16>
    %87 = vector.shape_cast %86 : vector<1x1x128x128xbf16> to vector<128x128xbf16>
    %cst_96 = arith.constant dense<0.000000e+00> : vector<64x128xf32>
    %88 = tpu.matmul %85, %87, %cst_96 {dimension_numbers = #tpu.dot_dimension_numbers<[1], [0], [0], [1], [0, 0, 1, 1], [], []>} : vector<64x128xbf16>, vector<128x128xbf16>, vector<64x128xf32> -> vector<64x128xf32>
    %89 = arith.addf %82, %88 : vector<64x128xf32>
    %c0_97 = arith.constant 0 : index
    %c1_98 = arith.constant 1 : index
    %c0_99 = arith.constant 0 : index
    %90 = vector.load %arg12[%c0_97, %c1_98, %c0_99] : memref<10x10x128xf32, #tpu.memory_space<vmem>>, vector<8x8x128xf32>
    %91 = vector.shape_cast %90 : vector<8x8x128xf32> to vector<64x128xf32>
    %92 = arith.truncf %91 : vector<64x128xf32> to vector<64x128xbf16>
    %c0_100 = arith.constant 0 : index
    %c1_101 = arith.constant 1 : index
    %c0_102 = arith.constant 0 : index
    %c0_103 = arith.constant 0 : index
    %93 = vector.load %arg7[%c0_100, %c1_101, %c0_102, %c0_103] : memref<3x3x128x128xbf16, #tpu.memory_space<vmem>>, vector<1x1x128x128xbf16>
    %94 = vector.shape_cast %93 : vector<1x1x128x128xbf16> to vector<128x128xbf16>
    %cst_104 = arith.constant dense<0.000000e+00> : vector<64x128xf32>
    %95 = tpu.matmul %92, %94, %cst_104 {dimension_numbers = #tpu.dot_dimension_numbers<[1], [0], [0], [1], [0, 0, 1, 1], [], []>} : vector<64x128xbf16>, vector<128x128xbf16>, vector<64x128xf32> -> vector<64x128xf32>
    %96 = arith.addf %89, %95 : vector<64x128xf32>
    %c0_105 = arith.constant 0 : index
    %c2_106 = arith.constant 2 : index
    %c0_107 = arith.constant 0 : index
    %97 = vector.load %arg12[%c0_105, %c2_106, %c0_107] : memref<10x10x128xf32, #tpu.memory_space<vmem>>, vector<8x8x128xf32>
    %98 = vector.shape_cast %97 : vector<8x8x128xf32> to vector<64x128xf32>
    %99 = arith.truncf %98 : vector<64x128xf32> to vector<64x128xbf16>
    %c0_108 = arith.constant 0 : index
    %c2_109 = arith.constant 2 : index
    %c0_110 = arith.constant 0 : index
    %c0_111 = arith.constant 0 : index
    %100 = vector.load %arg7[%c0_108, %c2_109, %c0_110, %c0_111] : memref<3x3x128x128xbf16, #tpu.memory_space<vmem>>, vector<1x1x128x128xbf16>
    %101 = vector.shape_cast %100 : vector<1x1x128x128xbf16> to vector<128x128xbf16>
    %cst_112 = arith.constant dense<0.000000e+00> : vector<64x128xf32>
    %102 = tpu.matmul %99, %101, %cst_112 {dimension_numbers = #tpu.dot_dimension_numbers<[1], [0], [0], [1], [0, 0, 1, 1], [], []>} : vector<64x128xbf16>, vector<128x128xbf16>, vector<64x128xf32> -> vector<64x128xf32>
    %103 = arith.addf %96, %102 : vector<64x128xf32>
    %c1_113 = arith.constant 1 : index
    %c0_114 = arith.constant 0 : index
    %c0_115 = arith.constant 0 : index
    %104 = vector.load %arg12[%c1_113, %c0_114, %c0_115] : memref<10x10x128xf32, #tpu.memory_space<vmem>>, vector<8x8x128xf32>
    %105 = vector.shape_cast %104 : vector<8x8x128xf32> to vector<64x128xf32>
    %106 = arith.truncf %105 : vector<64x128xf32> to vector<64x128xbf16>
    %c1_116 = arith.constant 1 : index
    %c0_117 = arith.constant 0 : index
    %c0_118 = arith.constant 0 : index
    %c0_119 = arith.constant 0 : index
    %107 = vector.load %arg7[%c1_116, %c0_117, %c0_118, %c0_119] : memref<3x3x128x128xbf16, #tpu.memory_space<vmem>>, vector<1x1x128x128xbf16>
    %108 = vector.shape_cast %107 : vector<1x1x128x128xbf16> to vector<128x128xbf16>
    %cst_120 = arith.constant dense<0.000000e+00> : vector<64x128xf32>
    %109 = tpu.matmul %106, %108, %cst_120 {dimension_numbers = #tpu.dot_dimension_numbers<[1], [0], [0], [1], [0, 0, 1, 1], [], []>} : vector<64x128xbf16>, vector<128x128xbf16>, vector<64x128xf32> -> vector<64x128xf32>
    %110 = arith.addf %103, %109 : vector<64x128xf32>
    %c1_121 = arith.constant 1 : index
    %c1_122 = arith.constant 1 : index
    %c0_123 = arith.constant 0 : index
    %111 = vector.load %arg12[%c1_121, %c1_122, %c0_123] : memref<10x10x128xf32, #tpu.memory_space<vmem>>, vector<8x8x128xf32>
    %112 = vector.shape_cast %111 : vector<8x8x128xf32> to vector<64x128xf32>
    %113 = arith.truncf %112 : vector<64x128xf32> to vector<64x128xbf16>
    %c1_124 = arith.constant 1 : index
    %c1_125 = arith.constant 1 : index
    %c0_126 = arith.constant 0 : index
    %c0_127 = arith.constant 0 : index
    %114 = vector.load %arg7[%c1_124, %c1_125, %c0_126, %c0_127] : memref<3x3x128x128xbf16, #tpu.memory_space<vmem>>, vector<1x1x128x128xbf16>
    %115 = vector.shape_cast %114 : vector<1x1x128x128xbf16> to vector<128x128xbf16>
    %cst_128 = arith.constant dense<0.000000e+00> : vector<64x128xf32>
    %116 = tpu.matmul %113, %115, %cst_128 {dimension_numbers = #tpu.dot_dimension_numbers<[1], [0], [0], [1], [0, 0, 1, 1], [], []>} : vector<64x128xbf16>, vector<128x128xbf16>, vector<64x128xf32> -> vector<64x128xf32>
    %117 = arith.addf %110, %116 : vector<64x128xf32>
    %c1_129 = arith.constant 1 : index
    %c2_130 = arith.constant 2 : index
    %c0_131 = arith.constant 0 : index
    %118 = vector.load %arg12[%c1_129, %c2_130, %c0_131] : memref<10x10x128xf32, #tpu.memory_space<vmem>>, vector<8x8x128xf32>
    %119 = vector.shape_cast %118 : vector<8x8x128xf32> to vector<64x128xf32>
    %120 = arith.truncf %119 : vector<64x128xf32> to vector<64x128xbf16>
    %c1_132 = arith.constant 1 : index
    %c2_133 = arith.constant 2 : index
    %c0_134 = arith.constant 0 : index
    %c0_135 = arith.constant 0 : index
    %121 = vector.load %arg7[%c1_132, %c2_133, %c0_134, %c0_135] : memref<3x3x128x128xbf16, #tpu.memory_space<vmem>>, vector<1x1x128x128xbf16>
    %122 = vector.shape_cast %121 : vector<1x1x128x128xbf16> to vector<128x128xbf16>
    %cst_136 = arith.constant dense<0.000000e+00> : vector<64x128xf32>
    %123 = tpu.matmul %120, %122, %cst_136 {dimension_numbers = #tpu.dot_dimension_numbers<[1], [0], [0], [1], [0, 0, 1, 1], [], []>} : vector<64x128xbf16>, vector<128x128xbf16>, vector<64x128xf32> -> vector<64x128xf32>
    %124 = arith.addf %117, %123 : vector<64x128xf32>
    %c2_137 = arith.constant 2 : index
    %c0_138 = arith.constant 0 : index
    %c0_139 = arith.constant 0 : index
    %125 = vector.load %arg12[%c2_137, %c0_138, %c0_139] : memref<10x10x128xf32, #tpu.memory_space<vmem>>, vector<8x8x128xf32>
    %126 = vector.shape_cast %125 : vector<8x8x128xf32> to vector<64x128xf32>
    %127 = arith.truncf %126 : vector<64x128xf32> to vector<64x128xbf16>
    %c2_140 = arith.constant 2 : index
    %c0_141 = arith.constant 0 : index
    %c0_142 = arith.constant 0 : index
    %c0_143 = arith.constant 0 : index
    %128 = vector.load %arg7[%c2_140, %c0_141, %c0_142, %c0_143] : memref<3x3x128x128xbf16, #tpu.memory_space<vmem>>, vector<1x1x128x128xbf16>
    %129 = vector.shape_cast %128 : vector<1x1x128x128xbf16> to vector<128x128xbf16>
    %cst_144 = arith.constant dense<0.000000e+00> : vector<64x128xf32>
    %130 = tpu.matmul %127, %129, %cst_144 {dimension_numbers = #tpu.dot_dimension_numbers<[1], [0], [0], [1], [0, 0, 1, 1], [], []>} : vector<64x128xbf16>, vector<128x128xbf16>, vector<64x128xf32> -> vector<64x128xf32>
    %131 = arith.addf %124, %130 : vector<64x128xf32>
    %c2_145 = arith.constant 2 : index
    %c1_146 = arith.constant 1 : index
    %c0_147 = arith.constant 0 : index
    %132 = vector.load %arg12[%c2_145, %c1_146, %c0_147] : memref<10x10x128xf32, #tpu.memory_space<vmem>>, vector<8x8x128xf32>
    %133 = vector.shape_cast %132 : vector<8x8x128xf32> to vector<64x128xf32>
    %134 = arith.truncf %133 : vector<64x128xf32> to vector<64x128xbf16>
    %c2_148 = arith.constant 2 : index
    %c1_149 = arith.constant 1 : index
    %c0_150 = arith.constant 0 : index
    %c0_151 = arith.constant 0 : index
    %135 = vector.load %arg7[%c2_148, %c1_149, %c0_150, %c0_151] : memref<3x3x128x128xbf16, #tpu.memory_space<vmem>>, vector<1x1x128x128xbf16>
    %136 = vector.shape_cast %135 : vector<1x1x128x128xbf16> to vector<128x128xbf16>
    %cst_152 = arith.constant dense<0.000000e+00> : vector<64x128xf32>
    %137 = tpu.matmul %134, %136, %cst_152 {dimension_numbers = #tpu.dot_dimension_numbers<[1], [0], [0], [1], [0, 0, 1, 1], [], []>} : vector<64x128xbf16>, vector<128x128xbf16>, vector<64x128xf32> -> vector<64x128xf32>
    %138 = arith.addf %131, %137 : vector<64x128xf32>
    %c2_153 = arith.constant 2 : index
    %c2_154 = arith.constant 2 : index
    %c0_155 = arith.constant 0 : index
    %139 = vector.load %arg12[%c2_153, %c2_154, %c0_155] : memref<10x10x128xf32, #tpu.memory_space<vmem>>, vector<8x8x128xf32>
    %140 = vector.shape_cast %139 : vector<8x8x128xf32> to vector<64x128xf32>
    %141 = arith.truncf %140 : vector<64x128xf32> to vector<64x128xbf16>
    %c2_156 = arith.constant 2 : index
    %c2_157 = arith.constant 2 : index
    %c0_158 = arith.constant 0 : index
    %c0_159 = arith.constant 0 : index
    %142 = vector.load %arg7[%c2_156, %c2_157, %c0_158, %c0_159] : memref<3x3x128x128xbf16, #tpu.memory_space<vmem>>, vector<1x1x128x128xbf16>
    %143 = vector.shape_cast %142 : vector<1x1x128x128xbf16> to vector<128x128xbf16>
    %cst_160 = arith.constant dense<0.000000e+00> : vector<64x128xf32>
    %144 = tpu.matmul %141, %143, %cst_160 {dimension_numbers = #tpu.dot_dimension_numbers<[1], [0], [0], [1], [0, 0, 1, 1], [], []>} : vector<64x128xbf16>, vector<128x128xbf16>, vector<64x128xf32> -> vector<64x128xf32>
    %145 = arith.addf %138, %144 : vector<64x128xf32>
    %c0_161 = arith.constant 0 : index
    %c0_162 = arith.constant 0 : index
    %146 = vector.load %arg8[%c0_161, %c0_162] : memref<1x128xf32, #tpu.memory_space<vmem>>, vector<1x128xf32>
    %147 = vector.broadcast %146 : vector<1x128xf32> to vector<64x128xf32>
    %148 = arith.addf %145, %147 : vector<64x128xf32>
    %c0_163 = arith.constant 0 : index
    %c0_164 = arith.constant 0 : index
    %c0_165 = arith.constant 0 : index
    %c0_166 = arith.constant 0 : index
    %149 = vector.load %arg4[%c0_163, %c0_164, %c0_165, %c0_166] : memref<1x9x9x128xf32, #tpu.memory_space<vmem>>, vector<1x8x8x128xf32>
    %150 = vector.shape_cast %149 : vector<1x8x8x128xf32> to vector<8x8x128xf32>
    %151 = vector.shape_cast %150 : vector<8x8x128xf32> to vector<64x128xf32>
    %152 = arith.truncf %151 : vector<64x128xf32> to vector<64x128xbf16>
    %c0_167 = arith.constant 0 : index
    %c0_168 = arith.constant 0 : index
    %153 = vector.load %arg9[%c0_167, %c0_168] : memref<128x128xbf16, #tpu.memory_space<vmem>>, vector<128x128xbf16>
    %cst_169 = arith.constant dense<0.000000e+00> : vector<64x128xf32>
    %154 = tpu.matmul %152, %153, %cst_169 {dimension_numbers = #tpu.dot_dimension_numbers<[1], [0], [0], [1], [0, 0, 1, 1], [], []>} : vector<64x128xbf16>, vector<128x128xbf16>, vector<64x128xf32> -> vector<64x128xf32>
    %c0_170 = arith.constant 0 : index
    %c0_171 = arith.constant 0 : index
    %155 = vector.load %arg10[%c0_170, %c0_171] : memref<1x128xf32, #tpu.memory_space<vmem>>, vector<1x128xf32>
    %156 = vector.broadcast %155 : vector<1x128xf32> to vector<64x128xf32>
    %157 = arith.addf %154, %156 : vector<64x128xf32>
    %158 = arith.addf %148, %157 : vector<64x128xf32>
    %cst_172 = arith.constant 0.000000e+00 : f32
    %159 = vector.broadcast %cst_172 : f32 to vector<64x128xf32>
    %160 = arith.maximumf %158, %159 : vector<64x128xf32>
    %c0_173 = arith.constant 0 : index
    %c0_174 = arith.constant 0 : index
    %c0_175 = arith.constant 0 : index
    %161 = vector.load %arg11[%c0_173, %c0_174, %c0_175] : memref<1x64x128xf32, #tpu.memory_space<vmem>>, vector<1x64x128xf32>
    %162 = vector.shape_cast %161 : vector<1x64x128xf32> to vector<64x128xf32>
    %163 = vector.shape_cast %160 : vector<64x128xf32> to vector<1x64x128xf32>
    tpu.vector_store %arg11[%c0_173, %c0_174, %c0_175], %163 {strides = array<i32>} : memref<1x64x128xf32, #tpu.memory_space<vmem>>, vector<1x64x128xf32>,
    return
  }
  func.func @transform_0(%arg0: i32) -> (i32, i32, i32, i32) {
    %c0_i32 = arith.constant 0 : i32
    %c0_i32_0 = arith.constant 0 : i32
    %c0_i32_1 = arith.constant 0 : i32
    %c0_i32_2 = arith.constant 0 : i32
    return %arg0, %c0_i32, %c0_i32_0, %c0_i32_1 : i32, i32, i32, i32
  }
  func.func @transform_1(%arg0: i32) -> (i32, i32, i32, i32) {
    %c0_i32 = arith.constant 0 : i32
    %c0_i32_0 = arith.constant 0 : i32
    %c0_i32_1 = arith.constant 0 : i32
    %c0_i32_2 = arith.constant 0 : i32
    return %arg0, %c0_i32, %c0_i32_0, %c0_i32_1 : i32, i32, i32, i32
  }
  func.func @transform_2(%arg0: i32) -> (i32, i32, i32, i32) {
    %c0_i32 = arith.constant 0 : i32
    %c0_i32_0 = arith.constant 0 : i32
    %c0_i32_1 = arith.constant 0 : i32
    %c0_i32_2 = arith.constant 0 : i32
    return %arg0, %c0_i32, %c0_i32_0, %c0_i32_1 : i32, i32, i32, i32
  }
  func.func @transform_3(%arg0: i32) -> (i32, i32, i32, i32) {
    %c0_i32 = arith.constant 0 : i32
    %c0_i32_0 = arith.constant 0 : i32
    %c0_i32_1 = arith.constant 0 : i32
    %c0_i32_2 = arith.constant 0 : i32
    return %arg0, %c0_i32, %c0_i32_0, %c0_i32_1 : i32, i32, i32, i32
  }
  func.func @transform_4(%arg0: i32) -> (i32, i32, i32, i32) {
    %c0_i32 = arith.constant 0 : i32
    %c0_i32_0 = arith.constant 0 : i32
    %c0_i32_1 = arith.constant 0 : i32
    %c0_i32_2 = arith.constant 0 : i32
    %c0_i32_3 = arith.constant 0 : i32
    return %c0_i32, %c0_i32_0, %c0_i32_1, %c0_i32_2 : i32, i32, i32, i32
  }
  func.func @transform_5(%arg0: i32) -> (i32, i32) {
    %c0_i32 = arith.constant 0 : i32
    %c0_i32_0 = arith.constant 0 : i32
    %c0_i32_1 = arith.constant 0 : i32
    return %c0_i32, %c0_i32_0 : i32, i32
  }
  func.func @transform_6(%arg0: i32) -> (i32, i32, i32, i32) {
    %c0_i32 = arith.constant 0 : i32
    %c0_i32_0 = arith.constant 0 : i32
    %c0_i32_1 = arith.constant 0 : i32
    %c0_i32_2 = arith.constant 0 : i32
    %c0_i32_3 = arith.constant 0 : i32
    return %c0_i32, %c0_i32_0, %c0_i32_1, %c0_i32_2 : i32, i32, i32, i32
  }
  func.func @transform_7(%arg0: i32) -> (i32, i32) {
    %c0_i32 = arith.constant 0 : i32
    %c0_i32_0 = arith.constant 0 : i32
    %c0_i32_1 = arith.constant 0 : i32
    return %c0_i32, %c0_i32_0 : i32, i32
  }
  func.func @transform_8(%arg0: i32) -> (i32, i32) {
    %c0_i32 = arith.constant 0 : i32
    %c0_i32_0 = arith.constant 0 : i32
    %c0_i32_1 = arith.constant 0 : i32
    return %c0_i32, %c0_i32_0 : i32, i32
  }
  func.func @transform_9(%arg0: i32) -> (i32, i32) {
    %c0_i32 = arith.constant 0 : i32
    %c0_i32_0 = arith.constant 0 : i32
    %c0_i32_1 = arith.constant 0 : i32
    return %c0_i32, %c0_i32_0 : i32, i32
  }
  func.func @transform_10(%arg0: i32) -> (i32, i32, i32) {
    %c0_i32 = arith.constant 0 : i32
    %c0_i32_0 = arith.constant 0 : i32
    %c0_i32_1 = arith.constant 0 : i32
    return %arg0, %c0_i32, %c0_i32_0 : i32, i32, i32
  }
}

</mosaic_0001>

<llo_original>
// kernel: basic_block_forward.1
$region0: #{basic_block_forward.1}
  #allocation0 [shape = 'u32[]', space=smem, size = 0x4, offset = 0x4, fixed_abs, tag = 'smem constant byte address 0x4 - core index']
  #allocation1 [shape = 'u32[144,128]{1,0:T(1,128)}', space=vmem, size = 0x12000, scoped, tag = 'internal scratch']
  #allocation2 [shape = 'f32[10,10,128]{2,1,0:T(8,128)}', space=vmem, size = 0x14000, scoped, tag = 'scratch operand']
  %s0 = inlined_call_operand.vmem [shape: f32[2,9,9,128], index: 0, kind: input, shape index: {}]
  %s1 = inlined_call_operand.vmem [shape: f32[2,9,9,128], index: 1, kind: input, shape index: {}]
  %s2 = inlined_call_operand.vmem [shape: f32[2,9,9,128], index: 2, kind: input, shape index: {}]
  %s3 = inlined_call_operand.vmem [shape: f32[2,9,9,128], index: 3, kind: input, shape index: {}]
  %s4 = inlined_call_operand.vmem [shape: bf16[3,3,128,128], index: 4, kind: input, shape index: {}]
  %s5 = inlined_call_operand.vmem [shape: f32[1,128], index: 5, kind: input, shape index: {}]
  %s6 = inlined_call_operand.vmem [shape: bf16[3,3,128,128], index: 6, kind: input, shape index: {}]
  %s7 = inlined_call_operand.vmem [shape: f32[1,128], index: 7, kind: input, shape index: {}]
  %s8 = inlined_call_operand.vmem [shape: bf16[128,128], index: 8, kind: input, shape index: {}]
  %s9 = inlined_call_operand.vmem [shape: f32[1,128], index: 9, kind: input, shape index: {}]
  %s10 = inlined_call_operand.vmem [shape: f32[2,64,128], index: 10, kind: output, shape index: {}]
  %s11 = sld [smem:[#allocation0]]
  $region73: #{basic_block_forward.1} parent=0
    _
  %s13 = ssub.s32 1, %s11
  %s14 = scalar_select 0, %s13, %s11
  loop: start=0, step=1, limit=4
  $region2: #{basic_block_forward.1} parent=0 // loop_pre_header
    _
  $region3: #{basic_block_forward.1} parent=0 // loop_header
    %s16 = sphi 0, %s20
    %p17 = scmp.ge.s32.totalorder %s16, 4
    %s26 = sphi 0, %s28
    %s29 = sphi 0, %s26
    %s30 = sphi 0, %s29
    %s46 = sphi 0, %s30
    %s52 = sphi 0, %s54
    %s55 = sphi 0, %s52
    %s56 = sphi 0, %s55
    %s72 = sphi 0, %s56
    %s78 = sphi 0, %s80
    %s81 = sphi 0, %s78
    %s82 = sphi 0, %s81
    %s98 = sphi 0, %s82
    %s104 = sphi 0, %s106
    %s107 = sphi 0, %s104
    %s108 = sphi 0, %s107
    %s124 = sphi 0, %s108
    %s128 = sphi 0, %s128
    %s130 = sphi 0, %s128
    %s131 = sphi 0, %s130
    %s145 = sphi 0, %s131
    %s149 = sphi 0, %s149
    %s151 = sphi 0, %s149
    %s152 = sphi 0, %s151
    %s166 = sphi 0, %s152
    %s170 = sphi 0, %s170
    %s172 = sphi 0, %s170
    %s173 = sphi 0, %s172
    %s187 = sphi 0, %s173
    %s191 = sphi 0, %s191
    %s193 = sphi 0, %s191
    %s194 = sphi 0, %s193
    %s208 = sphi 0, %s194
    %s212 = sphi 0, %s212
    %s214 = sphi 0, %s212
    %s215 = sphi 0, %s214
    %s229 = sphi 0, %s215
    %s233 = sphi 0, %s233
    %s235 = sphi 0, %s233
    %s236 = sphi 0, %s235
    %s250 = sphi 0, %s236
    %s256 = sphi 0, %s258
    %s259 = sphi 0, %s256
    %s260 = sphi 0, %s259
    %s276 = sphi 0, %s260
  $region4: #{basic_block_forward.1} parent=0 // loop_header_branch
    %19 = sbr.rel (%p17) target = $region8
  $region5: #{basic_block_forward.1} parent=0 // loop_body
    %s21 = ssub.s32 %s16, 1
    %s22 = ssub.s32 %s16, 2
    %s23 = sadd.s32 %s16, 1
    %s24 = ssub.s32 %s16, %s23
    %p25 = scmp.eq.s32.totalorder %s24, 0
    %s27 = sadd.s32 %s26, 1
    %s28 = scalar_select %p25, %s26, %s27
    %p31 = pneg %p25
    %p32 = scmp.eq.s32.totalorder %s16, 1
    %p33 = por %p31, %p32
    %p34 = scmp.ne.s32.totalorder %s26, %s29
    %p35 = scmp.eq.s32.totalorder %s16, 0
    %p36 = por %p34, %p35
    %p37 = scmp.ne.s32.totalorder %s26, %s29
    %p38 = scmp.eq.s32.totalorder %s21, 1
    %p39 = por %p37, %p38
    %p40 = scmp.ne.s32.totalorder %s29, %s30
    %p41 = scmp.eq.s32.totalorder %s21, 0
    %p42 = por %p40, %p41
    %p43 = scmp.ne.s32.totalorder %s29, %s30
    %p44 = scmp.eq.s32.totalorder %s22, 1
    %p45 = por %p43, %p44
    %p47 = scmp.ne.s32.totalorder %s30, %s46
    %p48 = scmp.eq.s32.totalorder %s22, 0
    %p49 = por %p47, %p48
    %s50 = ssub.s32 %s16, %s23
    %p51 = scmp.eq.s32.totalorder %s50, 0
    %s53 = sadd.s32 %s52, 1
    %s54 = scalar_select %p51, %s52, %s53
    %p57 = pneg %p51
    %p58 = scmp.eq.s32.totalorder %s16, 1
    %p59 = por %p57, %p58
    %p60 = scmp.ne.s32.totalorder %s52, %s55
    %p61 = scmp.eq.s32.totalorder %s16, 0
    %p62 = por %p60, %p61
    %p63 = scmp.ne.s32.totalorder %s52, %s55
    %p64 = scmp.eq.s32.totalorder %s21, 1
    %p65 = por %p63, %p64
    %p66 = scmp.ne.s32.totalorder %s55, %s56
    %p67 = scmp.eq.s32.totalorder %s21, 0
    %p68 = por %p66, %p67
    %p69 = scmp.ne.s32.totalorder %s55, %s56
    %p70 = scmp.eq.s32.totalorder %s22, 1
    %p71 = por %p69, %p70
    %p73 = scmp.ne.s32.totalorder %s56, %s72
    %p74 = scmp.eq.s32.totalorder %s22, 0
    %p75 = por %p73, %p74
    %s76 = ssub.s32 %s16, %s23
    %p77 = scmp.eq.s32.totalorder %s76, 0
    %s79 = sadd.s32 %s78, 1
    %s80 = scalar_select %p77, %s78, %s79
    %p83 = pneg %p77
    %p84 = scmp.eq.s32.totalorder %s16, 1
    %p85 = por %p83, %p84
    %p86 = scmp.ne.s32.totalorder %s78, %s81
    %p87 = scmp.eq.s32.totalorder %s16, 0
    %p88 = por %p86, %p87
    %p89 = scmp.ne.s32.totalorder %s78, %s81
    %p90 = scmp.eq.s32.totalorder %s21, 1
    %p91 = por %p89, %p90
    %p92 = scmp.ne.s32.totalorder %s81, %s82
    %p93 = scmp.eq.s32.totalorder %s21, 0
    %p94 = por %p92, %p93
    %p95 = scmp.ne.s32.totalorder %s81, %s82
    %p96 = scmp.eq.s32.totalorder %s22, 1
    %p97 = por %p95, %p96
    %p99 = scmp.ne.s32.totalorder %s82, %s98
    %p100 = scmp.eq.s32.totalorder %s22, 0
    %p101 = por %p99, %p100
    %s102 = ssub.s32 %s16, %s23
    %p103 = scmp.eq.s32.totalorder %s102, 0
    %s105 = sadd.s32 %s104, 1
    %s106 = scalar_select %p103, %s104, %s105
    %p109 = pneg %p103
    %p110 = scmp.eq.s32.totalorder %s16, 1
    %p111 = por %p109, %p110
    %p112 = scmp.ne.s32.totalorder %s104, %s107
    %p113 = scmp.eq.s32.totalorder %s16, 0
    %p114 = por %p112, %p113
    %p115 = scmp.ne.s32.totalorder %s104, %s107
    %p116 = scmp.eq.s32.totalorder %s21, 1
    %p117 = por %p115, %p116
    %p118 = scmp.ne.s32.totalorder %s107, %s108
    %p119 = scmp.eq.s32.totalorder %s21, 0
    %p120 = por %p118, %p119
    %p121 = scmp.ne.s32.totalorder %s107, %s108
    %p122 = scmp.eq.s32.totalorder %s22, 1
    %p123 = por %p121, %p122
    %p125 = scmp.ne.s32.totalorder %s108, %s124
    %p126 = scmp.eq.s32.totalorder %s22, 0
    %p127 = por %p125, %p126
    %s129 = sadd.s32 %s128, 1
    %p132 = scmp.eq.s32.totalorder %s16, 1
    %p133 = scmp.ne.s32.totalorder %s128, %s130
    %p134 = scmp.eq.s32.totalorder %s16, 0
    %p135 = por %p133, %p134
    %p136 = scmp.ne.s32.totalorder %s128, %s130
    %p137 = scmp.eq.s32.totalorder %s21, 1
    %p138 = por %p136, %p137
    %p139 = scmp.ne.s32.totalorder %s130, %s131
    %p140 = scmp.eq.s32.totalorder %s21, 0
    %p141 = por %p139, %p140
    %p142 = scmp.ne.s32.totalorder %s130, %s131
    %p143 = scmp.eq.s32.totalorder %s22, 1
    %p144 = por %p142, %p143
    %p146 = scmp.ne.s32.totalorder %s131, %s145
    %p147 = scmp.eq.s32.totalorder %s22, 0
    %p148 = por %p146, %p147
    %s150 = sadd.s32 %s149, 1
    %p153 = scmp.eq.s32.totalorder %s16, 1
    %p154 = scmp.ne.s32.totalorder %s149, %s151
    %p155 = scmp.eq.s32.totalorder %s16, 0
    %p156 = por %p154, %p155
    %p157 = scmp.ne.s32.totalorder %s149, %s151
    %p158 = scmp.eq.s32.totalorder %s21, 1
    %p159 = por %p157, %p158
    %p160 = scmp.ne.s32.totalorder %s151, %s152
    %p161 = scmp.eq.s32.totalorder %s21, 0
    %p162 = por %p160, %p161
    %p163 = scmp.ne.s32.totalorder %s151, %s152
    %p164 = scmp.eq.s32.totalorder %s22, 1
    %p165 = por %p163, %p164
    %p167 = scmp.ne.s32.totalorder %s152, %s166
    %p168 = scmp.eq.s32.totalorder %s22, 0
    %p169 = por %p167, %p168
    %s171 = sadd.s32 %s170, 1
    %p174 = scmp.eq.s32.totalorder %s16, 1
    %p175 = scmp.ne.s32.totalorder %s170, %s172
    %p176 = scmp.eq.s32.totalorder %s16, 0
    %p177 = por %p175, %p176
    %p178 = scmp.ne.s32.totalorder %s170, %s172
    %p179 = scmp.eq.s32.totalorder %s21, 1
    %p180 = por %p178, %p179
    %p181 = scmp.ne.s32.totalorder %s172, %s173
    %p182 = scmp.eq.s32.totalorder %s21, 0
    %p183 = por %p181, %p182
    %p184 = scmp.ne.s32.totalorder %s172, %s173
    %p185 = scmp.eq.s32.totalorder %s22, 1
    %p186 = por %p184, %p185
    %p188 = scmp.ne.s32.totalorder %s173, %s187
    %p189 = scmp.eq.s32.totalorder %s22, 0
    %p190 = por %p188, %p189
    %s192 = sadd.s32 %s191, 1
    %p195 = scmp.eq.s32.totalorder %s16, 1
    %p196 = scmp.ne.s32.totalorder %s191, %s193
    %p197 = scmp.eq.s32.totalorder %s16, 0
    %p198 = por %p196, %p197
    %p199 = scmp.ne.s32.totalorder %s191, %s193
    %p200 = scmp.eq.s32.totalorder %s21, 1
    %p201 = por %p199, %p200
    %p202 = scmp.ne.s32.totalorder %s193, %s194
    %p203 = scmp.eq.s32.totalorder %s21, 0
    %p204 = por %p202, %p203
    %p205 = scmp.ne.s32.totalorder %s193, %s194
    %p206 = scmp.eq.s32.totalorder %s22, 1
    %p207 = por %p205, %p206
    %p209 = scmp.ne.s32.totalorder %s194, %s208
    %p210 = scmp.eq.s32.totalorder %s22, 0
    %p211 = por %p209, %p210
    %s213 = sadd.s32 %s212, 1
    %p216 = scmp.eq.s32.totalorder %s16, 1
    %p217 = scmp.ne.s32.totalorder %s212, %s214
    %p218 = scmp.eq.s32.totalorder %s16, 0
    %p219 = por %p217, %p218
    %p220 = scmp.ne.s32.totalorder %s212, %s214
    %p221 = scmp.eq.s32.totalorder %s21, 1
    %p222 = por %p220, %p221
    %p223 = scmp.ne.s32.totalorder %s214, %s215
    %p224 = scmp.eq.s32.totalorder %s21, 0
    %p225 = por %p223, %p224
    %p226 = scmp.ne.s32.totalorder %s214, %s215
    %p227 = scmp.eq.s32.totalorder %s22, 1
    %p228 = por %p226, %p227
    %p230 = scmp.ne.s32.totalorder %s215, %s229
    %p231 = scmp.eq.s32.totalorder %s22, 0
    %p232 = por %p230, %p231
    %s234 = sadd.s32 %s233, 1
    %p237 = scmp.eq.s32.totalorder %s16, 1
    %p238 = scmp.ne.s32.totalorder %s233, %s235
    %p239 = scmp.eq.s32.totalorder %s16, 0
    %p240 = por %p238, %p239
    %p241 = scmp.ne.s32.totalorder %s233, %s235
    %p242 = scmp.eq.s32.totalorder %s21, 1
    %p243 = por %p241, %p242
    %p244 = scmp.ne.s32.totalorder %s235, %s236
    %p245 = scmp.eq.s32.totalorder %s21, 0
    %p246 = por %p244, %p245
    %p247 = scmp.ne.s32.totalorder %s235, %s236
    %p248 = scmp.eq.s32.totalorder %s22, 1
    %p249 = por %p247, %p248
    %p251 = scmp.ne.s32.totalorder %s236, %s250
    %p252 = scmp.eq.s32.totalorder %s22, 0
    %p253 = por %p251, %p252
    %s254 = ssub.s32 %s16, %s23
    %p255 = scmp.eq.s32.totalorder %s254, 0
    %s257 = sadd.s32 %s256, 1
    %s258 = scalar_select %p255, %s256, %s257
    %p261 = pneg %p255
    %p262 = scmp.eq.s32.totalorder %s16, 1
    %p263 = por %p261, %p262
    %p264 = scmp.ne.s32.totalorder %s256, %s259
    %p265 = scmp.eq.s32.totalorder %s16, 0
    %p266 = por %p264, %p265
    %p267 = scmp.ne.s32.totalorder %s256, %s259
    %p268 = scmp.eq.s32.totalorder %s21, 1
    %p269 = por %p267, %p268
    %p270 = scmp.ne.s32.totalorder %s259, %s260
    %p271 = scmp.eq.s32.totalorder %s21, 0
    %p272 = por %p270, %p271
    %p273 = scmp.ne.s32.totalorder %s259, %s260
    %p274 = scmp.eq.s32.totalorder %s22, 1
    %p275 = por %p273, %p274
    %p277 = scmp.ne.s32.totalorder %s260, %s276
    %p278 = scmp.eq.s32.totalorder %s22, 0
    %p279 = por %p277, %p278
    %p280 = scmp.le.s32.totalorder 1, %s16
    %p281 = scmp.lt.s32.totalorder %s16, 3
    %p282 = pnand %p280, %p281
    %p283 = pneg %p282
    // Predicated region
    $region9: #{basic_block_forward.1} parent=5 // pred_check
      _
    $region10: #{basic_block_forward.1} parent=5 // pred_check_branch
      %285 = sbr.rel (%p282) target = $region12
    $region11: #{basic_block_forward.1} parent=5 // pred_region
      %s286 = ssub.s32 %s16, 1
      // Predicated region
      $region13: #{basic_block_forward.1} parent=11 // pred_check
        %p287 = pneg %p141
      $region14: #{basic_block_forward.1} parent=11 // pred_check_branch
        %289 = sbr.rel (%p287) target = $region16
      $region15: #{basic_block_forward.1} parent=11 // pred_region
        _
      $region16: #{basic_block_forward.1} parent=11 // pred_fallthru
        _
      // Predicated region
      $region17: #{basic_block_forward.1} parent=11 // pred_check
        %p290 = pneg %p162
      $region18: #{basic_block_forward.1} parent=11 // pred_check_branch
        %292 = sbr.rel (%p290) target = $region20
      $region19: #{basic_block_forward.1} parent=11 // pred_region
        _
      $region20: #{basic_block_forward.1} parent=11 // pred_fallthru
        _
      // Predicated region
      $region21: #{basic_block_forward.1} parent=11 // pred_check
        %p293 = pneg %p183
      $region22: #{basic_block_forward.1} parent=11 // pred_check_branch
        %295 = sbr.rel (%p293) target = $region24
      $region23: #{basic_block_forward.1} parent=11 // pred_region
        _
      $region24: #{basic_block_forward.1} parent=11 // pred_fallthru
        _
      // Predicated region
      $region25: #{basic_block_forward.1} parent=11 // pred_check
        %p296 = pneg %p204
      $region26: #{basic_block_forward.1} parent=11 // pred_check_branch
        %298 = sbr.rel (%p296) target = $region28
      $region27: #{basic_block_forward.1} parent=11 // pred_region
        _
      $region28: #{basic_block_forward.1} parent=11 // pred_fallthru
        _
      // Predicated region
      $region29: #{basic_block_forward.1} parent=11 // pred_check
        %p299 = pneg %p225
      $region30: #{basic_block_forward.1} parent=11 // pred_check_branch
        %301 = sbr.rel (%p299) target = $region32
      $region31: #{basic_block_forward.1} parent=11 // pred_region
        _
      $region32: #{basic_block_forward.1} parent=11 // pred_fallthru
        _
      // Predicated region
      $region33: #{basic_block_forward.1} parent=11 // pred_check
        %p302 = pneg %p246
      $region34: #{basic_block_forward.1} parent=11 // pred_check_branch
        %304 = sbr.rel (%p302) target = $region36
      $region35: #{basic_block_forward.1} parent=11 // pred_region
        _
      $region36: #{basic_block_forward.1} parent=11 // pred_fallthru
        _
    $region12: #{basic_block_forward.1} parent=5 // pred_fallthru
      _
    %p305 = scmp.lt.s32.totalorder %s16, 2
    // Predicated region
    $region37: #{basic_block_forward.1} parent=5 // pred_check
      %p306 = pneg %p305
    $region38: #{basic_block_forward.1} parent=5 // pred_check_branch
      %308 = sbr.rel (%p306) target = $region40
    $region39: #{basic_block_forward.1} parent=5 // pred_region
      // Predicated region
      $region41: #{basic_block_forward.1} parent=39 // pred_check
        %p309 = pneg %p36
      $region42: #{basic_block_forward.1} parent=39 // pred_check_branch
        %311 = sbr.rel (%p309) target = $region44
      $region43: #{basic_block_forward.1} parent=39 // pred_region
        %p312 = scmp.lt.s32.totalorder %s16, 1
        %s313 = scalar_select %p312, %s16, 1
        %s314 = smul.addr %s313, 18
        %s315 = smul.addr %s314, 8
        %s316 = scalar_lea.vmem %s0, %s315
      $region44: #{basic_block_forward.1} parent=39 // pred_fallthru
        _
      // Predicated region
      $region45: #{basic_block_forward.1} parent=39 // pred_check
        %p317 = pneg %p62
      $region46: #{basic_block_forward.1} parent=39 // pred_check_branch
        %319 = sbr.rel (%p317) target = $region48
      $region47: #{basic_block_forward.1} parent=39 // pred_region
        %p320 = scmp.lt.s32.totalorder %s16, 1
        %s321 = scalar_select %p320, %s16, 1
        %s322 = smul.addr %s321, 18
        %s323 = smul.addr %s322, 8
        %s324 = scalar_lea.vmem %s1, %s323
      $region48: #{basic_block_forward.1} parent=39 // pred_fallthru
        _
      // Predicated region
      $region49: #{basic_block_forward.1} parent=39 // pred_check
        %p325 = pneg %p88
      $region50: #{basic_block_forward.1} parent=39 // pred_check_branch
        %327 = sbr.rel (%p325) target = $region52
      $region51: #{basic_block_forward.1} parent=39 // pred_region
        %p328 = scmp.lt.s32.totalorder %s16, 1
        %s329 = scalar_select %p328, %s16, 1
        %s330 = smul.addr %s329, 18
        %s331 = smul.addr %s330, 8
        %s332 = scalar_lea.vmem %s2, %s331
      $region52: #{basic_block_forward.1} parent=39 // pred_fallthru
        _
      // Predicated region
      $region53: #{basic_block_forward.1} parent=39 // pred_check
        %p333 = pneg %p114
      $region54: #{basic_block_forward.1} parent=39 // pred_check_branch
        %335 = sbr.rel (%p333) target = $region56
      $region55: #{basic_block_forward.1} parent=39 // pred_region
        %p336 = scmp.lt.s32.totalorder %s16, 1
        %s337 = scalar_select %p336, %s16, 1
        %s338 = smul.addr %s337, 18
        %s339 = smul.addr %s338, 8
        %s340 = scalar_lea.vmem %s3, %s339
      $region56: #{basic_block_forward.1} parent=39 // pred_fallthru
        _
    $region40: #{basic_block_forward.1} parent=5 // pred_fallthru
      _
    %p341 = scmp.le.s32.totalorder 1, %s16
    %p342 = scmp.lt.s32.totalorder %s16, 3
    %p343 = pnand %p341, %p342
    %p344 = pneg %p343
    // Predicated region
    $region57: #{basic_block_forward.1} parent=5 // pred_check
      _
    $region58: #{basic_block_forward.1} parent=5 // pred_check_branch
      %346 = sbr.rel (%p343) target = $region60
    $region59: #{basic_block_forward.1} parent=5 // pred_region
      %s347 = ssub.s32 %s16, 1
      %p348 = scmp.lt.s32.totalorder %s21, 1
      %s349 = scalar_select %p348, %s21, 1
      %s350 = smul.addr %s349, 18
      %s351 = smul.addr %s350, 8
      %s352 = scalar_lea.vmem %s0, %s351
      %p353 = pneg %p42
      %p354 = pneg %p39
      %p355 = scmp.lt.s32.totalorder %s21, 1
      %s356 = scalar_select %p355, %s21, 1
      %s357 = smul.addr %s356, 18
      %s358 = smul.addr %s357, 8
      %s359 = scalar_lea.vmem %s1, %s358
      %p360 = pneg %p68
      %p361 = pneg %p65
      %p362 = scmp.lt.s32.totalorder %s21, 1
      %s363 = scalar_select %p362, %s21, 1
      %s364 = smul.addr %s363, 18
      %s365 = smul.addr %s364, 8
      %s366 = scalar_lea.vmem %s2, %s365
      %p367 = pneg %p94
      %p368 = pneg %p91
      %p369 = scmp.lt.s32.totalorder %s21, 1
      %s370 = scalar_select %p369, %s21, 1
      %s371 = smul.addr %s370, 18
      %s372 = smul.addr %s371, 8
      %s373 = scalar_lea.vmem %s3, %s372
      %p374 = pneg %p120
      %p375 = pneg %p117
      %p376 = pneg %p141
      %p377 = pneg %p138
      %p378 = pneg %p162
      %p379 = pneg %p159
      %p380 = pneg %p183
      %p381 = pneg %p180
      %p382 = pneg %p204
      %p383 = pneg %p201
      %p384 = pneg %p225
      %p385 = pneg %p222
      %p386 = pneg %p246
      %p387 = pneg %p243
      %p388 = pneg %p272
      %p389 = pneg %p269
      %p390 = scmp.lt.s32.totalorder %s21, 1
      %s391 = scalar_select %p390, %s21, 1
      %s392 = smul.addr %s391, 8
      %s393 = smul.addr %s392, 8
      %s394 = scalar_lea.vmem %s10, %s393
      %p395 = scmp.lt.s32.totalorder %s21, 1
      %s396 = scalar_select %p395, %s21, 1
      %s397 = smul.addr %s396, 18
      %s398 = smul.addr %s397, 8
      %s399 = scalar_lea.vmem %s0, %s398
      %p400 = scmp.lt.s32.totalorder %s21, 1
      %s401 = scalar_select %p400, %s21, 1
      %s402 = smul.addr %s401, 18
      %s403 = smul.addr %s402, 8
      %s404 = scalar_lea.vmem %s1, %s403
      %p405 = scmp.lt.s32.totalorder %s21, 1
      %s406 = scalar_select %p405, %s21, 1
      %s407 = smul.addr %s406, 18
      %s408 = smul.addr %s407, 8
      %s409 = scalar_lea.vmem %s2, %s408
      %p410 = scmp.lt.s32.totalorder %s21, 1
      %s411 = scalar_select %p410, %s21, 1
      %s412 = smul.addr %s411, 18
      %s413 = smul.addr %s412, 8
      %s414 = scalar_lea.vmem %s3, %s413
      %p415 = scmp.lt.s32.totalorder %s21, 1
      %s416 = scalar_select %p415, %s21, 1
      %s417 = smul.addr %s416, 8
      %s418 = smul.addr %s417, 8
      %s419 = scalar_lea.vmem %s10, %s418
      %v421 = vld [vmem:[%s399] sm:$0xff]
      %v422 = vld [vmem:[%s399 + $0x10] sm:$0xff]
      %v423 = vld [vmem:[%s399 + $0x20] sm:$0xff]
      %v424 = vld [vmem:[%s399 + $0x30] sm:$0xff]
      %v425 = vld [vmem:[%s399 + $0x40] sm:$0xff]
      %v426 = vld [vmem:[%s399 + $0x50] sm:$0xff]
      %v427 = vld [vmem:[%s399 + $0x60] sm:$0xff]
      %v428 = vld [vmem:[%s399 + $0x70] sm:$0xff]
      %v429 = vpack.c.bf16 %v422, %v421
      %v430 = vpack.c.bf16 %v424, %v423
      %v431 = vpack.c.bf16 %v426, %v425
      %v432 = vpack.c.bf16 %v428, %v427
      %v433 = vld [vmem:[%s4] sm:$0xf]
      %v434 = vld [vmem:[%s4 + $0x4] sm:$0xf]
      %v435 = vld [vmem:[%s4 + $0x8] sm:$0xf]
      %v436 = vld [vmem:[%s4 + $0xc] sm:$0xf]
      %v437 = vld [vmem:[%s4 + $0x10] sm:$0xf]
      %v438 = vld [vmem:[%s4 + $0x14] sm:$0xf]
      %v439 = vld [vmem:[%s4 + $0x18] sm:$0xf]
      %v440 = vld [vmem:[%s4 + $0x1c] sm:$0xf]
      %v441 = vld [vmem:[%s4 + $0x20] sm:$0xf]
      %v442 = vld [vmem:[%s4 + $0x24] sm:$0xf]
      %v443 = vld [vmem:[%s4 + $0x28] sm:$0xf]
      %v444 = vld [vmem:[%s4 + $0x2c] sm:$0xf]
      %v445 = vld [vmem:[%s4 + $0x30] sm:$0xf]
      %v446 = vld [vmem:[%s4 + $0x34] sm:$0xf]
      %v447 = vld [vmem:[%s4 + $0x38] sm:$0xf]
      %v448 = vld [vmem:[%s4 + $0x3c] sm:$0xf]
      %v449 = vld [vmem:[%s404] sm:$0xff]
      %v450 = vld [vmem:[%s404 + $0x10] sm:$0xff]
      %v451 = vld [vmem:[%s404 + $0x20] sm:$0xff]
      %v452 = vld [vmem:[%s404 + $0x30] sm:$0xff]
      %v453 = vld [vmem:[%s404 + $0x40] sm:$0xff]
      %v454 = vld [vmem:[%s404 + $0x50] sm:$0xff]
      %v455 = vld [vmem:[%s404 + $0x60] sm:$0xff]
      %v456 = vld [vmem:[%s404 + $0x70] sm:$0xff]
      %v457 = vpack.c.bf16 %v450, %v449
      %v458 = vpack.c.bf16 %v452, %v451
      %v459 = vpack.c.bf16 %v454, %v453
      %v460 = vpack.c.bf16 %v456, %v455
      %s461 = scalar_lea.vmem %s4, 64
      %v462 = vld [vmem:[%s461] sm:$0xf]
      %v463 = vld [vmem:[%s461 + $0x4] sm:$0xf]
      %v464 = vld [vmem:[%s461 + $0x8] sm:$0xf]
      %v465 = vld [vmem:[%s461 + $0xc] sm:$0xf]
      %v466 = vld [vmem:[%s461 + $0x10] sm:$0xf]
      %v467 = vld [vmem:[%s461 + $0x14] sm:$0xf]
      %v468 = vld [vmem:[%s461 + $0x18] sm:$0xf]
      %v469 = vld [vmem:[%s461 + $0x1c] sm:$0xf]
      %v470 = vld [vmem:[%s461 + $0x20] sm:$0xf]
      %v471 = vld [vmem:[%s461 + $0x24] sm:$0xf]
      %v472 = vld [vmem:[%s461 + $0x28] sm:$0xf]
      %v473 = vld [vmem:[%s461 + $0x2c] sm:$0xf]
      %v474 = vld [vmem:[%s461 + $0x30] sm:$0xf]
      %v475 = vld [vmem:[%s461 + $0x34] sm:$0xf]
      %v476 = vld [vmem:[%s461 + $0x38] sm:$0xf]
      %v477 = vld [vmem:[%s461 + $0x3c] sm:$0xf]
      %v494 = vunpack.c.l.b16 %v462
      %v495 = vunpack.c.l.b16 %v463
      %v496 = vunpack.c.l.b16 %v464
      %v497 = vunpack.c.l.b16 %v465
      %v498 = vunpack.c.l.b16 %v466
      %v499 = vunpack.c.l.b16 %v467
      %v500 = vunpack.c.l.b16 %v468
      %v501 = vunpack.c.l.b16 %v469
      %v502 = vunpack.c.l.b16 %v470
      %v503 = vunpack.c.l.b16 %v471
      %v504 = vunpack.c.l.b16 %v472
      %v505 = vunpack.c.l.b16 %v473
      %v506 = vunpack.c.l.b16 %v474
      %v507 = vunpack.c.l.b16 %v475
      %v508 = vunpack.c.l.b16 %v476
      %v509 = vunpack.c.l.b16 %v477
      %v510 = vpack.c.b16 %v495, %v494
      %v511 = vpack.c.b16 %v497, %v496
      %v512 = vpack.c.b16 %v499, %v498
      %v513 = vpack.c.b16 %v501, %v500
      %v514 = vpack.c.b16 %v503, %v502
      %v515 = vpack.c.b16 %v505, %v504
      %v516 = vpack.c.b16 %v507, %v506
      %v517 = vpack.c.b16 %v509, %v508
      %526 = vmatprep.subr.bf16.mxu0 0
      %527 = vmatpush1.bf16.msra.mxu0 %v517
      %528 = vmatprep.subr.bf16.mxu0 0
      %529 = vmatpush1.bf16.msra.mxu0 %v516
      %530 = vmatprep.subr.bf16.mxu0 0
      %531 = vmatpush1.bf16.msra.mxu0 %v515
      %532 = vmatprep.subr.bf16.mxu0 0
      %533 = vmatpush1.bf16.msra.mxu0 %v514
      %534 = vmatprep.subr.bf16.mxu0 0
      %535 = vmatpush1.bf16.msra.mxu0 %v513
      %536 = vmatprep.subr.bf16.mxu0 0
      %537 = vmatpush1.bf16.msra.mxu0 %v512
      %538 = vmatprep.subr.bf16.mxu0 0
      %539 = vmatpush1.bf16.msra.mxu0 %v511
      %540 = vmatprep.subr.bf16.mxu0 0
      %541 = vmatpush1.bf16.msra.mxu0 %v510
      %542 = vmatprep.subr.bf16.mxu0 0
      %543 = vmatpush2.bf16.msra.mxu0 0
      %544 = vmatprep.subr.bf16.mxu0 0
      %545 = vmatpush2.bf16.msra.mxu0 0
      %546 = vmatprep.subr.bf16.mxu0 0
      %547 = vmatpush2.bf16.msra.mxu0 0
      %548 = vmatprep.subr.bf16.mxu0 0
      %549 = vmatpush2.bf16.msra.mxu0 0
      %550 = vmatprep.subr.bf16.mxu0 0
      %551 = vmatpush2.bf16.msra.mxu0 0
      %552 = vmatprep.subr.bf16.mxu0 0
      %553 = vmatpush2.bf16.msra.mxu0 0
      %554 = vmatprep.subr.bf16.mxu0 0
      %555 = vmatpush2.bf16.msra.mxu0 0
      %556 = vmatprep.subr.bf16.mxu0 0
      %557 = vmatpush2.bf16.msra.mxu0 0
      %558 = vmatprep.mubr.bf16.mxu0 0
      %559 = vmatmul.mubr.bf16.gmra.mxu0 %v457
      %v560 = vpop.f32.mrf.mxu0
      %v561 = vadd.f32 0.0, %v560
      %v562 = vpop.f32.mrf.mxu0
      %v563 = vpop.f32.mrf.mxu0
      %v564 = vadd.f32 0.0, %v563
      %v565 = vpop.f32.mrf.mxu0
      %566 = vmatprep.mubr.bf16.mxu0 0
      %567 = vmatmul.mubr.bf16.gmra.mxu0 %v458
      %v568 = vpop.f32.mrf.mxu0
      %v569 = vadd.f32 0.0, %v568
      %v570 = vpop.f32.mrf.mxu0
      %v571 = vpop.f32.mrf.mxu0
      %v572 = vadd.f32 0.0, %v571
      %v573 = vpop.f32.mrf.mxu0
      %574 = vmatprep.mubr.bf16.mxu0 0
      %575 = vmatmul.mubr.bf16.gmra.mxu0 %v459
      %v576 = vpop.f32.mrf.mxu0
      %v577 = vadd.f32 0.0, %v576
      %v578 = vpop.f32.mrf.mxu0
      %v579 = vpop.f32.mrf.mxu0
      %v580 = vadd.f32 0.0, %v579
      %v581 = vpop.f32.mrf.mxu0
      %582 = vmatprep.mubr.bf16.mxu0 0
      %583 = vmatmul.mubr.bf16.gmra.mxu0 %v460
      %v584 = vpop.f32.mrf.mxu0
      %v585 = vadd.f32 0.0, %v584
      %v586 = vpop.f32.mrf.mxu0
      %v587 = vpop.f32.mrf.mxu0
      %v588 = vadd.f32 0.0, %v587
      %v589 = vpop.f32.mrf.mxu0
      %590 = vdwg.mxu0
      %v607 = vunpack.c.l.b16 %v433
      %v608 = vunpack.c.l.b16 %v434
      %v609 = vunpack.c.l.b16 %v435
      %v610 = vunpack.c.l.b16 %v436
      %v611 = vunpack.c.l.b16 %v437
      %v612 = vunpack.c.l.b16 %v438
      %v613 = vunpack.c.l.b16 %v439
      %v614 = vunpack.c.l.b16 %v440
      %v615 = vunpack.c.l.b16 %v441
      %v616 = vunpack.c.l.b16 %v442
      %v617 = vunpack.c.l.b16 %v443
      %v618 = vunpack.c.l.b16 %v444
      %v619 = vunpack.c.l.b16 %v445
      %v620 = vunpack.c.l.b16 %v446
      %v621 = vunpack.c.l.b16 %v447
      %v622 = vunpack.c.l.b16 %v448
      %v623 = vpack.c.b16 %v608, %v607
      %v624 = vpack.c.b16 %v610, %v609
      %v625 = vpack.c.b16 %v612, %v611
      %v626 = vpack.c.b16 %v614, %v613
      %v627 = vpack.c.b16 %v616, %v615
      %v628 = vpack.c.b16 %v618, %v617
      %v629 = vpack.c.b16 %v620, %v619
      %v630 = vpack.c.b16 %v622, %v621
      %639 = vmatprep.subr.bf16.mxu0 0
      %640 = vmatpush1.bf16.msra.mxu0 %v630
      %641 = vmatprep.subr.bf16.mxu0 0
      %642 = vmatpush1.bf16.msra.mxu0 %v629
      %643 = vmatprep.subr.bf16.mxu0 0
      %644 = vmatpush1.bf16.msra.mxu0 %v628
      %645 = vmatprep.subr.bf16.mxu0 0
      %646 = vmatpush1.bf16.msra.mxu0 %v627
      %647 = vmatprep.subr.bf16.mxu0 0
      %648 = vmatpush1.bf16.msra.mxu0 %v626
      %649 = vmatprep.subr.bf16.mxu0 0
      %650 = vmatpush1.bf16.msra.mxu0 %v625
      %651 = vmatprep.subr.bf16.mxu0 0
      %652 = vmatpush1.bf16.msra.mxu0 %v624
      %653 = vmatprep.subr.bf16.mxu0 0
      %654 = vmatpush1.bf16.msra.mxu0 %v623
      %655 = vmatprep.subr.bf16.mxu0 0
      %656 = vmatpush2.bf16.msra.mxu0 0
      %657 = vmatprep.subr.bf16.mxu0 0
      %658 = vmatpush2.bf16.msra.mxu0 0
      %659 = vmatprep.subr.bf16.mxu0 0
      %660 = vmatpush2.bf16.msra.mxu0 0
      %661 = vmatprep.subr.bf16.mxu0 0
      %662 = vmatpush2.bf16.msra.mxu0 0
      %663 = vmatprep.subr.bf16.mxu0 0
      %664 = vmatpush2.bf16.msra.mxu0 0
      %665 = vmatprep.subr.bf16.mxu0 0
      %666 = vmatpush2.bf16.msra.mxu0 0
      %667 = vmatprep.subr.bf16.mxu0 0
      %668 = vmatpush2.bf16.msra.mxu0 0
      %669 = vmatprep.subr.bf16.mxu0 0
      %670 = vmatpush2.bf16.msra.mxu0 0
      %671 = vmatprep.mubr.bf16.mxu0 0
      %672 = vmatmul.mubr.bf16.gmra.mxu0 %v429
      %v673 = vpop.f32.mrf.mxu0
      %v674 = vadd.f32 %v561, %v673
      %v675 = vpop.f32.mrf.mxu0
      %v676 = vpop.f32.mrf.mxu0
      %v677 = vadd.f32 %v564, %v676
      %v678 = vpop.f32.mrf.mxu0
      %679 = vmatprep.mubr.bf16.mxu0 0
      %680 = vmatmul.mubr.bf16.gmra.mxu0 %v430
      %v681 = vpop.f32.mrf.mxu0
      %v682 = vadd.f32 %v569, %v681
      %v683 = vpop.f32.mrf.mxu0
      %v684 = vpop.f32.mrf.mxu0
      %v685 = vadd.f32 %v572, %v684
      %v686 = vpop.f32.mrf.mxu0
      %687 = vmatprep.mubr.bf16.mxu0 0
      %688 = vmatmul.mubr.bf16.gmra.mxu0 %v431
      %v689 = vpop.f32.mrf.mxu0
      %v690 = vadd.f32 %v577, %v689
      %v691 = vpop.f32.mrf.mxu0
      %v692 = vpop.f32.mrf.mxu0
      %v693 = vadd.f32 %v580, %v692
      %v694 = vpop.f32.mrf.mxu0
      %695 = vmatprep.mubr.bf16.mxu0 0
      %696 = vmatmul.mubr.bf16.gmra.mxu0 %v432
      %v697 = vpop.f32.mrf.mxu0
      %v698 = vadd.f32 %v585, %v697
      %v699 = vpop.f32.mrf.mxu0
      %v700 = vpop.f32.mrf.mxu0
      %v701 = vadd.f32 %v588, %v700
      %v702 = vpop.f32.mrf.mxu0
      %703 = vdwg.mxu0
      %v704 = vld [vmem:[%s399 + $0x1] sm:$0xff]
      %v705 = vld [vmem:[%s399 + $0x11] sm:$0xff]
      %v706 = vld [vmem:[%s399 + $0x21] sm:$0xff]
      %v707 = vld [vmem:[%s399 + $0x31] sm:$0xff]
      %v708 = vld [vmem:[%s399 + $0x41] sm:$0xff]
      %v709 = vld [vmem:[%s399 + $0x51] sm:$0xff]
      %v710 = vld [vmem:[%s399 + $0x61] sm:$0xff]
      %v711 = vld [vmem:[%s399 + $0x71] sm:$0xff]
      %v712 = vpack.c.bf16 %v705, %v704
      %v713 = vpack.c.bf16 %v707, %v706
      %v714 = vpack.c.bf16 %v709, %v708
      %v715 = vpack.c.bf16 %v711, %v710
      %s716 = scalar_lea.vmem %s4, 128
      %v717 = vld [vmem:[%s716] sm:$0xf]
      %v718 = vld [vmem:[%s716 + $0x4] sm:$0xf]
      %v719 = vld [vmem:[%s716 + $0x8] sm:$0xf]
      %v720 = vld [vmem:[%s716 + $0xc] sm:$0xf]
      %v721 = vld [vmem:[%s716 + $0x10] sm:$0xf]
      %v722 = vld [vmem:[%s716 + $0x14] sm:$0xf]
      %v723 = vld [vmem:[%s716 + $0x18] sm:$0xf]
      %v724 = vld [vmem:[%s716 + $0x1c] sm:$0xf]
      %v725 = vld [vmem:[%s716 + $0x20] sm:$0xf]
      %v726 = vld [vmem:[%s716 + $0x24] sm:$0xf]
      %v727 = vld [vmem:[%s716 + $0x28] sm:$0xf]
      %v728 = vld [vmem:[%s716 + $0x2c] sm:$0xf]
      %v729 = vld [vmem:[%s716 + $0x30] sm:$0xf]
      %v730 = vld [vmem:[%s716 + $0x34] sm:$0xf]
      %v731 = vld [vmem:[%s716 + $0x38] sm:$0xf]
      %v732 = vld [vmem:[%s716 + $0x3c] sm:$0xf]
      %v749 = vunpack.c.l.b16 %v717
      %v750 = vunpack.c.l.b16 %v718
      %v751 = vunpack.c.l.b16 %v719
      %v752 = vunpack.c.l.b16 %v720
      %v753 = vunpack.c.l.b16 %v721
      %v754 = vunpack.c.l.b16 %v722
      %v755 = vunpack.c.l.b16 %v723
      %v756 = vunpack.c.l.b16 %v724
      %v757 = vunpack.c.l.b16 %v725
      %v758 = vunpack.c.l.b16 %v726
      %v759 = vunpack.c.l.b16 %v727
      %v760 = vunpack.c.l.b16 %v728
      %v761 = vunpack.c.l.b16 %v729
      %v762 = vunpack.c.l.b16 %v730
      %v763 = vunpack.c.l.b16 %v731
      %v764 = vunpack.c.l.b16 %v732
      %v765 = vpack.c.b16 %v750, %v749
      %v766 = vpack.c.b16 %v752, %v751
      %v767 = vpack.c.b16 %v754, %v753
      %v768 = vpack.c.b16 %v756, %v755
      %v769 = vpack.c.b16 %v758, %v757
      %v770 = vpack.c.b16 %v760, %v759
      %v771 = vpack.c.b16 %v762, %v761
      %v772 = vpack.c.b16 %v764, %v763
      %781 = vmatprep.subr.bf16.mxu0 0
      %782 = vmatpush1.bf16.msra.mxu0 %v772
      %783 = vmatprep.subr.bf16.mxu0 0
      %784 = vmatpush1.bf16.msra.mxu0 %v771
      %785 = vmatprep.subr.bf16.mxu0 0
      %786 = vmatpush1.bf16.msra.mxu0 %v770
      %787 = vmatprep.subr.bf16.mxu0 0
      %788 = vmatpush1.bf16.msra.mxu0 %v769
      %789 = vmatprep.subr.bf16.mxu0 0
      %790 = vmatpush1.bf16.msra.mxu0 %v768
      %791 = vmatprep.subr.bf16.mxu0 0
      %792 = vmatpush1.bf16.msra.mxu0 %v767
      %793 = vmatprep.subr.bf16.mxu0 0
      %794 = vmatpush1.bf16.msra.mxu0 %v766
      %795 = vmatprep.subr.bf16.mxu0 0
      %796 = vmatpush1.bf16.msra.mxu0 %v765
      %797 = vmatprep.subr.bf16.mxu0 0
      %798 = vmatpush2.bf16.msra.mxu0 0
      %799 = vmatprep.subr.bf16.mxu0 0
      %800 = vmatpush2.bf16.msra.mxu0 0
      %801 = vmatprep.subr.bf16.mxu0 0
      %802 = vmatpush2.bf16.msra.mxu0 0
      %803 = vmatprep.subr.bf16.mxu0 0
      %804 = vmatpush2.bf16.msra.mxu0 0
      %805 = vmatprep.subr.bf16.mxu0 0
      %806 = vmatpush2.bf16.msra.mxu0 0
      %807 = vmatprep.subr.bf16.mxu0 0
      %808 = vmatpush2.bf16.msra.mxu0 0
      %809 = vmatprep.subr.bf16.mxu0 0
      %810 = vmatpush2.bf16.msra.mxu0 0
      %811 = vmatprep.subr.bf16.mxu0 0
      %812 = vmatpush2.bf16.msra.mxu0 0
      %813 = vmatprep.mubr.bf16.mxu0 0
      %814 = vmatmul.mubr.bf16.gmra.mxu0 %v712
      %v815 = vpop.f32.mrf.mxu0
      %v816 = vadd.f32 0.0, %v815
      %v817 = vpop.f32.mrf.mxu0
      %v818 = vpop.f32.mrf.mxu0
      %v819 = vadd.f32 0.0, %v818
      %v820 = vpop.f32.mrf.mxu0
      %821 = vmatprep.mubr.bf16.mxu0 0
      %822 = vmatmul.mubr.bf16.gmra.mxu0 %v713
      %v823 = vpop.f32.mrf.mxu0
      %v824 = vadd.f32 0.0, %v823
      %v825 = vpop.f32.mrf.mxu0
      %v826 = vpop.f32.mrf.mxu0
      %v827 = vadd.f32 0.0, %v826
      %v828 = vpop.f32.mrf.mxu0
      %829 = vmatprep.mubr.bf16.mxu0 0
      %830 = vmatmul.mubr.bf16.gmra.mxu0 %v714
      %v831 = vpop.f32.mrf.mxu0
      %v832 = vadd.f32 0.0, %v831
      %v833 = vpop.f32.mrf.mxu0
      %v834 = vpop.f32.mrf.mxu0
      %v835 = vadd.f32 0.0, %v834
      %v836 = vpop.f32.mrf.mxu0
      %837 = vmatprep.mubr.bf16.mxu0 0
      %838 = vmatmul.mubr.bf16.gmra.mxu0 %v715
      %v839 = vpop.f32.mrf.mxu0
      %v840 = vadd.f32 0.0, %v839
      %v841 = vpop.f32.mrf.mxu0
      %v842 = vpop.f32.mrf.mxu0
      %v843 = vadd.f32 0.0, %v842
      %v844 = vpop.f32.mrf.mxu0
      %845 = vdwg.mxu0
      %v846 = vadd.f32 %v674, %v816
      %v847 = vadd.f32 %v677, %v819
      %v848 = vadd.f32 %v682, %v824
      %v849 = vadd.f32 %v685, %v827
      %v850 = vadd.f32 %v690, %v832
      %v851 = vadd.f32 %v693, %v835
      %v852 = vadd.f32 %v698, %v840
      %v853 = vadd.f32 %v701, %v843
      %v854 = vld [vmem:[%s409] sm:$0xff]
      %v855 = vld [vmem:[%s409 + $0x10] sm:$0xff]
      %v856 = vld [vmem:[%s409 + $0x20] sm:$0xff]
      %v857 = vld [vmem:[%s409 + $0x30] sm:$0xff]
      %v858 = vld [vmem:[%s409 + $0x40] sm:$0xff]
      %v859 = vld [vmem:[%s409 + $0x50] sm:$0xff]
      %v860 = vld [vmem:[%s409 + $0x60] sm:$0xff]
      %v861 = vld [vmem:[%s409 + $0x70] sm:$0xff]
      %v862 = vpack.c.bf16 %v855, %v854
      %v863 = vpack.c.bf16 %v857, %v856
      %v864 = vpack.c.bf16 %v859, %v858
      %v865 = vpack.c.bf16 %v861, %v860
      %s866 = scalar_lea.vmem %s4, 192
      %v867 = vld [vmem:[%s866] sm:$0xf]
      %v868 = vld [vmem:[%s866 + $0x4] sm:$0xf]
      %v869 = vld [vmem:[%s866 + $0x8] sm:$0xf]
      %v870 = vld [vmem:[%s866 + $0xc] sm:$0xf]
      %v871 = vld [vmem:[%s866 + $0x10] sm:$0xf]
      %v872 = vld [vmem:[%s866 + $0x14] sm:$0xf]
      %v873 = vld [vmem:[%s866 + $0x18] sm:$0xf]
      %v874 = vld [vmem:[%s866 + $0x1c] sm:$0xf]
      %v875 = vld [vmem:[%s866 + $0x20] sm:$0xf]
      %v876 = vld [vmem:[%s866 + $0x24] sm:$0xf]
      %v877 = vld [vmem:[%s866 + $0x28] sm:$0xf]
      %v878 = vld [vmem:[%s866 + $0x2c] sm:$0xf]
      %v879 = vld [vmem:[%s866 + $0x30] sm:$0xf]
      %v880 = vld [vmem:[%s866 + $0x34] sm:$0xf]
      %v881 = vld [vmem:[%s866 + $0x38] sm:$0xf]
      %v882 = vld [vmem:[%s866 + $0x3c] sm:$0xf]
      %v899 = vunpack.c.l.b16 %v867
      %v900 = vunpack.c.l.b16 %v868
      %v901 = vunpack.c.l.b16 %v869
      %v902 = vunpack.c.l.b16 %v870
      %v903 = vunpack.c.l.b16 %v871
      %v904 = vunpack.c.l.b16 %v872
      %v905 = vunpack.c.l.b16 %v873
      %v906 = vunpack.c.l.b16 %v874
      %v907 = vunpack.c.l.b16 %v875
      %v908 = vunpack.c.l.b16 %v876
      %v909 = vunpack.c.l.b16 %v877
      %v910 = vunpack.c.l.b16 %v878
      %v911 = vunpack.c.l.b16 %v879
      %v912 = vunpack.c.l.b16 %v880
      %v913 = vunpack.c.l.b16 %v881
      %v914 = vunpack.c.l.b16 %v882
      %v915 = vpack.c.b16 %v900, %v899
      %v916 = vpack.c.b16 %v902, %v901
      %v917 = vpack.c.b16 %v904, %v903
      %v918 = vpack.c.b16 %v906, %v905
      %v919 = vpack.c.b16 %v908, %v907
      %v920 = vpack.c.b16 %v910, %v909
      %v921 = vpack.c.b16 %v912, %v911
      %v922 = vpack.c.b16 %v914, %v913
      %931 = vmatprep.subr.bf16.mxu0 0
      %932 = vmatpush1.bf16.msra.mxu0 %v922
      %933 = vmatprep.subr.bf16.mxu0 0
      %934 = vmatpush1.bf16.msra.mxu0 %v921
      %935 = vmatprep.subr.bf16.mxu0 0
      %936 = vmatpush1.bf16.msra.mxu0 %v920
      %937 = vmatprep.subr.bf16.mxu0 0
      %938 = vmatpush1.bf16.msra.mxu0 %v919
      %939 = vmatprep.subr.bf16.mxu0 0
      %940 = vmatpush1.bf16.msra.mxu0 %v918
      %941 = vmatprep.subr.bf16.mxu0 0
      %942 = vmatpush1.bf16.msra.mxu0 %v917
      %943 = vmatprep.subr.bf16.mxu0 0
      %944 = vmatpush1.bf16.msra.mxu0 %v916
      %945 = vmatprep.subr.bf16.mxu0 0
      %946 = vmatpush1.bf16.msra.mxu0 %v915
      %947 = vmatprep.subr.bf16.mxu0 0
      %948 = vmatpush2.bf16.msra.mxu0 0
      %949 = vmatprep.subr.bf16.mxu0 0
      %950 = vmatpush2.bf16.msra.mxu0 0
      %951 = vmatprep.subr.bf16.mxu0 0
      %952 = vmatpush2.bf16.msra.mxu0 0
      %953 = vmatprep.subr.bf16.mxu0 0
      %954 = vmatpush2.bf16.msra.mxu0 0
      %955 = vmatprep.subr.bf16.mxu0 0
      %956 = vmatpush2.bf16.msra.mxu0 0
      %957 = vmatprep.subr.bf16.mxu0 0
      %958 = vmatpush2.bf16.msra.mxu0 0
      %959 = vmatprep.subr.bf16.mxu0 0
      %960 = vmatpush2.bf16.msra.mxu0 0
      %961 = vmatprep.subr.bf16.mxu0 0
      %962 = vmatpush2.bf16.msra.mxu0 0
      %963 = vmatprep.mubr.bf16.mxu0 0
      %964 = vmatmul.mubr.bf16.gmra.mxu0 %v862
      %v965 = vpop.f32.mrf.mxu0
      %v966 = vadd.f32 0.0, %v965
      %v967 = vpop.f32.mrf.mxu0
      %v968 = vpop.f32.mrf.mxu0
      %v969 = vadd.f32 0.0, %v968
      %v970 = vpop.f32.mrf.mxu0
      %971 = vmatprep.mubr.bf16.mxu0 0
      %972 = vmatmul.mubr.bf16.gmra.mxu0 %v863
      %v973 = vpop.f32.mrf.mxu0
      %v974 = vadd.f32 0.0, %v973
      %v975 = vpop.f32.mrf.mxu0
      %v976 = vpop.f32.mrf.mxu0
      %v977 = vadd.f32 0.0, %v976
      %v978 = vpop.f32.mrf.mxu0
      %979 = vmatprep.mubr.bf16.mxu0 0
      %980 = vmatmul.mubr.bf16.gmra.mxu0 %v864
      %v981 = vpop.f32.mrf.mxu0
      %v982 = vadd.f32 0.0, %v981
      %v983 = vpop.f32.mrf.mxu0
      %v984 = vpop.f32.mrf.mxu0
      %v985 = vadd.f32 0.0, %v984
      %v986 = vpop.f32.mrf.mxu0
      %987 = vmatprep.mubr.bf16.mxu0 0
      %988 = vmatmul.mubr.bf16.gmra.mxu0 %v865
      %v989 = vpop.f32.mrf.mxu0
      %v990 = vadd.f32 0.0, %v989
      %v991 = vpop.f32.mrf.mxu0
      %v992 = vpop.f32.mrf.mxu0
      %v993 = vadd.f32 0.0, %v992
      %v994 = vpop.f32.mrf.mxu0
      %995 = vdwg.mxu0
      %v996 = vadd.f32 %v846, %v966
      %v997 = vadd.f32 %v847, %v969
      %v998 = vadd.f32 %v848, %v974
      %v999 = vadd.f32 %v849, %v977
      %v1000 = vadd.f32 %v850, %v982
      %v1001 = vadd.f32 %v851, %v985
      %v1002 = vadd.f32 %v852, %v990
      %v1003 = vadd.f32 %v853, %v993
      %v1004 = vld [vmem:[%s414] sm:$0xff]
      %v1005 = vld [vmem:[%s414 + $0x10] sm:$0xff]
      %v1006 = vld [vmem:[%s414 + $0x20] sm:$0xff]
      %v1007 = vld [vmem:[%s414 + $0x30] sm:$0xff]
      %v1008 = vld [vmem:[%s414 + $0x40] sm:$0xff]
      %v1009 = vld [vmem:[%s414 + $0x50] sm:$0xff]
      %v1010 = vld [vmem:[%s414 + $0x60] sm:$0xff]
      %v1011 = vld [vmem:[%s414 + $0x70] sm:$0xff]
      %v1012 = vpack.c.bf16 %v1005, %v1004
      %v1013 = vpack.c.bf16 %v1007, %v1006
      %v1014 = vpack.c.bf16 %v1009, %v1008
      %v1015 = vpack.c.bf16 %v1011, %v1010
      %s1016 = scalar_lea.vmem %s4, 256
      %v1017 = vld [vmem:[%s1016] sm:$0xf]
      %v1018 = vld [vmem:[%s1016 + $0x4] sm:$0xf]
      %v1019 = vld [vmem:[%s1016 + $0x8] sm:$0xf]
      %v1020 = vld [vmem:[%s1016 + $0xc] sm:$0xf]
      %v1021 = vld [vmem:[%s1016 + $0x10] sm:$0xf]
      %v1022 = vld [vmem:[%s1016 + $0x14] sm:$0xf]
      %v1023 = vld [vmem:[%s1016 + $0x18] sm:$0xf]
      %v1024 = vld [vmem:[%s1016 + $0x1c] sm:$0xf]
      %v1025 = vld [vmem:[%s1016 + $0x20] sm:$0xf]
      %v1026 = vld [vmem:[%s1016 + $0x24] sm:$0xf]
      %v1027 = vld [vmem:[%s1016 + $0x28] sm:$0xf]
      %v1028 = vld [vmem:[%s1016 + $0x2c] sm:$0xf]
      %v1029 = vld [vmem:[%s1016 + $0x30] sm:$0xf]
      %v1030 = vld [vmem:[%s1016 + $0x34] sm:$0xf]
      %v1031 = vld [vmem:[%s1016 + $0x38] sm:$0xf]
      %v1032 = vld [vmem:[%s1016 + $0x3c] sm:$0xf]
      %v1049 = vunpack.c.l.b16 %v1017
      %v1050 = vunpack.c.l.b16 %v1018
      %v1051 = vunpack.c.l.b16 %v1019
      %v1052 = vunpack.c.l.b16 %v1020
      %v1053 = vunpack.c.l.b16 %v1021
      %v1054 = vunpack.c.l.b16 %v1022
      %v1055 = vunpack.c.l.b16 %v1023
      %v1056 = vunpack.c.l.b16 %v1024
      %v1057 = vunpack.c.l.b16 %v1025
      %v1058 = vunpack.c.l.b16 %v1026
      %v1059 = vunpack.c.l.b16 %v1027
      %v1060 = vunpack.c.l.b16 %v1028
      %v1061 = vunpack.c.l.b16 %v1029
      %v1062 = vunpack.c.l.b16 %v1030
      %v1063 = vunpack.c.l.b16 %v1031
      %v1064 = vunpack.c.l.b16 %v1032
      %v1065 = vpack.c.b16 %v1050, %v1049
      %v1066 = vpack.c.b16 %v1052, %v1051
      %v1067 = vpack.c.b16 %v1054, %v1053
      %v1068 = vpack.c.b16 %v1056, %v1055
      %v1069 = vpack.c.b16 %v1058, %v1057
      %v1070 = vpack.c.b16 %v1060, %v1059
      %v1071 = vpack.c.b16 %v1062, %v1061
      %v1072 = vpack.c.b16 %v1064, %v1063
      %1081 = vmatprep.subr.bf16.mxu0 0
      %1082 = vmatpush1.bf16.msra.mxu0 %v1072
      %1083 = vmatprep.subr.bf16.mxu0 0
      %1084 = vmatpush1.bf16.msra.mxu0 %v1071
      %1085 = vmatprep.subr.bf16.mxu0 0
      %1086 = vmatpush1.bf16.msra.mxu0 %v1070
      %1087 = vmatprep.subr.bf16.mxu0 0
      %1088 = vmatpush1.bf16.msra.mxu0 %v1069
      %1089 = vmatprep.subr.bf16.mxu0 0
      %1090 = vmatpush1.bf16.msra.mxu0 %v1068
      %1091 = vmatprep.subr.bf16.mxu0 0
      %1092 = vmatpush1.bf16.msra.mxu0 %v1067
      %1093 = vmatprep.subr.bf16.mxu0 0
      %1094 = vmatpush1.bf16.msra.mxu0 %v1066
      %1095 = vmatprep.subr.bf16.mxu0 0
      %1096 = vmatpush1.bf16.msra.mxu0 %v1065
      %1097 = vmatprep.subr.bf16.mxu0 0
      %1098 = vmatpush2.bf16.msra.mxu0 0
      %1099 = vmatprep.subr.bf16.mxu0 0
      %1100 = vmatpush2.bf16.msra.mxu0 0
      %1101 = vmatprep.subr.bf16.mxu0 0
      %1102 = vmatpush2.bf16.msra.mxu0 0
      %1103 = vmatprep.subr.bf16.mxu0 0
      %1104 = vmatpush2.bf16.msra.mxu0 0
      %1105 = vmatprep.subr.bf16.mxu0 0
      %1106 = vmatpush2.bf16.msra.mxu0 0
      %1107 = vmatprep.subr.bf16.mxu0 0
      %1108 = vmatpush2.bf16.msra.mxu0 0
      %1109 = vmatprep.subr.bf16.mxu0 0
      %1110 = vmatpush2.bf16.msra.mxu0 0
      %1111 = vmatprep.subr.bf16.mxu0 0
      %1112 = vmatpush2.bf16.msra.mxu0 0
      %1113 = vmatprep.mubr.bf16.mxu0 0
      %1114 = vmatmul.mubr.bf16.gmra.mxu0 %v1012
      %v1115 = vpop.f32.mrf.mxu0
      %v1116 = vadd.f32 0.0, %v1115
      %v1117 = vpop.f32.mrf.mxu0
      %v1118 = vpop.f32.mrf.mxu0
      %v1119 = vadd.f32 0.0, %v1118
      %v1120 = vpop.f32.mrf.mxu0
      %1121 = vmatprep.mubr.bf16.mxu0 0
      %1122 = vmatmul.mubr.bf16.gmra.mxu0 %v1013
      %v1123 = vpop.f32.mrf.mxu0
      %v1124 = vadd.f32 0.0, %v1123
      %v1125 = vpop.f32.mrf.mxu0
      %v1126 = vpop.f32.mrf.mxu0
      %v1127 = vadd.f32 0.0, %v1126
      %v1128 = vpop.f32.mrf.mxu0
      %1129 = vmatprep.mubr.bf16.mxu0 0
      %1130 = vmatmul.mubr.bf16.gmra.mxu0 %v1014
      %v1131 = vpop.f32.mrf.mxu0
      %v1132 = vadd.f32 0.0, %v1131
      %v1133 = vpop.f32.mrf.mxu0
      %v1134 = vpop.f32.mrf.mxu0
      %v1135 = vadd.f32 0.0, %v1134
      %v1136 = vpop.f32.mrf.mxu0
      %1137 = vmatprep.mubr.bf16.mxu0 0
      %1138 = vmatmul.mubr.bf16.gmra.mxu0 %v1015
      %v1139 = vpop.f32.mrf.mxu0
      %v1140 = vadd.f32 0.0, %v1139
      %v1141 = vpop.f32.mrf.mxu0
      %v1142 = vpop.f32.mrf.mxu0
      %v1143 = vadd.f32 0.0, %v1142
      %v1144 = vpop.f32.mrf.mxu0
      %1145 = vdwg.mxu0
      %v1146 = vadd.f32 %v996, %v1116
      %v1147 = vadd.f32 %v997, %v1119
      %v1148 = vadd.f32 %v998, %v1124
      %v1149 = vadd.f32 %v999, %v1127
      %v1150 = vadd.f32 %v1000, %v1132
      %v1151 = vadd.f32 %v1001, %v1135
      %v1152 = vadd.f32 %v1002, %v1140
      %v1153 = vadd.f32 %v1003, %v1143
      %v1154 = vld [vmem:[%s409 + $0x1] sm:$0xff]
      %v1155 = vld [vmem:[%s409 + $0x11] sm:$0xff]
      %v1156 = vld [vmem:[%s409 + $0x21] sm:$0xff]
      %v1157 = vld [vmem:[%s409 + $0x31] sm:$0xff]
      %v1158 = vld [vmem:[%s409 + $0x41] sm:$0xff]
      %v1159 = vld [vmem:[%s409 + $0x51] sm:$0xff]
      %v1160 = vld [vmem:[%s409 + $0x61] sm:$0xff]
      %v1161 = vld [vmem:[%s409 + $0x71] sm:$0xff]
      %v1162 = vpack.c.bf16 %v1155, %v1154
      %v1163 = vpack.c.bf16 %v1157, %v1156
      %v1164 = vpack.c.bf16 %v1159, %v1158
      %v1165 = vpack.c.bf16 %v1161, %v1160
      %s1166 = scalar_lea.vmem %s4, 320
      %v1167 = vld [vmem:[%s1166] sm:$0xf]
      %v1168 = vld [vmem:[%s1166 + $0x4] sm:$0xf]
      %v1169 = vld [vmem:[%s1166 + $0x8] sm:$0xf]
      %v1170 = vld [vmem:[%s1166 + $0xc] sm:$0xf]
      %v1171 = vld [vmem:[%s1166 + $0x10] sm:$0xf]
      %v1172 = vld [vmem:[%s1166 + $0x14] sm:$0xf]
      %v1173 = vld [vmem:[%s1166 + $0x18] sm:$0xf]
      %v1174 = vld [vmem:[%s1166 + $0x1c] sm:$0xf]
      %v1175 = vld [vmem:[%s1166 + $0x20] sm:$0xf]
      %v1176 = vld [vmem:[%s1166 + $0x24] sm:$0xf]
      %v1177 = vld [vmem:[%s1166 + $0x28] sm:$0xf]
      %v1178 = vld [vmem:[%s1166 + $0x2c] sm:$0xf]
      %v1179 = vld [vmem:[%s1166 + $0x30] sm:$0xf]
      %v1180 = vld [vmem:[%s1166 + $0x34] sm:$0xf]
      %v1181 = vld [vmem:[%s1166 + $0x38] sm:$0xf]
      %v1182 = vld [vmem:[%s1166 + $0x3c] sm:$0xf]
      %v1199 = vunpack.c.l.b16 %v1167
      %v1200 = vunpack.c.l.b16 %v1168
      %v1201 = vunpack.c.l.b16 %v1169
      %v1202 = vunpack.c.l.b16 %v1170
      %v1203 = vunpack.c.l.b16 %v1171
      %v1204 = vunpack.c.l.b16 %v1172
      %v1205 = vunpack.c.l.b16 %v1173
      %v1206 = vunpack.c.l.b16 %v1174
      %v1207 = vunpack.c.l.b16 %v1175
      %v1208 = vunpack.c.l.b16 %v1176
      %v1209 = vunpack.c.l.b16 %v1177
      %v1210 = vunpack.c.l.b16 %v1178
      %v1211 = vunpack.c.l.b16 %v1179
      %v1212 = vunpack.c.l.b16 %v1180
      %v1213 = vunpack.c.l.b16 %v1181
      %v1214 = vunpack.c.l.b16 %v1182
      %v1215 = vpack.c.b16 %v1200, %v1199
      %v1216 = vpack.c.b16 %v1202, %v1201
      %v1217 = vpack.c.b16 %v1204, %v1203
      %v1218 = vpack.c.b16 %v1206, %v1205
      %v1219 = vpack.c.b16 %v1208, %v1207
      %v1220 = vpack.c.b16 %v1210, %v1209
      %v1221 = vpack.c.b16 %v1212, %v1211
      %v1222 = vpack.c.b16 %v1214, %v1213
      %1231 = vmatprep.subr.bf16.mxu0 0
      %1232 = vmatpush1.bf16.msra.mxu0 %v1222
      %1233 = vmatprep.subr.bf16.mxu0 0
      %1234 = vmatpush1.bf16.msra.mxu0 %v1221
      %1235 = vmatprep.subr.bf16.mxu0 0
      %1236 = vmatpush1.bf16.msra.mxu0 %v1220
      %1237 = vmatprep.subr.bf16.mxu0 0
      %1238 = vmatpush1.bf16.msra.mxu0 %v1219
      %1239 = vmatprep.subr.bf16.mxu0 0
      %1240 = vmatpush1.bf16.msra.mxu0 %v1218
      %1241 = vmatprep.subr.bf16.mxu0 0
      %1242 = vmatpush1.bf16.msra.mxu0 %v1217
      %1243 = vmatprep.subr.bf16.mxu0 0
      %1244 = vmatpush1.bf16.msra.mxu0 %v1216
      %1245 = vmatprep.subr.bf16.mxu0 0
      %1246 = vmatpush1.bf16.msra.mxu0 %v1215
      %1247 = vmatprep.subr.bf16.mxu0 0
      %1248 = vmatpush2.bf16.msra.mxu0 0
      %1249 = vmatprep.subr.bf16.mxu0 0
      %1250 = vmatpush2.bf16.msra.mxu0 0
      %1251 = vmatprep.subr.bf16.mxu0 0
      %1252 = vmatpush2.bf16.msra.mxu0 0
      %1253 = vmatprep.subr.bf16.mxu0 0
      %1254 = vmatpush2.bf16.msra.mxu0 0
      %1255 = vmatprep.subr.bf16.mxu0 0
      %1256 = vmatpush2.bf16.msra.mxu0 0
      %1257 = vmatprep.subr.bf16.mxu0 0
      %1258 = vmatpush2.bf16.msra.mxu0 0
      %1259 = vmatprep.subr.bf16.mxu0 0
      %1260 = vmatpush2.bf16.msra.mxu0 0
      %1261 = vmatprep.subr.bf16.mxu0 0
      %1262 = vmatpush2.bf16.msra.mxu0 0
      %1263 = vmatprep.mubr.bf16.mxu0 0
      %1264 = vmatmul.mubr.bf16.gmra.mxu0 %v1162
      %v1265 = vpop.f32.mrf.mxu0
      %v1266 = vadd.f32 0.0, %v1265
      %v1267 = vpop.f32.mrf.mxu0
      %v1268 = vpop.f32.mrf.mxu0
      %v1269 = vadd.f32 0.0, %v1268
      %v1270 = vpop.f32.mrf.mxu0
      %1271 = vmatprep.mubr.bf16.mxu0 0
      %1272 = vmatmul.mubr.bf16.gmra.mxu0 %v1163
      %v1273 = vpop.f32.mrf.mxu0
      %v1274 = vadd.f32 0.0, %v1273
      %v1275 = vpop.f32.mrf.mxu0
      %v1276 = vpop.f32.mrf.mxu0
      %v1277 = vadd.f32 0.0, %v1276
      %v1278 = vpop.f32.mrf.mxu0
      %1279 = vmatprep.mubr.bf16.mxu0 0
      %1280 = vmatmul.mubr.bf16.gmra.mxu0 %v1164
      %v1281 = vpop.f32.mrf.mxu0
      %v1282 = vadd.f32 0.0, %v1281
      %v1283 = vpop.f32.mrf.mxu0
      %v1284 = vpop.f32.mrf.mxu0
      %v1285 = vadd.f32 0.0, %v1284
      %v1286 = vpop.f32.mrf.mxu0
      %1287 = vmatprep.mubr.bf16.mxu0 0
      %1288 = vmatmul.mubr.bf16.gmra.mxu0 %v1165
      %v1289 = vpop.f32.mrf.mxu0
      %v1290 = vadd.f32 0.0, %v1289
      %v1291 = vpop.f32.mrf.mxu0
      %v1292 = vpop.f32.mrf.mxu0
      %v1293 = vadd.f32 0.0, %v1292
      %v1294 = vpop.f32.mrf.mxu0
      %1295 = vdwg.mxu0
      %v1296 = vadd.f32 %v1146, %v1266
      %v1297 = vadd.f32 %v1147, %v1269
      %v1298 = vadd.f32 %v1148, %v1274
      %v1299 = vadd.f32 %v1149, %v1277
      %v1300 = vadd.f32 %v1150, %v1282
      %v1301 = vadd.f32 %v1151, %v1285
      %v1302 = vadd.f32 %v1152, %v1290
      %v1303 = vadd.f32 %v1153, %v1293
      %s1304 = scalar_lea.vmem %s399, 16
      %v1305 = vld [vmem:[%s1304] sm:$0xff]
      %v1306 = vld [vmem:[%s1304 + $0x10] sm:$0xff]
      %v1307 = vld [vmem:[%s1304 + $0x20] sm:$0xff]
      %v1308 = vld [vmem:[%s1304 + $0x30] sm:$0xff]
      %v1309 = vld [vmem:[%s1304 + $0x40] sm:$0xff]
      %v1310 = vld [vmem:[%s1304 + $0x50] sm:$0xff]
      %v1311 = vld [vmem:[%s1304 + $0x60] sm:$0xff]
      %v1312 = vld [vmem:[%s1304 + $0x70] sm:$0xff]
      %v1313 = vpack.c.bf16 %v1306, %v1305
      %v1314 = vpack.c.bf16 %v1308, %v1307
      %v1315 = vpack.c.bf16 %v1310, %v1309
      %v1316 = vpack.c.bf16 %v1312, %v1311
      %s1317 = scalar_lea.vmem %s4, 384
      %v1318 = vld [vmem:[%s1317] sm:$0xf]
      %v1319 = vld [vmem:[%s1317 + $0x4] sm:$0xf]
      %v1320 = vld [vmem:[%s1317 + $0x8] sm:$0xf]
      %v1321 = vld [vmem:[%s1317 + $0xc] sm:$0xf]
      %v1322 = vld [vmem:[%s1317 + $0x10] sm:$0xf]
      %v1323 = vld [vmem:[%s1317 + $0x14] sm:$0xf]
      %v1324 = vld [vmem:[%s1317 + $0x18] sm:$0xf]
      %v1325 = vld [vmem:[%s1317 + $0x1c] sm:$0xf]
      %v1326 = vld [vmem:[%s1317 + $0x20] sm:$0xf]
      %v1327 = vld [vmem:[%s1317 + $0x24] sm:$0xf]
      %v1328 = vld [vmem:[%s1317 + $0x28] sm:$0xf]
      %v1329 = vld [vmem:[%s1317 + $0x2c] sm:$0xf]
      %v1330 = vld [vmem:[%s1317 + $0x30] sm:$0xf]
      %v1331 = vld [vmem:[%s1317 + $0x34] sm:$0xf]
      %v1332 = vld [vmem:[%s1317 + $0x38] sm:$0xf]
      %v1333 = vld [vmem:[%s1317 + $0x3c] sm:$0xf]
      %v1350 = vunpack.c.l.b16 %v1318
      %v1351 = vunpack.c.l.b16 %v1319
      %v1352 = vunpack.c.l.b16 %v1320
      %v1353 = vunpack.c.l.b16 %v1321
      %v1354 = vunpack.c.l.b16 %v1322
      %v1355 = vunpack.c.l.b16 %v1323
      %v1356 = vunpack.c.l.b16 %v1324
      %v1357 = vunpack.c.l.b16 %v1325
      %v1358 = vunpack.c.l.b16 %v1326
      %v1359 = vunpack.c.l.b16 %v1327
      %v1360 = vunpack.c.l.b16 %v1328
      %v1361 = vunpack.c.l.b16 %v1329
      %v1362 = vunpack.c.l.b16 %v1330
      %v1363 = vunpack.c.l.b16 %v1331
      %v1364 = vunpack.c.l.b16 %v1332
      %v1365 = vunpack.c.l.b16 %v1333
      %v1366 = vpack.c.b16 %v1351, %v1350
      %v1367 = vpack.c.b16 %v1353, %v1352
      %v1368 = vpack.c.b16 %v1355, %v1354
      %v1369 = vpack.c.b16 %v1357, %v1356
      %v1370 = vpack.c.b16 %v1359, %v1358
      %v1371 = vpack.c.b16 %v1361, %v1360
      %v1372 = vpack.c.b16 %v1363, %v1362
      %v1373 = vpack.c.b16 %v1365, %v1364
      %1382 = vmatprep.subr.bf16.mxu0 0
      %1383 = vmatpush1.bf16.msra.mxu0 %v1373
      %1384 = vmatprep.subr.bf16.mxu0 0
      %1385 = vmatpush1.bf16.msra.mxu0 %v1372
      %1386 = vmatprep.subr.bf16.mxu0 0
      %1387 = vmatpush1.bf16.msra.mxu0 %v1371
      %1388 = vmatprep.subr.bf16.mxu0 0
      %1389 = vmatpush1.bf16.msra.mxu0 %v1370
      %1390 = vmatprep.subr.bf16.mxu0 0
      %1391 = vmatpush1.bf16.msra.mxu0 %v1369
      %1392 = vmatprep.subr.bf16.mxu0 0
      %1393 = vmatpush1.bf16.msra.mxu0 %v1368
      %1394 = vmatprep.subr.bf16.mxu0 0
      %1395 = vmatpush1.bf16.msra.mxu0 %v1367
      %1396 = vmatprep.subr.bf16.mxu0 0
      %1397 = vmatpush1.bf16.msra.mxu0 %v1366
      %1398 = vmatprep.subr.bf16.mxu0 0
      %1399 = vmatpush2.bf16.msra.mxu0 0
      %1400 = vmatprep.subr.bf16.mxu0 0
      %1401 = vmatpush2.bf16.msra.mxu0 0
      %1402 = vmatprep.subr.bf16.mxu0 0
      %1403 = vmatpush2.bf16.msra.mxu0 0
      %1404 = vmatprep.subr.bf16.mxu0 0
      %1405 = vmatpush2.bf16.msra.mxu0 0
      %1406 = vmatprep.subr.bf16.mxu0 0
      %1407 = vmatpush2.bf16.msra.mxu0 0
      %1408 = vmatprep.subr.bf16.mxu0 0
      %1409 = vmatpush2.bf16.msra.mxu0 0
      %1410 = vmatprep.subr.bf16.mxu0 0
      %1411 = vmatpush2.bf16.msra.mxu0 0
      %1412 = vmatprep.subr.bf16.mxu0 0
      %1413 = vmatpush2.bf16.msra.mxu0 0
      %1414 = vmatprep.mubr.bf16.mxu0 0
      %1415 = vmatmul.mubr.bf16.gmra.mxu0 %v1313
      %v1416 = vpop.f32.mrf.mxu0
      %v1417 = vadd.f32 0.0, %v1416
      %v1418 = vpop.f32.mrf.mxu0
      %v1419 = vpop.f32.mrf.mxu0
      %v1420 = vadd.f32 0.0, %v1419
      %v1421 = vpop.f32.mrf.mxu0
      %1422 = vmatprep.mubr.bf16.mxu0 0
      %1423 = vmatmul.mubr.bf16.gmra.mxu0 %v1314
      %v1424 = vpop.f32.mrf.mxu0
      %v1425 = vadd.f32 0.0, %v1424
      %v1426 = vpop.f32.mrf.mxu0
      %v1427 = vpop.f32.mrf.mxu0
      %v1428 = vadd.f32 0.0, %v1427
      %v1429 = vpop.f32.mrf.mxu0
      %1430 = vmatprep.mubr.bf16.mxu0 0
      %1431 = vmatmul.mubr.bf16.gmra.mxu0 %v1315
      %v1432 = vpop.f32.mrf.mxu0
      %v1433 = vadd.f32 0.0, %v1432
      %v1434 = vpop.f32.mrf.mxu0
      %v1435 = vpop.f32.mrf.mxu0
      %v1436 = vadd.f32 0.0, %v1435
      %v1437 = vpop.f32.mrf.mxu0
      %1438 = vmatprep.mubr.bf16.mxu0 0
      %1439 = vmatmul.mubr.bf16.gmra.mxu0 %v1316
      %v1440 = vpop.f32.mrf.mxu0
      %v1441 = vadd.f32 0.0, %v1440
      %v1442 = vpop.f32.mrf.mxu0
      %v1443 = vpop.f32.mrf.mxu0
      %v1444 = vadd.f32 0.0, %v1443
      %v1445 = vpop.f32.mrf.mxu0
      %1446 = vdwg.mxu0
      %v1447 = vadd.f32 %v1296, %v1417
      %v1448 = vadd.f32 %v1297, %v1420
      %v1449 = vadd.f32 %v1298, %v1425
      %v1450 = vadd.f32 %v1299, %v1428
      %v1451 = vadd.f32 %v1300, %v1433
      %v1452 = vadd.f32 %v1301, %v1436
      %v1453 = vadd.f32 %v1302, %v1441
      %v1454 = vadd.f32 %v1303, %v1444
      %s1455 = scalar_lea.vmem %s404, 16
      %v1456 = vld [vmem:[%s1455] sm:$0xff]
      %v1457 = vld [vmem:[%s1455 + $0x10] sm:$0xff]
      %v1458 = vld [vmem:[%s1455 + $0x20] sm:$0xff]
      %v1459 = vld [vmem:[%s1455 + $0x30] sm:$0xff]
      %v1460 = vld [vmem:[%s1455 + $0x40] sm:$0xff]
      %v1461 = vld [vmem:[%s1455 + $0x50] sm:$0xff]
      %v1462 = vld [vmem:[%s1455 + $0x60] sm:$0xff]
      %v1463 = vld [vmem:[%s1455 + $0x70] sm:$0xff]
      %v1464 = vpack.c.bf16 %v1457, %v1456
      %v1465 = vpack.c.bf16 %v1459, %v1458
      %v1466 = vpack.c.bf16 %v1461, %v1460
      %v1467 = vpack.c.bf16 %v1463, %v1462
      %s1468 = scalar_lea.vmem %s4, 448
      %v1469 = vld [vmem:[%s1468] sm:$0xf]
      %v1470 = vld [vmem:[%s1468 + $0x4] sm:$0xf]
      %v1471 = vld [vmem:[%s1468 + $0x8] sm:$0xf]
      %v1472 = vld [vmem:[%s1468 + $0xc] sm:$0xf]
      %v1473 = vld [vmem:[%s1468 + $0x10] sm:$0xf]
      %v1474 = vld [vmem:[%s1468 + $0x14] sm:$0xf]
      %v1475 = vld [vmem:[%s1468 + $0x18] sm:$0xf]
      %v1476 = vld [vmem:[%s1468 + $0x1c] sm:$0xf]
      %v1477 = vld [vmem:[%s1468 + $0x20] sm:$0xf]
      %v1478 = vld [vmem:[%s1468 + $0x24] sm:$0xf]
      %v1479 = vld [vmem:[%s1468 + $0x28] sm:$0xf]
      %v1480 = vld [vmem:[%s1468 + $0x2c] sm:$0xf]
      %v1481 = vld [vmem:[%s1468 + $0x30] sm:$0xf]
      %v1482 = vld [vmem:[%s1468 + $0x34] sm:$0xf]
      %v1483 = vld [vmem:[%s1468 + $0x38] sm:$0xf]
      %v1484 = vld [vmem:[%s1468 + $0x3c] sm:$0xf]
      %v1501 = vunpack.c.l.b16 %v1469
      %v1502 = vunpack.c.l.b16 %v1470
      %v1503 = vunpack.c.l.b16 %v1471
      %v1504 = vunpack.c.l.b16 %v1472
      %v1505 = vunpack.c.l.b16 %v1473
      %v1506 = vunpack.c.l.b16 %v1474
      %v1507 = vunpack.c.l.b16 %v1475
      %v1508 = vunpack.c.l.b16 %v1476
      %v1509 = vunpack.c.l.b16 %v1477
      %v1510 = vunpack.c.l.b16 %v1478
      %v1511 = vunpack.c.l.b16 %v1479
      %v1512 = vunpack.c.l.b16 %v1480
      %v1513 = vunpack.c.l.b16 %v1481
      %v1514 = vunpack.c.l.b16 %v1482
      %v1515 = vunpack.c.l.b16 %v1483
      %v1516 = vunpack.c.l.b16 %v1484
      %v1517 = vpack.c.b16 %v1502, %v1501
      %v1518 = vpack.c.b16 %v1504, %v1503
      %v1519 = vpack.c.b16 %v1506, %v1505
      %v1520 = vpack.c.b16 %v1508, %v1507
      %v1521 = vpack.c.b16 %v1510, %v1509
      %v1522 = vpack.c.b16 %v1512, %v1511
      %v1523 = vpack.c.b16 %v1514, %v1513
      %v1524 = vpack.c.b16 %v1516, %v1515
      %1533 = vmatprep.subr.bf16.mxu0 0
      %1534 = vmatpush1.bf16.msra.mxu0 %v1524
      %1535 = vmatprep.subr.bf16.mxu0 0
      %1536 = vmatpush1.bf16.msra.mxu0 %v1523
      %1537 = vmatprep.subr.bf16.mxu0 0
      %1538 = vmatpush1.bf16.msra.mxu0 %v1522
      %1539 = vmatprep.subr.bf16.mxu0 0
      %1540 = vmatpush1.bf16.msra.mxu0 %v1521
      %1541 = vmatprep.subr.bf16.mxu0 0
      %1542 = vmatpush1.bf16.msra.mxu0 %v1520
      %1543 = vmatprep.subr.bf16.mxu0 0
      %1544 = vmatpush1.bf16.msra.mxu0 %v1519
      %1545 = vmatprep.subr.bf16.mxu0 0
      %1546 = vmatpush1.bf16.msra.mxu0 %v1518
      %1547 = vmatprep.subr.bf16.mxu0 0
      %1548 = vmatpush1.bf16.msra.mxu0 %v1517
      %1549 = vmatprep.subr.bf16.mxu0 0
      %1550 = vmatpush2.bf16.msra.mxu0 0
      %1551 = vmatprep.subr.bf16.mxu0 0
      %1552 = vmatpush2.bf16.msra.mxu0 0
      %1553 = vmatprep.subr.bf16.mxu0 0
      %1554 = vmatpush2.bf16.msra.mxu0 0
      %1555 = vmatprep.subr.bf16.mxu0 0
      %1556 = vmatpush2.bf16.msra.mxu0 0
      %1557 = vmatprep.subr.bf16.mxu0 0
      %1558 = vmatpush2.bf16.msra.mxu0 0
      %1559 = vmatprep.subr.bf16.mxu0 0
      %1560 = vmatpush2.bf16.msra.mxu0 0
      %1561 = vmatprep.subr.bf16.mxu0 0
      %1562 = vmatpush2.bf16.msra.mxu0 0
      %1563 = vmatprep.subr.bf16.mxu0 0
      %1564 = vmatpush2.bf16.msra.mxu0 0
      %1565 = vmatprep.mubr.bf16.mxu0 0
      %1566 = vmatmul.mubr.bf16.gmra.mxu0 %v1464
      %v1567 = vpop.f32.mrf.mxu0
      %v1568 = vadd.f32 0.0, %v1567
      %v1569 = vpop.f32.mrf.mxu0
      %v1570 = vpop.f32.mrf.mxu0
      %v1571 = vadd.f32 0.0, %v1570
      %v1572 = vpop.f32.mrf.mxu0
      %1573 = vmatprep.mubr.bf16.mxu0 0
      %1574 = vmatmul.mubr.bf16.gmra.mxu0 %v1465
      %v1575 = vpop.f32.mrf.mxu0
      %v1576 = vadd.f32 0.0, %v1575
      %v1577 = vpop.f32.mrf.mxu0
      %v1578 = vpop.f32.mrf.mxu0
      %v1579 = vadd.f32 0.0, %v1578
      %v1580 = vpop.f32.mrf.mxu0
      %1581 = vmatprep.mubr.bf16.mxu0 0
      %1582 = vmatmul.mubr.bf16.gmra.mxu0 %v1466
      %v1583 = vpop.f32.mrf.mxu0
      %v1584 = vadd.f32 0.0, %v1583
      %v1585 = vpop.f32.mrf.mxu0
      %v1586 = vpop.f32.mrf.mxu0
      %v1587 = vadd.f32 0.0, %v1586
      %v1588 = vpop.f32.mrf.mxu0
      %1589 = vmatprep.mubr.bf16.mxu0 0
      %1590 = vmatmul.mubr.bf16.gmra.mxu0 %v1467
      %v1591 = vpop.f32.mrf.mxu0
      %v1592 = vadd.f32 0.0, %v1591
      %v1593 = vpop.f32.mrf.mxu0
      %v1594 = vpop.f32.mrf.mxu0
      %v1595 = vadd.f32 0.0, %v1594
      %v1596 = vpop.f32.mrf.mxu0
      %1597 = vdwg.mxu0
      %v1598 = vadd.f32 %v1447, %v1568
      %v1599 = vadd.f32 %v1448, %v1571
      %v1600 = vadd.f32 %v1449, %v1576
      %v1601 = vadd.f32 %v1450, %v1579
      %v1602 = vadd.f32 %v1451, %v1584
      %v1603 = vadd.f32 %v1452, %v1587
      %v1604 = vadd.f32 %v1453, %v1592
      %v1605 = vadd.f32 %v1454, %v1595
      %v1606 = vld [vmem:[%s1304 + $0x1] sm:$0xff]
      %v1607 = vld [vmem:[%s1304 + $0x11] sm:$0xff]
      %v1608 = vld [vmem:[%s1304 + $0x21] sm:$0xff]
      %v1609 = vld [vmem:[%s1304 + $0x31] sm:$0xff]
      %v1610 = vld [vmem:[%s1304 + $0x41] sm:$0xff]
      %v1611 = vld [vmem:[%s1304 + $0x51] sm:$0xff]
      %v1612 = vld [vmem:[%s1304 + $0x61] sm:$0xff]
      %v1613 = vld [vmem:[%s1304 + $0x71] sm:$0xff]
      %v1614 = vpack.c.bf16 %v1607, %v1606
      %v1615 = vpack.c.bf16 %v1609, %v1608
      %v1616 = vpack.c.bf16 %v1611, %v1610
      %v1617 = vpack.c.bf16 %v1613, %v1612
      %s1618 = scalar_lea.vmem %s4, 512
      %v1619 = vld [vmem:[%s1618] sm:$0xf]
      %v1620 = vld [vmem:[%s1618 + $0x4] sm:$0xf]
      %v1621 = vld [vmem:[%s1618 + $0x8] sm:$0xf]
      %v1622 = vld [vmem:[%s1618 + $0xc] sm:$0xf]
      %v1623 = vld [vmem:[%s1618 + $0x10] sm:$0xf]
      %v1624 = vld [vmem:[%s1618 + $0x14] sm:$0xf]
      %v1625 = vld [vmem:[%s1618 + $0x18] sm:$0xf]
      %v1626 = vld [vmem:[%s1618 + $0x1c] sm:$0xf]
      %v1627 = vld [vmem:[%s1618 + $0x20] sm:$0xf]
      %v1628 = vld [vmem:[%s1618 + $0x24] sm:$0xf]
      %v1629 = vld [vmem:[%s1618 + $0x28] sm:$0xf]
      %v1630 = vld [vmem:[%s1618 + $0x2c] sm:$0xf]
      %v1631 = vld [vmem:[%s1618 + $0x30] sm:$0xf]
      %v1632 = vld [vmem:[%s1618 + $0x34] sm:$0xf]
      %v1633 = vld [vmem:[%s1618 + $0x38] sm:$0xf]
      %v1634 = vld [vmem:[%s1618 + $0x3c] sm:$0xf]
      %v1651 = vunpack.c.l.b16 %v1619
      %v1652 = vunpack.c.l.b16 %v1620
      %v1653 = vunpack.c.l.b16 %v1621
      %v1654 = vunpack.c.l.b16 %v1622
      %v1655 = vunpack.c.l.b16 %v1623
      %v1656 = vunpack.c.l.b16 %v1624
      %v1657 = vunpack.c.l.b16 %v1625
      %v1658 = vunpack.c.l.b16 %v1626
      %v1659 = vunpack.c.l.b16 %v1627
      %v1660 = vunpack.c.l.b16 %v1628
      %v1661 = vunpack.c.l.b16 %v1629
      %v1662 = vunpack.c.l.b16 %v1630
      %v1663 = vunpack.c.l.b16 %v1631
      %v1664 = vunpack.c.l.b16 %v1632
      %v1665 = vunpack.c.l.b16 %v1633
      %v1666 = vunpack.c.l.b16 %v1634
      %v1667 = vpack.c.b16 %v1652, %v1651
      %v1668 = vpack.c.b16 %v1654, %v1653
      %v1669 = vpack.c.b16 %v1656, %v1655
      %v1670 = vpack.c.b16 %v1658, %v1657
      %v1671 = vpack.c.b16 %v1660, %v1659
      %v1672 = vpack.c.b16 %v1662, %v1661
      %v1673 = vpack.c.b16 %v1664, %v1663
      %v1674 = vpack.c.b16 %v1666, %v1665
      %1683 = vmatprep.subr.bf16.mxu0 0
      %1684 = vmatpush1.bf16.msra.mxu0 %v1674
      %1685 = vmatprep.subr.bf16.mxu0 0
      %1686 = vmatpush1.bf16.msra.mxu0 %v1673
      %1687 = vmatprep.subr.bf16.mxu0 0
      %1688 = vmatpush1.bf16.msra.mxu0 %v1672
      %1689 = vmatprep.subr.bf16.mxu0 0
      %1690 = vmatpush1.bf16.msra.mxu0 %v1671
      %1691 = vmatprep.subr.bf16.mxu0 0
      %1692 = vmatpush1.bf16.msra.mxu0 %v1670
      %1693 = vmatprep.subr.bf16.mxu0 0
      %1694 = vmatpush1.bf16.msra.mxu0 %v1669
      %1695 = vmatprep.subr.bf16.mxu0 0
      %1696 = vmatpush1.bf16.msra.mxu0 %v1668
      %1697 = vmatprep.subr.bf16.mxu0 0
      %1698 = vmatpush1.bf16.msra.mxu0 %v1667
      %1699 = vmatprep.subr.bf16.mxu0 0
      %1700 = vmatpush2.bf16.msra.mxu0 0
      %1701 = vmatprep.subr.bf16.mxu0 0
      %1702 = vmatpush2.bf16.msra.mxu0 0
      %1703 = vmatprep.subr.bf16.mxu0 0
      %1704 = vmatpush2.bf16.msra.mxu0 0
      %1705 = vmatprep.subr.bf16.mxu0 0
      %1706 = vmatpush2.bf16.msra.mxu0 0
      %1707 = vmatprep.subr.bf16.mxu0 0
      %1708 = vmatpush2.bf16.msra.mxu0 0
      %1709 = vmatprep.subr.bf16.mxu0 0
      %1710 = vmatpush2.bf16.msra.mxu0 0
      %1711 = vmatprep.subr.bf16.mxu0 0
      %1712 = vmatpush2.bf16.msra.mxu0 0
      %1713 = vmatprep.subr.bf16.mxu0 0
      %1714 = vmatpush2.bf16.msra.mxu0 0
      %1715 = vmatprep.mubr.bf16.mxu0 0
      %1716 = vmatmul.mubr.bf16.gmra.mxu0 %v1614
      %v1717 = vpop.f32.mrf.mxu0
      %v1718 = vadd.f32 0.0, %v1717
      %v1719 = vpop.f32.mrf.mxu0
      %v1720 = vpop.f32.mrf.mxu0
      %v1721 = vadd.f32 0.0, %v1720
      %v1722 = vpop.f32.mrf.mxu0
      %1723 = vmatprep.mubr.bf16.mxu0 0
      %1724 = vmatmul.mubr.bf16.gmra.mxu0 %v1615
      %v1725 = vpop.f32.mrf.mxu0
      %v1726 = vadd.f32 0.0, %v1725
      %v1727 = vpop.f32.mrf.mxu0
      %v1728 = vpop.f32.mrf.mxu0
      %v1729 = vadd.f32 0.0, %v1728
      %v1730 = vpop.f32.mrf.mxu0
      %1731 = vmatprep.mubr.bf16.mxu0 0
      %1732 = vmatmul.mubr.bf16.gmra.mxu0 %v1616
      %v1733 = vpop.f32.mrf.mxu0
      %v1734 = vadd.f32 0.0, %v1733
      %v1735 = vpop.f32.mrf.mxu0
      %v1736 = vpop.f32.mrf.mxu0
      %v1737 = vadd.f32 0.0, %v1736
      %v1738 = vpop.f32.mrf.mxu0
      %1739 = vmatprep.mubr.bf16.mxu0 0
      %1740 = vmatmul.mubr.bf16.gmra.mxu0 %v1617
      %v1741 = vpop.f32.mrf.mxu0
      %v1742 = vadd.f32 0.0, %v1741
      %v1743 = vpop.f32.mrf.mxu0
      %v1744 = vpop.f32.mrf.mxu0
      %v1745 = vadd.f32 0.0, %v1744
      %v1746 = vpop.f32.mrf.mxu0
      %1747 = vdwg.mxu0
      %v1748 = vadd.f32 %v1598, %v1718
      %v1749 = vadd.f32 %v1599, %v1721
      %v1750 = vadd.f32 %v1600, %v1726
      %v1751 = vadd.f32 %v1601, %v1729
      %v1752 = vadd.f32 %v1602, %v1734
      %v1753 = vadd.f32 %v1603, %v1737
      %v1754 = vadd.f32 %v1604, %v1742
      %v1755 = vadd.f32 %v1605, %v1745
      %v1756 = vld [vmem:[%s5] sm:$0x1]
      %v1758 = vlaneseq
      %v1759 = vshrl.u32 %v1758, 7
      %v1760 = vsub.s32 0, %v1759
      %v1761 = vrot.slane %v1756, %v1760
      %v1763 = vadd.f32 %v1748, %v1761
      %v1764 = vadd.f32 %v1749, %v1761
      %v1765 = vadd.f32 %v1750, %v1761
      %v1766 = vadd.f32 %v1751, %v1761
      %v1767 = vadd.f32 %v1752, %v1761
      %v1768 = vadd.f32 %v1753, %v1761
      %v1769 = vadd.f32 %v1754, %v1761
      %v1770 = vadd.f32 %v1755, %v1761
      %v1771 = vmax.f32 %v1763, 0.0
      %v1772 = vmax.f32 %v1764, 0.0
      %v1773 = vmax.f32 %v1765, 0.0
      %v1774 = vmax.f32 %v1766, 0.0
      %v1775 = vmax.f32 %v1767, 0.0
      %v1776 = vmax.f32 %v1768, 0.0
      %v1777 = vmax.f32 %v1769, 0.0
      %v1778 = vmax.f32 %v1770, 0.0
      %1779 = vst [vmem:[#allocation2] sm:$0xff] 0.0
      %1780 = vst [vmem:[#allocation2 + $0x8] sm:$0x3] 0.0
      %1781 = vst [vmem:[#allocation2 + $0x10] sm:$0xff] 0.0
      %1782 = vst [vmem:[#allocation2 + $0x18] sm:$0x3] 0.0
      %1783 = vst [vmem:[#allocation2 + $0x20] sm:$0xff] 0.0
      %1784 = vst [vmem:[#allocation2 + $0x28] sm:$0x3] 0.0
      %1785 = vst [vmem:[#allocation2 + $0x30] sm:$0xff] 0.0
      %1786 = vst [vmem:[#allocation2 + $0x38] sm:$0x3] 0.0
      %1787 = vst [vmem:[#allocation2 + $0x40] sm:$0xff] 0.0
      %1788 = vst [vmem:[#allocation2 + $0x48] sm:$0x3] 0.0
      %1789 = vst [vmem:[#allocation2 + $0x50] sm:$0xff] 0.0
      %1790 = vst [vmem:[#allocation2 + $0x58] sm:$0x3] 0.0
      %1791 = vst [vmem:[#allocation2 + $0x60] sm:$0xff] 0.0
      %1792 = vst [vmem:[#allocation2 + $0x68] sm:$0x3] 0.0
      %1793 = vst [vmem:[#allocation2 + $0x70] sm:$0xff] 0.0
      %1794 = vst [vmem:[#allocation2 + $0x78] sm:$0x3] 0.0
      %1795 = vst [vmem:[#allocation2 + $0x80] sm:$0xff] 0.0
      %1796 = vst [vmem:[#allocation2 + $0x88] sm:$0x3] 0.0
      %1797 = vst [vmem:[#allocation2 + $0x90] sm:$0xff] 0.0
      %1798 = vst [vmem:[#allocation2 + $0x98] sm:$0x3] 0.0
      %s1799 = scalar_lea.vmem [#allocation2], 16
      %1800 = vst [vmem:[%s1799 + $0x1] sm:$0xff] %v1771
      %1801 = vst [vmem:[%s1799 + $0x11] sm:$0xff] %v1772
      %1802 = vst [vmem:[%s1799 + $0x21] sm:$0xff] %v1773
      %1803 = vst [vmem:[%s1799 + $0x31] sm:$0xff] %v1774
      %1804 = vst [vmem:[%s1799 + $0x41] sm:$0xff] %v1775
      %1805 = vst [vmem:[%s1799 + $0x51] sm:$0xff] %v1776
      %1806 = vst [vmem:[%s1799 + $0x61] sm:$0xff] %v1777
      %1807 = vst [vmem:[%s1799 + $0x71] sm:$0xff] %v1778
      %v1808 = vld [vmem:[#allocation2] sm:$0xff]
      %v1809 = vld [vmem:[#allocation2 + $0x10] sm:$0xff]
      %v1810 = vld [vmem:[#allocation2 + $0x20] sm:$0xff]
      %v1811 = vld [vmem:[#allocation2 + $0x30] sm:$0xff]
      %v1812 = vld [vmem:[#allocation2 + $0x40] sm:$0xff]
      %v1813 = vld [vmem:[#allocation2 + $0x50] sm:$0xff]
      %v1814 = vld [vmem:[#allocation2 + $0x60] sm:$0xff]
      %v1815 = vld [vmem:[#allocation2 + $0x70] sm:$0xff]
      %v1816 = vpack.c.bf16 %v1809, %v1808
      %v1817 = vpack.c.bf16 %v1811, %v1810
      %v1818 = vpack.c.bf16 %v1813, %v1812
      %v1819 = vpack.c.bf16 %v1815, %v1814
      %v1820 = vld [vmem:[%s6] sm:$0xf]
      %v1821 = vld [vmem:[%s6 + $0x4] sm:$0xf]
      %v1822 = vld [vmem:[%s6 + $0x8] sm:$0xf]
      %v1823 = vld [vmem:[%s6 + $0xc] sm:$0xf]
      %v1824 = vld [vmem:[%s6 + $0x10] sm:$0xf]
      %v1825 = vld [vmem:[%s6 + $0x14] sm:$0xf]
      %v1826 = vld [vmem:[%s6 + $0x18] sm:$0xf]
      %v1827 = vld [vmem:[%s6 + $0x1c] sm:$0xf]
      %v1828 = vld [vmem:[%s6 + $0x20] sm:$0xf]
      %v1829 = vld [vmem:[%s6 + $0x24] sm:$0xf]
      %v1830 = vld [vmem:[%s6 + $0x28] sm:$0xf]
      %v1831 = vld [vmem:[%s6 + $0x2c] sm:$0xf]
      %v1832 = vld [vmem:[%s6 + $0x30] sm:$0xf]
      %v1833 = vld [vmem:[%s6 + $0x34] sm:$0xf]
      %v1834 = vld [vmem:[%s6 + $0x38] sm:$0xf]
      %v1835 = vld [vmem:[%s6 + $0x3c] sm:$0xf]
      %v1836 = vld [vmem:[#allocation2 + $0x1] sm:$0xff]
      %v1837 = vld [vmem:[#allocation2 + $0x11] sm:$0xff]
      %v1838 = vld [vmem:[#allocation2 + $0x21] sm:$0xff]
      %v1839 = vld [vmem:[#allocation2 + $0x31] sm:$0xff]
      %v1840 = vld [vmem:[#allocation2 + $0x41] sm:$0xff]
      %v1841 = vld [vmem:[#allocation2 + $0x51] sm:$0xff]
      %v1842 = vld [vmem:[#allocation2 + $0x61] sm:$0xff]
      %v1843 = vld [vmem:[#allocation2 + $0x71] sm:$0xff]
      %v1844 = vpack.c.bf16 %v1837, %v1836
      %v1845 = vpack.c.bf16 %v1839, %v1838
      %v1846 = vpack.c.bf16 %v1841, %v1840
      %v1847 = vpack.c.bf16 %v1843, %v1842
      %s1848 = scalar_lea.vmem %s6, 64
      %v1849 = vld [vmem:[%s1848] sm:$0xf]
      %v1850 = vld [vmem:[%s1848 + $0x4] sm:$0xf]
      %v1851 = vld [vmem:[%s1848 + $0x8] sm:$0xf]
      %v1852 = vld [vmem:[%s1848 + $0xc] sm:$0xf]
      %v1853 = vld [vmem:[%s1848 + $0x10] sm:$0xf]
      %v1854 = vld [vmem:[%s1848 + $0x14] sm:$0xf]
      %v1855 = vld [vmem:[%s1848 + $0x18] sm:$0xf]
      %v1856 = vld [vmem:[%s1848 + $0x1c] sm:$0xf]
      %v1857 = vld [vmem:[%s1848 + $0x20] sm:$0xf]
      %v1858 = vld [vmem:[%s1848 + $0x24] sm:$0xf]
      %v1859 = vld [vmem:[%s1848 + $0x28] sm:$0xf]
      %v1860 = vld [vmem:[%s1848 + $0x2c] sm:$0xf]
      %v1861 = vld [vmem:[%s1848 + $0x30] sm:$0xf]
      %v1862 = vld [vmem:[%s1848 + $0x34] sm:$0xf]
      %v1863 = vld [vmem:[%s1848 + $0x38] sm:$0xf]
      %v1864 = vld [vmem:[%s1848 + $0x3c] sm:$0xf]
      %v1881 = vunpack.c.l.b16 %v1849
      %v1882 = vunpack.c.l.b16 %v1850
      %v1883 = vunpack.c.l.b16 %v1851
      %v1884 = vunpack.c.l.b16 %v1852
      %v1885 = vunpack.c.l.b16 %v1853
      %v1886 = vunpack.c.l.b16 %v1854
      %v1887 = vunpack.c.l.b16 %v1855
      %v1888 = vunpack.c.l.b16 %v1856
      %v1889 = vunpack.c.l.b16 %v1857
      %v1890 = vunpack.c.l.b16 %v1858
      %v1891 = vunpack.c.l.b16 %v1859
      %v1892 = vunpack.c.l.b16 %v1860
      %v1893 = vunpack.c.l.b16 %v1861
      %v1894 = vunpack.c.l.b16 %v1862
      %v1895 = vunpack.c.l.b16 %v1863
      %v1896 = vunpack.c.l.b16 %v1864
      %v1897 = vpack.c.b16 %v1882, %v1881
      %v1898 = vpack.c.b16 %v1884, %v1883
      %v1899 = vpack.c.b16 %v1886, %v1885
      %v1900 = vpack.c.b16 %v1888, %v1887
      %v1901 = vpack.c.b16 %v1890, %v1889
      %v1902 = vpack.c.b16 %v1892, %v1891
      %v1903 = vpack.c.b16 %v1894, %v1893
      %v1904 = vpack.c.b16 %v1896, %v1895
      %1913 = vmatprep.subr.bf16.mxu0 0
      %1914 = vmatpush1.bf16.msra.mxu0 %v1904
      %1915 = vmatprep.subr.bf16.mxu0 0
      %1916 = vmatpush1.bf16.msra.mxu0 %v1903
      %1917 = vmatprep.subr.bf16.mxu0 0
      %1918 = vmatpush1.bf16.msra.mxu0 %v1902
      %1919 = vmatprep.subr.bf16.mxu0 0
      %1920 = vmatpush1.bf16.msra.mxu0 %v1901
      %1921 = vmatprep.subr.bf16.mxu0 0
      %1922 = vmatpush1.bf16.msra.mxu0 %v1900
      %1923 = vmatprep.subr.bf16.mxu0 0
      %1924 = vmatpush1.bf16.msra.mxu0 %v1899
      %1925 = vmatprep.subr.bf16.mxu0 0
      %1926 = vmatpush1.bf16.msra.mxu0 %v1898
      %1927 = vmatprep.subr.bf16.mxu0 0
      %1928 = vmatpush1.bf16.msra.mxu0 %v1897
      %1929 = vmatprep.subr.bf16.mxu0 0
      %1930 = vmatpush2.bf16.msra.mxu0 0
      %1931 = vmatprep.subr.bf16.mxu0 0
      %1932 = vmatpush2.bf16.msra.mxu0 0
      %1933 = vmatprep.subr.bf16.mxu0 0
      %1934 = vmatpush2.bf16.msra.mxu0 0
      %1935 = vmatprep.subr.bf16.mxu0 0
      %1936 = vmatpush2.bf16.msra.mxu0 0
      %1937 = vmatprep.subr.bf16.mxu0 0
      %1938 = vmatpush2.bf16.msra.mxu0 0
      %1939 = vmatprep.subr.bf16.mxu0 0
      %1940 = vmatpush2.bf16.msra.mxu0 0
      %1941 = vmatprep.subr.bf16.mxu0 0
      %1942 = vmatpush2.bf16.msra.mxu0 0
      %1943 = vmatprep.subr.bf16.mxu0 0
      %1944 = vmatpush2.bf16.msra.mxu0 0
      %1945 = vmatprep.mubr.bf16.mxu0 0
      %1946 = vmatmul.mubr.bf16.gmra.mxu0 %v1844
      %v1947 = vpop.f32.mrf.mxu0
      %v1948 = vadd.f32 0.0, %v1947
      %v1949 = vpop.f32.mrf.mxu0
      %v1950 = vpop.f32.mrf.mxu0
      %v1951 = vadd.f32 0.0, %v1950
      %v1952 = vpop.f32.mrf.mxu0
      %1953 = vmatprep.mubr.bf16.mxu0 0
      %1954 = vmatmul.mubr.bf16.gmra.mxu0 %v1845
      %v1955 = vpop.f32.mrf.mxu0
      %v1956 = vadd.f32 0.0, %v1955
      %v1957 = vpop.f32.mrf.mxu0
      %v1958 = vpop.f32.mrf.mxu0
      %v1959 = vadd.f32 0.0, %v1958
      %v1960 = vpop.f32.mrf.mxu0
      %1961 = vmatprep.mubr.bf16.mxu0 0
      %1962 = vmatmul.mubr.bf16.gmra.mxu0 %v1846
      %v1963 = vpop.f32.mrf.mxu0
      %v1964 = vadd.f32 0.0, %v1963
      %v1965 = vpop.f32.mrf.mxu0
      %v1966 = vpop.f32.mrf.mxu0
      %v1967 = vadd.f32 0.0, %v1966
      %v1968 = vpop.f32.mrf.mxu0
      %1969 = vmatprep.mubr.bf16.mxu0 0
      %1970 = vmatmul.mubr.bf16.gmra.mxu0 %v1847
      %v1971 = vpop.f32.mrf.mxu0
      %v1972 = vadd.f32 0.0, %v1971
      %v1973 = vpop.f32.mrf.mxu0
      %v1974 = vpop.f32.mrf.mxu0
      %v1975 = vadd.f32 0.0, %v1974
      %v1976 = vpop.f32.mrf.mxu0
      %1977 = vdwg.mxu0
      %v1994 = vunpack.c.l.b16 %v1820
      %v1995 = vunpack.c.l.b16 %v1821
      %v1996 = vunpack.c.l.b16 %v1822
      %v1997 = vunpack.c.l.b16 %v1823
      %v1998 = vunpack.c.l.b16 %v1824
      %v1999 = vunpack.c.l.b16 %v1825
      %v2000 = vunpack.c.l.b16 %v1826
      %v2001 = vunpack.c.l.b16 %v1827
      %v2002 = vunpack.c.l.b16 %v1828
      %v2003 = vunpack.c.l.b16 %v1829
      %v2004 = vunpack.c.l.b16 %v1830
      %v2005 = vunpack.c.l.b16 %v1831
      %v2006 = vunpack.c.l.b16 %v1832
      %v2007 = vunpack.c.l.b16 %v1833
      %v2008 = vunpack.c.l.b16 %v1834
      %v2009 = vunpack.c.l.b16 %v1835
      %v2010 = vpack.c.b16 %v1995, %v1994
      %v2011 = vpack.c.b16 %v1997, %v1996
      %v2012 = vpack.c.b16 %v1999, %v1998
      %v2013 = vpack.c.b16 %v2001, %v2000
      %v2014 = vpack.c.b16 %v2003, %v2002
      %v2015 = vpack.c.b16 %v2005, %v2004
      %v2016 = vpack.c.b16 %v2007, %v2006
      %v2017 = vpack.c.b16 %v2009, %v2008
      %2026 = vmatprep.subr.bf16.mxu0 0
      %2027 = vmatpush1.bf16.msra.mxu0 %v2017
      %2028 = vmatprep.subr.bf16.mxu0 0
      %2029 = vmatpush1.bf16.msra.mxu0 %v2016
      %2030 = vmatprep.subr.bf16.mxu0 0
      %2031 = vmatpush1.bf16.msra.mxu0 %v2015
      %2032 = vmatprep.subr.bf16.mxu0 0
      %2033 = vmatpush1.bf16.msra.mxu0 %v2014
      %2034 = vmatprep.subr.bf16.mxu0 0
      %2035 = vmatpush1.bf16.msra.mxu0 %v2013
      %2036 = vmatprep.subr.bf16.mxu0 0
      %2037 = vmatpush1.bf16.msra.mxu0 %v2012
      %2038 = vmatprep.subr.bf16.mxu0 0
      %2039 = vmatpush1.bf16.msra.mxu0 %v2011
      %2040 = vmatprep.subr.bf16.mxu0 0
      %2041 = vmatpush1.bf16.msra.mxu0 %v2010
      %2042 = vmatprep.subr.bf16.mxu0 0
      %2043 = vmatpush2.bf16.msra.mxu0 0
      %2044 = vmatprep.subr.bf16.mxu0 0
      %2045 = vmatpush2.bf16.msra.mxu0 0
      %2046 = vmatprep.subr.bf16.mxu0 0
      %2047 = vmatpush2.bf16.msra.mxu0 0
      %2048 = vmatprep.subr.bf16.mxu0 0
      %2049 = vmatpush2.bf16.msra.mxu0 0
      %2050 = vmatprep.subr.bf16.mxu0 0
      %2051 = vmatpush2.bf16.msra.mxu0 0
      %2052 = vmatprep.subr.bf16.mxu0 0
      %2053 = vmatpush2.bf16.msra.mxu0 0
      %2054 = vmatprep.subr.bf16.mxu0 0
      %2055 = vmatpush2.bf16.msra.mxu0 0
      %2056 = vmatprep.subr.bf16.mxu0 0
      %2057 = vmatpush2.bf16.msra.mxu0 0
      %2058 = vmatprep.mubr.bf16.mxu0 0
      %2059 = vmatmul.mubr.bf16.gmra.mxu0 %v1816
      %v2060 = vpop.f32.mrf.mxu0
      %v2061 = vadd.f32 %v1948, %v2060
      %v2062 = vpop.f32.mrf.mxu0
      %v2063 = vpop.f32.mrf.mxu0
      %v2064 = vadd.f32 %v1951, %v2063
      %v2065 = vpop.f32.mrf.mxu0
      %2066 = vmatprep.mubr.bf16.mxu0 0
      %2067 = vmatmul.mubr.bf16.gmra.mxu0 %v1817
      %v2068 = vpop.f32.mrf.mxu0
      %v2069 = vadd.f32 %v1956, %v2068
      %v2070 = vpop.f32.mrf.mxu0
      %v2071 = vpop.f32.mrf.mxu0
      %v2072 = vadd.f32 %v1959, %v2071
      %v2073 = vpop.f32.mrf.mxu0
      %2074 = vmatprep.mubr.bf16.mxu0 0
      %2075 = vmatmul.mubr.bf16.gmra.mxu0 %v1818
      %v2076 = vpop.f32.mrf.mxu0
      %v2077 = vadd.f32 %v1964, %v2076
      %v2078 = vpop.f32.mrf.mxu0
      %v2079 = vpop.f32.mrf.mxu0
      %v2080 = vadd.f32 %v1967, %v2079
      %v2081 = vpop.f32.mrf.mxu0
      %2082 = vmatprep.mubr.bf16.mxu0 0
      %2083 = vmatmul.mubr.bf16.gmra.mxu0 %v1819
      %v2084 = vpop.f32.mrf.mxu0
      %v2085 = vadd.f32 %v1972, %v2084
      %v2086 = vpop.f32.mrf.mxu0
      %v2087 = vpop.f32.mrf.mxu0
      %v2088 = vadd.f32 %v1975, %v2087
      %v2089 = vpop.f32.mrf.mxu0
      %2090 = vdwg.mxu0
      %v2091 = vld [vmem:[#allocation2 + $0x2] sm:$0xff]
      %v2092 = vld [vmem:[#allocation2 + $0x12] sm:$0xff]
      %v2093 = vld [vmem:[#allocation2 + $0x22] sm:$0xff]
      %v2094 = vld [vmem:[#allocation2 + $0x32] sm:$0xff]
      %v2095 = vld [vmem:[#allocation2 + $0x42] sm:$0xff]
      %v2096 = vld [vmem:[#allocation2 + $0x52] sm:$0xff]
      %v2097 = vld [vmem:[#allocation2 + $0x62] sm:$0xff]
      %v2098 = vld [vmem:[#allocation2 + $0x72] sm:$0xff]
      %v2099 = vpack.c.bf16 %v2092, %v2091
      %v2100 = vpack.c.bf16 %v2094, %v2093
      %v2101 = vpack.c.bf16 %v2096, %v2095
      %v2102 = vpack.c.bf16 %v2098, %v2097
      %s2103 = scalar_lea.vmem %s6, 128
      %v2104 = vld [vmem:[%s2103] sm:$0xf]
      %v2105 = vld [vmem:[%s2103 + $0x4] sm:$0xf]
      %v2106 = vld [vmem:[%s2103 + $0x8] sm:$0xf]
      %v2107 = vld [vmem:[%s2103 + $0xc] sm:$0xf]
      %v2108 = vld [vmem:[%s2103 + $0x10] sm:$0xf]
      %v2109 = vld [vmem:[%s2103 + $0x14] sm:$0xf]
      %v2110 = vld [vmem:[%s2103 + $0x18] sm:$0xf]
      %v2111 = vld [vmem:[%s2103 + $0x1c] sm:$0xf]
      %v2112 = vld [vmem:[%s2103 + $0x20] sm:$0xf]
      %v2113 = vld [vmem:[%s2103 + $0x24] sm:$0xf]
      %v2114 = vld [vmem:[%s2103 + $0x28] sm:$0xf]
      %v2115 = vld [vmem:[%s2103 + $0x2c] sm:$0xf]
      %v2116 = vld [vmem:[%s2103 + $0x30] sm:$0xf]
      %v2117 = vld [vmem:[%s2103 + $0x34] sm:$0xf]
      %v2118 = vld [vmem:[%s2103 + $0x38] sm:$0xf]
      %v2119 = vld [vmem:[%s2103 + $0x3c] sm:$0xf]
      %v2136 = vunpack.c.l.b16 %v2104
      %v2137 = vunpack.c.l.b16 %v2105
      %v2138 = vunpack.c.l.b16 %v2106
      %v2139 = vunpack.c.l.b16 %v2107
      %v2140 = vunpack.c.l.b16 %v2108
      %v2141 = vunpack.c.l.b16 %v2109
      %v2142 = vunpack.c.l.b16 %v2110
      %v2143 = vunpack.c.l.b16 %v2111
      %v2144 = vunpack.c.l.b16 %v2112
      %v2145 = vunpack.c.l.b16 %v2113
      %v2146 = vunpack.c.l.b16 %v2114
      %v2147 = vunpack.c.l.b16 %v2115
      %v2148 = vunpack.c.l.b16 %v2116
      %v2149 = vunpack.c.l.b16 %v2117
      %v2150 = vunpack.c.l.b16 %v2118
      %v2151 = vunpack.c.l.b16 %v2119
      %v2152 = vpack.c.b16 %v2137, %v2136
      %v2153 = vpack.c.b16 %v2139, %v2138
      %v2154 = vpack.c.b16 %v2141, %v2140
      %v2155 = vpack.c.b16 %v2143, %v2142
      %v2156 = vpack.c.b16 %v2145, %v2144
      %v2157 = vpack.c.b16 %v2147, %v2146
      %v2158 = vpack.c.b16 %v2149, %v2148
      %v2159 = vpack.c.b16 %v2151, %v2150
      %2168 = vmatprep.subr.bf16.mxu0 0
      %2169 = vmatpush1.bf16.msra.mxu0 %v2159
      %2170 = vmatprep.subr.bf16.mxu0 0
      %2171 = vmatpush1.bf16.msra.mxu0 %v2158
      %2172 = vmatprep.subr.bf16.mxu0 0
      %2173 = vmatpush1.bf16.msra.mxu0 %v2157
      %2174 = vmatprep.subr.bf16.mxu0 0
      %2175 = vmatpush1.bf16.msra.mxu0 %v2156
      %2176 = vmatprep.subr.bf16.mxu0 0
      %2177 = vmatpush1.bf16.msra.mxu0 %v2155
      %2178 = vmatprep.subr.bf16.mxu0 0
      %2179 = vmatpush1.bf16.msra.mxu0 %v2154
      %2180 = vmatprep.subr.bf16.mxu0 0
      %2181 = vmatpush1.bf16.msra.mxu0 %v2153
      %2182 = vmatprep.subr.bf16.mxu0 0
      %2183 = vmatpush1.bf16.msra.mxu0 %v2152
      %2184 = vmatprep.subr.bf16.mxu0 0
      %2185 = vmatpush2.bf16.msra.mxu0 0
      %2186 = vmatprep.subr.bf16.mxu0 0
      %2187 = vmatpush2.bf16.msra.mxu0 0
      %2188 = vmatprep.subr.bf16.mxu0 0
      %2189 = vmatpush2.bf16.msra.mxu0 0
      %2190 = vmatprep.subr.bf16.mxu0 0
      %2191 = vmatpush2.bf16.msra.mxu0 0
      %2192 = vmatprep.subr.bf16.mxu0 0
      %2193 = vmatpush2.bf16.msra.mxu0 0
      %2194 = vmatprep.subr.bf16.mxu0 0
      %2195 = vmatpush2.bf16.msra.mxu0 0
      %2196 = vmatprep.subr.bf16.mxu0 0
      %2197 = vmatpush2.bf16.msra.mxu0 0
      %2198 = vmatprep.subr.bf16.mxu0 0
      %2199 = vmatpush2.bf16.msra.mxu0 0
      %2200 = vmatprep.mubr.bf16.mxu0 0
      %2201 = vmatmul.mubr.bf16.gmra.mxu0 %v2099
      %v2202 = vpop.f32.mrf.mxu0
      %v2203 = vadd.f32 0.0, %v2202
      %v2204 = vpop.f32.mrf.mxu0
      %v2205 = vpop.f32.mrf.mxu0
      %v2206 = vadd.f32 0.0, %v2205
      %v2207 = vpop.f32.mrf.mxu0
      %2208 = vmatprep.mubr.bf16.mxu0 0
      %2209 = vmatmul.mubr.bf16.gmra.mxu0 %v2100
      %v2210 = vpop.f32.mrf.mxu0
      %v2211 = vadd.f32 0.0, %v2210
      %v2212 = vpop.f32.mrf.mxu0
      %v2213 = vpop.f32.mrf.mxu0
      %v2214 = vadd.f32 0.0, %v2213
      %v2215 = vpop.f32.mrf.mxu0
      %2216 = vmatprep.mubr.bf16.mxu0 0
      %2217 = vmatmul.mubr.bf16.gmra.mxu0 %v2101
      %v2218 = vpop.f32.mrf.mxu0
      %v2219 = vadd.f32 0.0, %v2218
      %v2220 = vpop.f32.mrf.mxu0
      %v2221 = vpop.f32.mrf.mxu0
      %v2222 = vadd.f32 0.0, %v2221
      %v2223 = vpop.f32.mrf.mxu0
      %2224 = vmatprep.mubr.bf16.mxu0 0
      %2225 = vmatmul.mubr.bf16.gmra.mxu0 %v2102
      %v2226 = vpop.f32.mrf.mxu0
      %v2227 = vadd.f32 0.0, %v2226
      %v2228 = vpop.f32.mrf.mxu0
      %v2229 = vpop.f32.mrf.mxu0
      %v2230 = vadd.f32 0.0, %v2229
      %v2231 = vpop.f32.mrf.mxu0
      %2232 = vdwg.mxu0
      %v2233 = vadd.f32 %v2061, %v2203
      %v2234 = vadd.f32 %v2064, %v2206
      %v2235 = vadd.f32 %v2069, %v2211
      %v2236 = vadd.f32 %v2072, %v2214
      %v2237 = vadd.f32 %v2077, %v2219
      %v2238 = vadd.f32 %v2080, %v2222
      %v2239 = vadd.f32 %v2085, %v2227
      %v2240 = vadd.f32 %v2088, %v2230
      %v2241 = vld [vmem:[%s1799] sm:$0xff]
      %v2242 = vld [vmem:[%s1799 + $0x10] sm:$0xff]
      %v2243 = vld [vmem:[%s1799 + $0x20] sm:$0xff]
      %v2244 = vld [vmem:[%s1799 + $0x30] sm:$0xff]
      %v2245 = vld [vmem:[%s1799 + $0x40] sm:$0xff]
      %v2246 = vld [vmem:[%s1799 + $0x50] sm:$0xff]
      %v2247 = vld [vmem:[%s1799 + $0x60] sm:$0xff]
      %v2248 = vld [vmem:[%s1799 + $0x70] sm:$0xff]
      %v2249 = vpack.c.bf16 %v2242, %v2241
      %v2250 = vpack.c.bf16 %v2244, %v2243
      %v2251 = vpack.c.bf16 %v2246, %v2245
      %v2252 = vpack.c.bf16 %v2248, %v2247
      %s2253 = scalar_lea.vmem %s6, 192
      %v2254 = vld [vmem:[%s2253] sm:$0xf]
      %v2255 = vld [vmem:[%s2253 + $0x4] sm:$0xf]
      %v2256 = vld [vmem:[%s2253 + $0x8] sm:$0xf]
      %v2257 = vld [vmem:[%s2253 + $0xc] sm:$0xf]
      %v2258 = vld [vmem:[%s2253 + $0x10] sm:$0xf]
      %v2259 = vld [vmem:[%s2253 + $0x14] sm:$0xf]
      %v2260 = vld [vmem:[%s2253 + $0x18] sm:$0xf]
      %v2261 = vld [vmem:[%s2253 + $0x1c] sm:$0xf]
      %v2262 = vld [vmem:[%s2253 + $0x20] sm:$0xf]
      %v2263 = vld [vmem:[%s2253 + $0x24] sm:$0xf]
      %v2264 = vld [vmem:[%s2253 + $0x28] sm:$0xf]
      %v2265 = vld [vmem:[%s2253 + $0x2c] sm:$0xf]
      %v2266 = vld [vmem:[%s2253 + $0x30] sm:$0xf]
      %v2267 = vld [vmem:[%s2253 + $0x34] sm:$0xf]
      %v2268 = vld [vmem:[%s2253 + $0x38] sm:$0xf]
      %v2269 = vld [vmem:[%s2253 + $0x3c] sm:$0xf]
      %v2286 = vunpack.c.l.b16 %v2254
      %v2287 = vunpack.c.l.b16 %v2255
      %v2288 = vunpack.c.l.b16 %v2256
      %v2289 = vunpack.c.l.b16 %v2257
      %v2290 = vunpack.c.l.b16 %v2258
      %v2291 = vunpack.c.l.b16 %v2259
      %v2292 = vunpack.c.l.b16 %v2260
      %v2293 = vunpack.c.l.b16 %v2261
      %v2294 = vunpack.c.l.b16 %v2262
      %v2295 = vunpack.c.l.b16 %v2263
      %v2296 = vunpack.c.l.b16 %v2264
      %v2297 = vunpack.c.l.b16 %v2265
      %v2298 = vunpack.c.l.b16 %v2266
      %v2299 = vunpack.c.l.b16 %v2267
      %v2300 = vunpack.c.l.b16 %v2268
      %v2301 = vunpack.c.l.b16 %v2269
      %v2302 = vpack.c.b16 %v2287, %v2286
      %v2303 = vpack.c.b16 %v2289, %v2288
      %v2304 = vpack.c.b16 %v2291, %v2290
      %v2305 = vpack.c.b16 %v2293, %v2292
      %v2306 = vpack.c.b16 %v2295, %v2294
      %v2307 = vpack.c.b16 %v2297, %v2296
      %v2308 = vpack.c.b16 %v2299, %v2298
      %v2309 = vpack.c.b16 %v2301, %v2300
      %2318 = vmatprep.subr.bf16.mxu0 0
      %2319 = vmatpush1.bf16.msra.mxu0 %v2309
      %2320 = vmatprep.subr.bf16.mxu0 0
      %2321 = vmatpush1.bf16.msra.mxu0 %v2308
      %2322 = vmatprep.subr.bf16.mxu0 0
      %2323 = vmatpush1.bf16.msra.mxu0 %v2307
      %2324 = vmatprep.subr.bf16.mxu0 0
      %2325 = vmatpush1.bf16.msra.mxu0 %v2306
      %2326 = vmatprep.subr.bf16.mxu0 0
      %2327 = vmatpush1.bf16.msra.mxu0 %v2305
      %2328 = vmatprep.subr.bf16.mxu0 0
      %2329 = vmatpush1.bf16.msra.mxu0 %v2304
      %2330 = vmatprep.subr.bf16.mxu0 0
      %2331 = vmatpush1.bf16.msra.mxu0 %v2303
      %2332 = vmatprep.subr.bf16.mxu0 0
      %2333 = vmatpush1.bf16.msra.mxu0 %v2302
      %2334 = vmatprep.subr.bf16.mxu0 0
      %2335 = vmatpush2.bf16.msra.mxu0 0
      %2336 = vmatprep.subr.bf16.mxu0 0
      %2337 = vmatpush2.bf16.msra.mxu0 0
      %2338 = vmatprep.subr.bf16.mxu0 0
      %2339 = vmatpush2.bf16.msra.mxu0 0
      %2340 = vmatprep.subr.bf16.mxu0 0
      %2341 = vmatpush2.bf16.msra.mxu0 0
      %2342 = vmatprep.subr.bf16.mxu0 0
      %2343 = vmatpush2.bf16.msra.mxu0 0
      %2344 = vmatprep.subr.bf16.mxu0 0
      %2345 = vmatpush2.bf16.msra.mxu0 0
      %2346 = vmatprep.subr.bf16.mxu0 0
      %2347 = vmatpush2.bf16.msra.mxu0 0
      %2348 = vmatprep.subr.bf16.mxu0 0
      %2349 = vmatpush2.bf16.msra.mxu0 0
      %2350 = vmatprep.mubr.bf16.mxu0 0
      %2351 = vmatmul.mubr.bf16.gmra.mxu0 %v2249
      %v2352 = vpop.f32.mrf.mxu0
      %v2353 = vadd.f32 0.0, %v2352
      %v2354 = vpop.f32.mrf.mxu0
      %v2355 = vpop.f32.mrf.mxu0
      %v2356 = vadd.f32 0.0, %v2355
      %v2357 = vpop.f32.mrf.mxu0
      %2358 = vmatprep.mubr.bf16.mxu0 0
      %2359 = vmatmul.mubr.bf16.gmra.mxu0 %v2250
      %v2360 = vpop.f32.mrf.mxu0
      %v2361 = vadd.f32 0.0, %v2360
      %v2362 = vpop.f32.mrf.mxu0
      %v2363 = vpop.f32.mrf.mxu0
      %v2364 = vadd.f32 0.0, %v2363
      %v2365 = vpop.f32.mrf.mxu0
      %2366 = vmatprep.mubr.bf16.mxu0 0
      %2367 = vmatmul.mubr.bf16.gmra.mxu0 %v2251
      %v2368 = vpop.f32.mrf.mxu0
      %v2369 = vadd.f32 0.0, %v2368
      %v2370 = vpop.f32.mrf.mxu0
      %v2371 = vpop.f32.mrf.mxu0
      %v2372 = vadd.f32 0.0, %v2371
      %v2373 = vpop.f32.mrf.mxu0
      %2374 = vmatprep.mubr.bf16.mxu0 0
      %2375 = vmatmul.mubr.bf16.gmra.mxu0 %v2252
      %v2376 = vpop.f32.mrf.mxu0
      %v2377 = vadd.f32 0.0, %v2376
      %v2378 = vpop.f32.mrf.mxu0
      %v2379 = vpop.f32.mrf.mxu0
      %v2380 = vadd.f32 0.0, %v2379
      %v2381 = vpop.f32.mrf.mxu0
      %2382 = vdwg.mxu0
      %v2383 = vadd.f32 %v2233, %v2353
      %v2384 = vadd.f32 %v2234, %v2356
      %v2385 = vadd.f32 %v2235, %v2361
      %v2386 = vadd.f32 %v2236, %v2364
      %v2387 = vadd.f32 %v2237, %v2369
      %v2388 = vadd.f32 %v2238, %v2372
      %v2389 = vadd.f32 %v2239, %v2377
      %v2390 = vadd.f32 %v2240, %v2380
      %v2391 = vld [vmem:[%s1799 + $0x1] sm:$0xff]
      %v2392 = vld [vmem:[%s1799 + $0x11] sm:$0xff]
      %v2393 = vld [vmem:[%s1799 + $0x21] sm:$0xff]
      %v2394 = vld [vmem:[%s1799 + $0x31] sm:$0xff]
      %v2395 = vld [vmem:[%s1799 + $0x41] sm:$0xff]
      %v2396 = vld [vmem:[%s1799 + $0x51] sm:$0xff]
      %v2397 = vld [vmem:[%s1799 + $0x61] sm:$0xff]
      %v2398 = vld [vmem:[%s1799 + $0x71] sm:$0xff]
      %v2399 = vpack.c.bf16 %v2392, %v2391
      %v2400 = vpack.c.bf16 %v2394, %v2393
      %v2401 = vpack.c.bf16 %v2396, %v2395
      %v2402 = vpack.c.bf16 %v2398, %v2397
      %s2403 = scalar_lea.vmem %s6, 256
      %v2404 = vld [vmem:[%s2403] sm:$0xf]
      %v2405 = vld [vmem:[%s2403 + $0x4] sm:$0xf]
      %v2406 = vld [vmem:[%s2403 + $0x8] sm:$0xf]
      %v2407 = vld [vmem:[%s2403 + $0xc] sm:$0xf]
      %v2408 = vld [vmem:[%s2403 + $0x10] sm:$0xf]
      %v2409 = vld [vmem:[%s2403 + $0x14] sm:$0xf]
      %v2410 = vld [vmem:[%s2403 + $0x18] sm:$0xf]
      %v2411 = vld [vmem:[%s2403 + $0x1c] sm:$0xf]
      %v2412 = vld [vmem:[%s2403 + $0x20] sm:$0xf]
      %v2413 = vld [vmem:[%s2403 + $0x24] sm:$0xf]
      %v2414 = vld [vmem:[%s2403 + $0x28] sm:$0xf]
      %v2415 = vld [vmem:[%s2403 + $0x2c] sm:$0xf]
      %v2416 = vld [vmem:[%s2403 + $0x30] sm:$0xf]
      %v2417 = vld [vmem:[%s2403 + $0x34] sm:$0xf]
      %v2418 = vld [vmem:[%s2403 + $0x38] sm:$0xf]
      %v2419 = vld [vmem:[%s2403 + $0x3c] sm:$0xf]
      %v2436 = vunpack.c.l.b16 %v2404
      %v2437 = vunpack.c.l.b16 %v2405
      %v2438 = vunpack.c.l.b16 %v2406
      %v2439 = vunpack.c.l.b16 %v2407
      %v2440 = vunpack.c.l.b16 %v2408
      %v2441 = vunpack.c.l.b16 %v2409
      %v2442 = vunpack.c.l.b16 %v2410
      %v2443 = vunpack.c.l.b16 %v2411
      %v2444 = vunpack.c.l.b16 %v2412
      %v2445 = vunpack.c.l.b16 %v2413
      %v2446 = vunpack.c.l.b16 %v2414
      %v2447 = vunpack.c.l.b16 %v2415
      %v2448 = vunpack.c.l.b16 %v2416
      %v2449 = vunpack.c.l.b16 %v2417
      %v2450 = vunpack.c.l.b16 %v2418
      %v2451 = vunpack.c.l.b16 %v2419
      %v2452 = vpack.c.b16 %v2437, %v2436
      %v2453 = vpack.c.b16 %v2439, %v2438
      %v2454 = vpack.c.b16 %v2441, %v2440
      %v2455 = vpack.c.b16 %v2443, %v2442
      %v2456 = vpack.c.b16 %v2445, %v2444
      %v2457 = vpack.c.b16 %v2447, %v2446
      %v2458 = vpack.c.b16 %v2449, %v2448
      %v2459 = vpack.c.b16 %v2451, %v2450
      %2468 = vmatprep.subr.bf16.mxu0 0
      %2469 = vmatpush1.bf16.msra.mxu0 %v2459
      %2470 = vmatprep.subr.bf16.mxu0 0
      %2471 = vmatpush1.bf16.msra.mxu0 %v2458
      %2472 = vmatprep.subr.bf16.mxu0 0
      %2473 = vmatpush1.bf16.msra.mxu0 %v2457
      %2474 = vmatprep.subr.bf16.mxu0 0
      %2475 = vmatpush1.bf16.msra.mxu0 %v2456
      %2476 = vmatprep.subr.bf16.mxu0 0
      %2477 = vmatpush1.bf16.msra.mxu0 %v2455
      %2478 = vmatprep.subr.bf16.mxu0 0
      %2479 = vmatpush1.bf16.msra.mxu0 %v2454
      %2480 = vmatprep.subr.bf16.mxu0 0
      %2481 = vmatpush1.bf16.msra.mxu0 %v2453
      %2482 = vmatprep.subr.bf16.mxu0 0
      %2483 = vmatpush1.bf16.msra.mxu0 %v2452
      %2484 = vmatprep.subr.bf16.mxu0 0
      %2485 = vmatpush2.bf16.msra.mxu0 0
      %2486 = vmatprep.subr.bf16.mxu0 0
      %2487 = vmatpush2.bf16.msra.mxu0 0
      %2488 = vmatprep.subr.bf16.mxu0 0
      %2489 = vmatpush2.bf16.msra.mxu0 0
      %2490 = vmatprep.subr.bf16.mxu0 0
      %2491 = vmatpush2.bf16.msra.mxu0 0
      %2492 = vmatprep.subr.bf16.mxu0 0
      %2493 = vmatpush2.bf16.msra.mxu0 0
      %2494 = vmatprep.subr.bf16.mxu0 0
      %2495 = vmatpush2.bf16.msra.mxu0 0
      %2496 = vmatprep.subr.bf16.mxu0 0
      %2497 = vmatpush2.bf16.msra.mxu0 0
      %2498 = vmatprep.subr.bf16.mxu0 0
      %2499 = vmatpush2.bf16.msra.mxu0 0
      %2500 = vmatprep.mubr.bf16.mxu0 0
      %2501 = vmatmul.mubr.bf16.gmra.mxu0 %v2399
      %v2502 = vpop.f32.mrf.mxu0
      %v2503 = vadd.f32 0.0, %v2502
      %v2504 = vpop.f32.mrf.mxu0
      %v2505 = vpop.f32.mrf.mxu0
      %v2506 = vadd.f32 0.0, %v2505
      %v2507 = vpop.f32.mrf.mxu0
      %2508 = vmatprep.mubr.bf16.mxu0 0
      %2509 = vmatmul.mubr.bf16.gmra.mxu0 %v2400
      %v2510 = vpop.f32.mrf.mxu0
      %v2511 = vadd.f32 0.0, %v2510
      %v2512 = vpop.f32.mrf.mxu0
      %v2513 = vpop.f32.mrf.mxu0
      %v2514 = vadd.f32 0.0, %v2513
      %v2515 = vpop.f32.mrf.mxu0
      %2516 = vmatprep.mubr.bf16.mxu0 0
      %2517 = vmatmul.mubr.bf16.gmra.mxu0 %v2401
      %v2518 = vpop.f32.mrf.mxu0
      %v2519 = vadd.f32 0.0, %v2518
      %v2520 = vpop.f32.mrf.mxu0
      %v2521 = vpop.f32.mrf.mxu0
      %v2522 = vadd.f32 0.0, %v2521
      %v2523 = vpop.f32.mrf.mxu0
      %2524 = vmatprep.mubr.bf16.mxu0 0
      %2525 = vmatmul.mubr.bf16.gmra.mxu0 %v2402
      %v2526 = vpop.f32.mrf.mxu0
      %v2527 = vadd.f32 0.0, %v2526
      %v2528 = vpop.f32.mrf.mxu0
      %v2529 = vpop.f32.mrf.mxu0
      %v2530 = vadd.f32 0.0, %v2529
      %v2531 = vpop.f32.mrf.mxu0
      %2532 = vdwg.mxu0
      %v2533 = vadd.f32 %v2383, %v2503
      %v2534 = vadd.f32 %v2384, %v2506
      %v2535 = vadd.f32 %v2385, %v2511
      %v2536 = vadd.f32 %v2386, %v2514
      %v2537 = vadd.f32 %v2387, %v2519
      %v2538 = vadd.f32 %v2388, %v2522
      %v2539 = vadd.f32 %v2389, %v2527
      %v2540 = vadd.f32 %v2390, %v2530
      %v2541 = vld [vmem:[%s1799 + $0x2] sm:$0xff]
      %v2542 = vld [vmem:[%s1799 + $0x12] sm:$0xff]
      %v2543 = vld [vmem:[%s1799 + $0x22] sm:$0xff]
      %v2544 = vld [vmem:[%s1799 + $0x32] sm:$0xff]
      %v2545 = vld [vmem:[%s1799 + $0x42] sm:$0xff]
      %v2546 = vld [vmem:[%s1799 + $0x52] sm:$0xff]
      %v2547 = vld [vmem:[%s1799 + $0x62] sm:$0xff]
      %v2548 = vld [vmem:[%s1799 + $0x72] sm:$0xff]
      %v2549 = vpack.c.bf16 %v2542, %v2541
      %v2550 = vpack.c.bf16 %v2544, %v2543
      %v2551 = vpack.c.bf16 %v2546, %v2545
      %v2552 = vpack.c.bf16 %v2548, %v2547
      %s2553 = scalar_lea.vmem %s6, 320
      %v2554 = vld [vmem:[%s2553] sm:$0xf]
      %v2555 = vld [vmem:[%s2553 + $0x4] sm:$0xf]
      %v2556 = vld [vmem:[%s2553 + $0x8] sm:$0xf]
      %v2557 = vld [vmem:[%s2553 + $0xc] sm:$0xf]
      %v2558 = vld [vmem:[%s2553 + $0x10] sm:$0xf]
      %v2559 = vld [vmem:[%s2553 + $0x14] sm:$0xf]
      %v2560 = vld [vmem:[%s2553 + $0x18] sm:$0xf]
      %v2561 = vld [vmem:[%s2553 + $0x1c] sm:$0xf]
      %v2562 = vld [vmem:[%s2553 + $0x20] sm:$0xf]
      %v2563 = vld [vmem:[%s2553 + $0x24] sm:$0xf]
      %v2564 = vld [vmem:[%s2553 + $0x28] sm:$0xf]
      %v2565 = vld [vmem:[%s2553 + $0x2c] sm:$0xf]
      %v2566 = vld [vmem:[%s2553 + $0x30] sm:$0xf]
      %v2567 = vld [vmem:[%s2553 + $0x34] sm:$0xf]
      %v2568 = vld [vmem:[%s2553 + $0x38] sm:$0xf]
      %v2569 = vld [vmem:[%s2553 + $0x3c] sm:$0xf]
      %v2586 = vunpack.c.l.b16 %v2554
      %v2587 = vunpack.c.l.b16 %v2555
      %v2588 = vunpack.c.l.b16 %v2556
      %v2589 = vunpack.c.l.b16 %v2557
      %v2590 = vunpack.c.l.b16 %v2558
      %v2591 = vunpack.c.l.b16 %v2559
      %v2592 = vunpack.c.l.b16 %v2560
      %v2593 = vunpack.c.l.b16 %v2561
      %v2594 = vunpack.c.l.b16 %v2562
      %v2595 = vunpack.c.l.b16 %v2563
      %v2596 = vunpack.c.l.b16 %v2564
      %v2597 = vunpack.c.l.b16 %v2565
      %v2598 = vunpack.c.l.b16 %v2566
      %v2599 = vunpack.c.l.b16 %v2567
      %v2600 = vunpack.c.l.b16 %v2568
      %v2601 = vunpack.c.l.b16 %v2569
      %v2602 = vpack.c.b16 %v2587, %v2586
      %v2603 = vpack.c.b16 %v2589, %v2588
      %v2604 = vpack.c.b16 %v2591, %v2590
      %v2605 = vpack.c.b16 %v2593, %v2592
      %v2606 = vpack.c.b16 %v2595, %v2594
      %v2607 = vpack.c.b16 %v2597, %v2596
      %v2608 = vpack.c.b16 %v2599, %v2598
      %v2609 = vpack.c.b16 %v2601, %v2600
      %2618 = vmatprep.subr.bf16.mxu0 0
      %2619 = vmatpush1.bf16.msra.mxu0 %v2609
      %2620 = vmatprep.subr.bf16.mxu0 0
      %2621 = vmatpush1.bf16.msra.mxu0 %v2608
      %2622 = vmatprep.subr.bf16.mxu0 0
      %2623 = vmatpush1.bf16.msra.mxu0 %v2607
      %2624 = vmatprep.subr.bf16.mxu0 0
      %2625 = vmatpush1.bf16.msra.mxu0 %v2606
      %2626 = vmatprep.subr.bf16.mxu0 0
      %2627 = vmatpush1.bf16.msra.mxu0 %v2605
      %2628 = vmatprep.subr.bf16.mxu0 0
      %2629 = vmatpush1.bf16.msra.mxu0 %v2604
      %2630 = vmatprep.subr.bf16.mxu0 0
      %2631 = vmatpush1.bf16.msra.mxu0 %v2603
      %2632 = vmatprep.subr.bf16.mxu0 0
      %2633 = vmatpush1.bf16.msra.mxu0 %v2602
      %2634 = vmatprep.subr.bf16.mxu0 0
      %2635 = vmatpush2.bf16.msra.mxu0 0
      %2636 = vmatprep.subr.bf16.mxu0 0
      %2637 = vmatpush2.bf16.msra.mxu0 0
      %2638 = vmatprep.subr.bf16.mxu0 0
      %2639 = vmatpush2.bf16.msra.mxu0 0
      %2640 = vmatprep.subr.bf16.mxu0 0
      %2641 = vmatpush2.bf16.msra.mxu0 0
      %2642 = vmatprep.subr.bf16.mxu0 0
      %2643 = vmatpush2.bf16.msra.mxu0 0
      %2644 = vmatprep.subr.bf16.mxu0 0
      %2645 = vmatpush2.bf16.msra.mxu0 0
      %2646 = vmatprep.subr.bf16.mxu0 0
      %2647 = vmatpush2.bf16.msra.mxu0 0
      %2648 = vmatprep.subr.bf16.mxu0 0
      %2649 = vmatpush2.bf16.msra.mxu0 0
      %2650 = vmatprep.mubr.bf16.mxu0 0
      %2651 = vmatmul.mubr.bf16.gmra.mxu0 %v2549
      %v2652 = vpop.f32.mrf.mxu0
      %v2653 = vadd.f32 0.0, %v2652
      %v2654 = vpop.f32.mrf.mxu0
      %v2655 = vpop.f32.mrf.mxu0
      %v2656 = vadd.f32 0.0, %v2655
      %v2657 = vpop.f32.mrf.mxu0
      %2658 = vmatprep.mubr.bf16.mxu0 0
      %2659 = vmatmul.mubr.bf16.gmra.mxu0 %v2550
      %v2660 = vpop.f32.mrf.mxu0
      %v2661 = vadd.f32 0.0, %v2660
      %v2662 = vpop.f32.mrf.mxu0
      %v2663 = vpop.f32.mrf.mxu0
      %v2664 = vadd.f32 0.0, %v2663
      %v2665 = vpop.f32.mrf.mxu0
      %2666 = vmatprep.mubr.bf16.mxu0 0
      %2667 = vmatmul.mubr.bf16.gmra.mxu0 %v2551
      %v2668 = vpop.f32.mrf.mxu0
      %v2669 = vadd.f32 0.0, %v2668
      %v2670 = vpop.f32.mrf.mxu0
      %v2671 = vpop.f32.mrf.mxu0
      %v2672 = vadd.f32 0.0, %v2671
      %v2673 = vpop.f32.mrf.mxu0
      %2674 = vmatprep.mubr.bf16.mxu0 0
      %2675 = vmatmul.mubr.bf16.gmra.mxu0 %v2552
      %v2676 = vpop.f32.mrf.mxu0
      %v2677 = vadd.f32 0.0, %v2676
      %v2678 = vpop.f32.mrf.mxu0
      %v2679 = vpop.f32.mrf.mxu0
      %v2680 = vadd.f32 0.0, %v2679
      %v2681 = vpop.f32.mrf.mxu0
      %2682 = vdwg.mxu0
      %v2683 = vadd.f32 %v2533, %v2653
      %v2684 = vadd.f32 %v2534, %v2656
      %v2685 = vadd.f32 %v2535, %v2661
      %v2686 = vadd.f32 %v2536, %v2664
      %v2687 = vadd.f32 %v2537, %v2669
      %v2688 = vadd.f32 %v2538, %v2672
      %v2689 = vadd.f32 %v2539, %v2677
      %v2690 = vadd.f32 %v2540, %v2680
      %s2691 = scalar_lea.vmem [#allocation2], 32
      %v2692 = vld [vmem:[%s2691] sm:$0xff]
      %v2693 = vld [vmem:[%s2691 + $0x10] sm:$0xff]
      %v2694 = vld [vmem:[%s2691 + $0x20] sm:$0xff]
      %v2695 = vld [vmem:[%s2691 + $0x30] sm:$0xff]
      %v2696 = vld [vmem:[%s2691 + $0x40] sm:$0xff]
      %v2697 = vld [vmem:[%s2691 + $0x50] sm:$0xff]
      %v2698 = vld [vmem:[%s2691 + $0x60] sm:$0xff]
      %v2699 = vld [vmem:[%s2691 + $0x70] sm:$0xff]
      %v2700 = vpack.c.bf16 %v2693, %v2692
      %v2701 = vpack.c.bf16 %v2695, %v2694
      %v2702 = vpack.c.bf16 %v2697, %v2696
      %v2703 = vpack.c.bf16 %v2699, %v2698
      %s2704 = scalar_lea.vmem %s6, 384
      %v2705 = vld [vmem:[%s2704] sm:$0xf]
      %v2706 = vld [vmem:[%s2704 + $0x4] sm:$0xf]
      %v2707 = vld [vmem:[%s2704 + $0x8] sm:$0xf]
      %v2708 = vld [vmem:[%s2704 + $0xc] sm:$0xf]
      %v2709 = vld [vmem:[%s2704 + $0x10] sm:$0xf]
      %v2710 = vld [vmem:[%s2704 + $0x14] sm:$0xf]
      %v2711 = vld [vmem:[%s2704 + $0x18] sm:$0xf]
      %v2712 = vld [vmem:[%s2704 + $0x1c] sm:$0xf]
      %v2713 = vld [vmem:[%s2704 + $0x20] sm:$0xf]
      %v2714 = vld [vmem:[%s2704 + $0x24] sm:$0xf]
      %v2715 = vld [vmem:[%s2704 + $0x28] sm:$0xf]
      %v2716 = vld [vmem:[%s2704 + $0x2c] sm:$0xf]
      %v2717 = vld [vmem:[%s2704 + $0x30] sm:$0xf]
      %v2718 = vld [vmem:[%s2704 + $0x34] sm:$0xf]
      %v2719 = vld [vmem:[%s2704 + $0x38] sm:$0xf]
      %v2720 = vld [vmem:[%s2704 + $0x3c] sm:$0xf]
      %v2737 = vunpack.c.l.b16 %v2705
      %v2738 = vunpack.c.l.b16 %v2706
      %v2739 = vunpack.c.l.b16 %v2707
      %v2740 = vunpack.c.l.b16 %v2708
      %v2741 = vunpack.c.l.b16 %v2709
      %v2742 = vunpack.c.l.b16 %v2710
      %v2743 = vunpack.c.l.b16 %v2711
      %v2744 = vunpack.c.l.b16 %v2712
      %v2745 = vunpack.c.l.b16 %v2713
      %v2746 = vunpack.c.l.b16 %v2714
      %v2747 = vunpack.c.l.b16 %v2715
      %v2748 = vunpack.c.l.b16 %v2716
      %v2749 = vunpack.c.l.b16 %v2717
      %v2750 = vunpack.c.l.b16 %v2718
      %v2751 = vunpack.c.l.b16 %v2719
      %v2752 = vunpack.c.l.b16 %v2720
      %v2753 = vpack.c.b16 %v2738, %v2737
      %v2754 = vpack.c.b16 %v2740, %v2739
      %v2755 = vpack.c.b16 %v2742, %v2741
      %v2756 = vpack.c.b16 %v2744, %v2743
      %v2757 = vpack.c.b16 %v2746, %v2745
      %v2758 = vpack.c.b16 %v2748, %v2747
      %v2759 = vpack.c.b16 %v2750, %v2749
      %v2760 = vpack.c.b16 %v2752, %v2751
      %2769 = vmatprep.subr.bf16.mxu0 0
      %2770 = vmatpush1.bf16.msra.mxu0 %v2760
      %2771 = vmatprep.subr.bf16.mxu0 0
      %2772 = vmatpush1.bf16.msra.mxu0 %v2759
      %2773 = vmatprep.subr.bf16.mxu0 0
      %2774 = vmatpush1.bf16.msra.mxu0 %v2758
      %2775 = vmatprep.subr.bf16.mxu0 0
      %2776 = vmatpush1.bf16.msra.mxu0 %v2757
      %2777 = vmatprep.subr.bf16.mxu0 0
      %2778 = vmatpush1.bf16.msra.mxu0 %v2756
      %2779 = vmatprep.subr.bf16.mxu0 0
      %2780 = vmatpush1.bf16.msra.mxu0 %v2755
      %2781 = vmatprep.subr.bf16.mxu0 0
      %2782 = vmatpush1.bf16.msra.mxu0 %v2754
      %2783 = vmatprep.subr.bf16.mxu0 0
      %2784 = vmatpush1.bf16.msra.mxu0 %v2753
      %2785 = vmatprep.subr.bf16.mxu0 0
      %2786 = vmatpush2.bf16.msra.mxu0 0
      %2787 = vmatprep.subr.bf16.mxu0 0
      %2788 = vmatpush2.bf16.msra.mxu0 0
      %2789 = vmatprep.subr.bf16.mxu0 0
      %2790 = vmatpush2.bf16.msra.mxu0 0
      %2791 = vmatprep.subr.bf16.mxu0 0
      %2792 = vmatpush2.bf16.msra.mxu0 0
      %2793 = vmatprep.subr.bf16.mxu0 0
      %2794 = vmatpush2.bf16.msra.mxu0 0
      %2795 = vmatprep.subr.bf16.mxu0 0
      %2796 = vmatpush2.bf16.msra.mxu0 0
      %2797 = vmatprep.subr.bf16.mxu0 0
      %2798 = vmatpush2.bf16.msra.mxu0 0
      %2799 = vmatprep.subr.bf16.mxu0 0
      %2800 = vmatpush2.bf16.msra.mxu0 0
      %2801 = vmatprep.mubr.bf16.mxu0 0
      %2802 = vmatmul.mubr.bf16.gmra.mxu0 %v2700
      %v2803 = vpop.f32.mrf.mxu0
      %v2804 = vadd.f32 0.0, %v2803
      %v2805 = vpop.f32.mrf.mxu0
      %v2806 = vpop.f32.mrf.mxu0
      %v2807 = vadd.f32 0.0, %v2806
      %v2808 = vpop.f32.mrf.mxu0
      %2809 = vmatprep.mubr.bf16.mxu0 0
      %2810 = vmatmul.mubr.bf16.gmra.mxu0 %v2701
      %v2811 = vpop.f32.mrf.mxu0
      %v2812 = vadd.f32 0.0, %v2811
      %v2813 = vpop.f32.mrf.mxu0
      %v2814 = vpop.f32.mrf.mxu0
      %v2815 = vadd.f32 0.0, %v2814
      %v2816 = vpop.f32.mrf.mxu0
      %2817 = vmatprep.mubr.bf16.mxu0 0
      %2818 = vmatmul.mubr.bf16.gmra.mxu0 %v2702
      %v2819 = vpop.f32.mrf.mxu0
      %v2820 = vadd.f32 0.0, %v2819
      %v2821 = vpop.f32.mrf.mxu0
      %v2822 = vpop.f32.mrf.mxu0
      %v2823 = vadd.f32 0.0, %v2822
      %v2824 = vpop.f32.mrf.mxu0
      %2825 = vmatprep.mubr.bf16.mxu0 0
      %2826 = vmatmul.mubr.bf16.gmra.mxu0 %v2703
      %v2827 = vpop.f32.mrf.mxu0
      %v2828 = vadd.f32 0.0, %v2827
      %v2829 = vpop.f32.mrf.mxu0
      %v2830 = vpop.f32.mrf.mxu0
      %v2831 = vadd.f32 0.0, %v2830
      %v2832 = vpop.f32.mrf.mxu0
      %2833 = vdwg.mxu0
      %v2834 = vadd.f32 %v2683, %v2804
      %v2835 = vadd.f32 %v2684, %v2807
      %v2836 = vadd.f32 %v2685, %v2812
      %v2837 = vadd.f32 %v2686, %v2815
      %v2838 = vadd.f32 %v2687, %v2820
      %v2839 = vadd.f32 %v2688, %v2823
      %v2840 = vadd.f32 %v2689, %v2828
      %v2841 = vadd.f32 %v2690, %v2831
      %v2842 = vld [vmem:[%s2691 + $0x1] sm:$0xff]
      %v2843 = vld [vmem:[%s2691 + $0x11] sm:$0xff]
      %v2844 = vld [vmem:[%s2691 + $0x21] sm:$0xff]
      %v2845 = vld [vmem:[%s2691 + $0x31] sm:$0xff]
      %v2846 = vld [vmem:[%s2691 + $0x41] sm:$0xff]
      %v2847 = vld [vmem:[%s2691 + $0x51] sm:$0xff]
      %v2848 = vld [vmem:[%s2691 + $0x61] sm:$0xff]
      %v2849 = vld [vmem:[%s2691 + $0x71] sm:$0xff]
      %v2850 = vpack.c.bf16 %v2843, %v2842
      %v2851 = vpack.c.bf16 %v2845, %v2844
      %v2852 = vpack.c.bf16 %v2847, %v2846
      %v2853 = vpack.c.bf16 %v2849, %v2848
      %s2854 = scalar_lea.vmem %s6, 448
      %v2855 = vld [vmem:[%s2854] sm:$0xf]
      %v2856 = vld [vmem:[%s2854 + $0x4] sm:$0xf]
      %v2857 = vld [vmem:[%s2854 + $0x8] sm:$0xf]
      %v2858 = vld [vmem:[%s2854 + $0xc] sm:$0xf]
      %v2859 = vld [vmem:[%s2854 + $0x10] sm:$0xf]
      %v2860 = vld [vmem:[%s2854 + $0x14] sm:$0xf]
      %v2861 = vld [vmem:[%s2854 + $0x18] sm:$0xf]
      %v2862 = vld [vmem:[%s2854 + $0x1c] sm:$0xf]
      %v2863 = vld [vmem:[%s2854 + $0x20] sm:$0xf]
      %v2864 = vld [vmem:[%s2854 + $0x24] sm:$0xf]
      %v2865 = vld [vmem:[%s2854 + $0x28] sm:$0xf]
      %v2866 = vld [vmem:[%s2854 + $0x2c] sm:$0xf]
      %v2867 = vld [vmem:[%s2854 + $0x30] sm:$0xf]
      %v2868 = vld [vmem:[%s2854 + $0x34] sm:$0xf]
      %v2869 = vld [vmem:[%s2854 + $0x38] sm:$0xf]
      %v2870 = vld [vmem:[%s2854 + $0x3c] sm:$0xf]
      %v2887 = vunpack.c.l.b16 %v2855
      %v2888 = vunpack.c.l.b16 %v2856
      %v2889 = vunpack.c.l.b16 %v2857
      %v2890 = vunpack.c.l.b16 %v2858
      %v2891 = vunpack.c.l.b16 %v2859
      %v2892 = vunpack.c.l.b16 %v2860
      %v2893 = vunpack.c.l.b16 %v2861
      %v2894 = vunpack.c.l.b16 %v2862
      %v2895 = vunpack.c.l.b16 %v2863
      %v2896 = vunpack.c.l.b16 %v2864
      %v2897 = vunpack.c.l.b16 %v2865
      %v2898 = vunpack.c.l.b16 %v2866
      %v2899 = vunpack.c.l.b16 %v2867
      %v2900 = vunpack.c.l.b16 %v2868
      %v2901 = vunpack.c.l.b16 %v2869
      %v2902 = vunpack.c.l.b16 %v2870
      %v2903 = vpack.c.b16 %v2888, %v2887
      %v2904 = vpack.c.b16 %v2890, %v2889
      %v2905 = vpack.c.b16 %v2892, %v2891
      %v2906 = vpack.c.b16 %v2894, %v2893
      %v2907 = vpack.c.b16 %v2896, %v2895
      %v2908 = vpack.c.b16 %v2898, %v2897
      %v2909 = vpack.c.b16 %v2900, %v2899
      %v2910 = vpack.c.b16 %v2902, %v2901
      %2919 = vmatprep.subr.bf16.mxu0 0
      %2920 = vmatpush1.bf16.msra.mxu0 %v2910
      %2921 = vmatprep.subr.bf16.mxu0 0
      %2922 = vmatpush1.bf16.msra.mxu0 %v2909
      %2923 = vmatprep.subr.bf16.mxu0 0
      %2924 = vmatpush1.bf16.msra.mxu0 %v2908
      %2925 = vmatprep.subr.bf16.mxu0 0
      %2926 = vmatpush1.bf16.msra.mxu0 %v2907
      %2927 = vmatprep.subr.bf16.mxu0 0
      %2928 = vmatpush1.bf16.msra.mxu0 %v2906
      %2929 = vmatprep.subr.bf16.mxu0 0
      %2930 = vmatpush1.bf16.msra.mxu0 %v2905
      %2931 = vmatprep.subr.bf16.mxu0 0
      %2932 = vmatpush1.bf16.msra.mxu0 %v2904
      %2933 = vmatprep.subr.bf16.mxu0 0
      %2934 = vmatpush1.bf16.msra.mxu0 %v2903
      %2935 = vmatprep.subr.bf16.mxu0 0
      %2936 = vmatpush2.bf16.msra.mxu0 0
      %2937 = vmatprep.subr.bf16.mxu0 0
      %2938 = vmatpush2.bf16.msra.mxu0 0
      %2939 = vmatprep.subr.bf16.mxu0 0
      %2940 = vmatpush2.bf16.msra.mxu0 0
      %2941 = vmatprep.subr.bf16.mxu0 0
      %2942 = vmatpush2.bf16.msra.mxu0 0
      %2943 = vmatprep.subr.bf16.mxu0 0
      %2944 = vmatpush2.bf16.msra.mxu0 0
      %2945 = vmatprep.subr.bf16.mxu0 0
      %2946 = vmatpush2.bf16.msra.mxu0 0
      %2947 = vmatprep.subr.bf16.mxu0 0
      %2948 = vmatpush2.bf16.msra.mxu0 0
      %2949 = vmatprep.subr.bf16.mxu0 0
      %2950 = vmatpush2.bf16.msra.mxu0 0
      %2951 = vmatprep.mubr.bf16.mxu0 0
      %2952 = vmatmul.mubr.bf16.gmra.mxu0 %v2850
      %v2953 = vpop.f32.mrf.mxu0
      %v2954 = vadd.f32 0.0, %v2953
      %v2955 = vpop.f32.mrf.mxu0
      %v2956 = vpop.f32.mrf.mxu0
      %v2957 = vadd.f32 0.0, %v2956
      %v2958 = vpop.f32.mrf.mxu0
      %2959 = vmatprep.mubr.bf16.mxu0 0
      %2960 = vmatmul.mubr.bf16.gmra.mxu0 %v2851
      %v2961 = vpop.f32.mrf.mxu0
      %v2962 = vadd.f32 0.0, %v2961
      %v2963 = vpop.f32.mrf.mxu0
      %v2964 = vpop.f32.mrf.mxu0
      %v2965 = vadd.f32 0.0, %v2964
      %v2966 = vpop.f32.mrf.mxu0
      %2967 = vmatprep.mubr.bf16.mxu0 0
      %2968 = vmatmul.mubr.bf16.gmra.mxu0 %v2852
      %v2969 = vpop.f32.mrf.mxu0
      %v2970 = vadd.f32 0.0, %v2969
      %v2971 = vpop.f32.mrf.mxu0
      %v2972 = vpop.f32.mrf.mxu0
      %v2973 = vadd.f32 0.0, %v2972
      %v2974 = vpop.f32.mrf.mxu0
      %2975 = vmatprep.mubr.bf16.mxu0 0
      %2976 = vmatmul.mubr.bf16.gmra.mxu0 %v2853
      %v2977 = vpop.f32.mrf.mxu0
      %v2978 = vadd.f32 0.0, %v2977
      %v2979 = vpop.f32.mrf.mxu0
      %v2980 = vpop.f32.mrf.mxu0
      %v2981 = vadd.f32 0.0, %v2980
      %v2982 = vpop.f32.mrf.mxu0
      %2983 = vdwg.mxu0
      %v2984 = vadd.f32 %v2834, %v2954
      %v2985 = vadd.f32 %v2835, %v2957
      %v2986 = vadd.f32 %v2836, %v2962
      %v2987 = vadd.f32 %v2837, %v2965
      %v2988 = vadd.f32 %v2838, %v2970
      %v2989 = vadd.f32 %v2839, %v2973
      %v2990 = vadd.f32 %v2840, %v2978
      %v2991 = vadd.f32 %v2841, %v2981
      %v2992 = vld [vmem:[%s2691 + $0x2] sm:$0xff]
      %v2993 = vld [vmem:[%s2691 + $0x12] sm:$0xff]
      %v2994 = vld [vmem:[%s2691 + $0x22] sm:$0xff]
      %v2995 = vld [vmem:[%s2691 + $0x32] sm:$0xff]
      %v2996 = vld [vmem:[%s2691 + $0x42] sm:$0xff]
      %v2997 = vld [vmem:[%s2691 + $0x52] sm:$0xff]
      %v2998 = vld [vmem:[%s2691 + $0x62] sm:$0xff]
      %v2999 = vld [vmem:[%s2691 + $0x72] sm:$0xff]
      %v3000 = vpack.c.bf16 %v2993, %v2992
      %v3001 = vpack.c.bf16 %v2995, %v2994
      %v3002 = vpack.c.bf16 %v2997, %v2996
      %v3003 = vpack.c.bf16 %v2999, %v2998
      %s3004 = scalar_lea.vmem %s6, 512
      %v3005 = vld [vmem:[%s3004] sm:$0xf]
      %v3006 = vld [vmem:[%s3004 + $0x4] sm:$0xf]
      %v3007 = vld [vmem:[%s3004 + $0x8] sm:$0xf]
      %v3008 = vld [vmem:[%s3004 + $0xc] sm:$0xf]
      %v3009 = vld [vmem:[%s3004 + $0x10] sm:$0xf]
      %v3010 = vld [vmem:[%s3004 + $0x14] sm:$0xf]
      %v3011 = vld [vmem:[%s3004 + $0x18] sm:$0xf]
      %v3012 = vld [vmem:[%s3004 + $0x1c] sm:$0xf]
      %v3013 = vld [vmem:[%s3004 + $0x20] sm:$0xf]
      %v3014 = vld [vmem:[%s3004 + $0x24] sm:$0xf]
      %v3015 = vld [vmem:[%s3004 + $0x28] sm:$0xf]
      %v3016 = vld [vmem:[%s3004 + $0x2c] sm:$0xf]
      %v3017 = vld [vmem:[%s3004 + $0x30] sm:$0xf]
      %v3018 = vld [vmem:[%s3004 + $0x34] sm:$0xf]
      %v3019 = vld [vmem:[%s3004 + $0x38] sm:$0xf]
      %v3020 = vld [vmem:[%s3004 + $0x3c] sm:$0xf]
      %v3037 = vunpack.c.l.b16 %v3005
      %v3038 = vunpack.c.l.b16 %v3006
      %v3039 = vunpack.c.l.b16 %v3007
      %v3040 = vunpack.c.l.b16 %v3008
      %v3041 = vunpack.c.l.b16 %v3009
      %v3042 = vunpack.c.l.b16 %v3010
      %v3043 = vunpack.c.l.b16 %v3011
      %v3044 = vunpack.c.l.b16 %v3012
      %v3045 = vunpack.c.l.b16 %v3013
      %v3046 = vunpack.c.l.b16 %v3014
      %v3047 = vunpack.c.l.b16 %v3015
      %v3048 = vunpack.c.l.b16 %v3016
      %v3049 = vunpack.c.l.b16 %v3017
      %v3050 = vunpack.c.l.b16 %v3018
      %v3051 = vunpack.c.l.b16 %v3019
      %v3052 = vunpack.c.l.b16 %v3020
      %v3053 = vpack.c.b16 %v3038, %v3037
      %v3054 = vpack.c.b16 %v3040, %v3039
      %v3055 = vpack.c.b16 %v3042, %v3041
      %v3056 = vpack.c.b16 %v3044, %v3043
      %v3057 = vpack.c.b16 %v3046, %v3045
      %v3058 = vpack.c.b16 %v3048, %v3047
      %v3059 = vpack.c.b16 %v3050, %v3049
      %v3060 = vpack.c.b16 %v3052, %v3051
      %3069 = vmatprep.subr.bf16.mxu0 0
      %3070 = vmatpush1.bf16.msra.mxu0 %v3060
      %3071 = vmatprep.subr.bf16.mxu0 0
      %3072 = vmatpush1.bf16.msra.mxu0 %v3059
      %3073 = vmatprep.subr.bf16.mxu0 0
      %3074 = vmatpush1.bf16.msra.mxu0 %v3058
      %3075 = vmatprep.subr.bf16.mxu0 0
      %3076 = vmatpush1.bf16.msra.mxu0 %v3057
      %3077 = vmatprep.subr.bf16.mxu0 0
      %3078 = vmatpush1.bf16.msra.mxu0 %v3056
      %3079 = vmatprep.subr.bf16.mxu0 0
      %3080 = vmatpush1.bf16.msra.mxu0 %v3055
      %3081 = vmatprep.subr.bf16.mxu0 0
      %3082 = vmatpush1.bf16.msra.mxu0 %v3054
      %3083 = vmatprep.subr.bf16.mxu0 0
      %3084 = vmatpush1.bf16.msra.mxu0 %v3053
      %3085 = vmatprep.subr.bf16.mxu0 0
      %3086 = vmatpush2.bf16.msra.mxu0 0
      %3087 = vmatprep.subr.bf16.mxu0 0
      %3088 = vmatpush2.bf16.msra.mxu0 0
      %3089 = vmatprep.subr.bf16.mxu0 0
      %3090 = vmatpush2.bf16.msra.mxu0 0
      %3091 = vmatprep.subr.bf16.mxu0 0
      %3092 = vmatpush2.bf16.msra.mxu0 0
      %3093 = vmatprep.subr.bf16.mxu0 0
      %3094 = vmatpush2.bf16.msra.mxu0 0
      %3095 = vmatprep.subr.bf16.mxu0 0
      %3096 = vmatpush2.bf16.msra.mxu0 0
      %3097 = vmatprep.subr.bf16.mxu0 0
      %3098 = vmatpush2.bf16.msra.mxu0 0
      %3099 = vmatprep.subr.bf16.mxu0 0
      %3100 = vmatpush2.bf16.msra.mxu0 0
      %3101 = vmatprep.mubr.bf16.mxu0 0
      %3102 = vmatmul.mubr.bf16.gmra.mxu0 %v3000
      %v3103 = vpop.f32.mrf.mxu0
      %v3104 = vadd.f32 0.0, %v3103
      %v3105 = vpop.f32.mrf.mxu0
      %v3106 = vpop.f32.mrf.mxu0
      %v3107 = vadd.f32 0.0, %v3106
      %v3108 = vpop.f32.mrf.mxu0
      %3109 = vmatprep.mubr.bf16.mxu0 0
      %3110 = vmatmul.mubr.bf16.gmra.mxu0 %v3001
      %v3111 = vpop.f32.mrf.mxu0
      %v3112 = vadd.f32 0.0, %v3111
      %v3113 = vpop.f32.mrf.mxu0
      %v3114 = vpop.f32.mrf.mxu0
      %v3115 = vadd.f32 0.0, %v3114
      %v3116 = vpop.f32.mrf.mxu0
      %3117 = vmatprep.mubr.bf16.mxu0 0
      %3118 = vmatmul.mubr.bf16.gmra.mxu0 %v3002
      %v3119 = vpop.f32.mrf.mxu0
      %v3120 = vadd.f32 0.0, %v3119
      %v3121 = vpop.f32.mrf.mxu0
      %v3122 = vpop.f32.mrf.mxu0
      %v3123 = vadd.f32 0.0, %v3122
      %v3124 = vpop.f32.mrf.mxu0
      %3125 = vmatprep.mubr.bf16.mxu0 0
      %3126 = vmatmul.mubr.bf16.gmra.mxu0 %v3003
      %v3127 = vpop.f32.mrf.mxu0
      %v3128 = vadd.f32 0.0, %v3127
      %v3129 = vpop.f32.mrf.mxu0
      %v3130 = vpop.f32.mrf.mxu0
      %v3131 = vadd.f32 0.0, %v3130
      %v3132 = vpop.f32.mrf.mxu0
      %3133 = vdwg.mxu0
      %v3134 = vadd.f32 %v2984, %v3104
      %v3135 = vadd.f32 %v2985, %v3107
      %v3136 = vadd.f32 %v2986, %v3112
      %v3137 = vadd.f32 %v2987, %v3115
      %v3138 = vadd.f32 %v2988, %v3120
      %v3139 = vadd.f32 %v2989, %v3123
      %v3140 = vadd.f32 %v2990, %v3128
      %v3141 = vadd.f32 %v2991, %v3131
      %v3142 = vld [vmem:[%s7] sm:$0x1]
      %v3144 = vlaneseq
      %v3145 = vshrl.u32 %v3144, 7
      %v3146 = vsub.s32 0, %v3145
      %v3147 = vrot.slane %v3142, %v3146
      %v3149 = vadd.f32 %v3134, %v3147
      %v3150 = vadd.f32 %v3135, %v3147
      %v3151 = vadd.f32 %v3136, %v3147
      %v3152 = vadd.f32 %v3137, %v3147
      %v3153 = vadd.f32 %v3138, %v3147
      %v3154 = vadd.f32 %v3139, %v3147
      %v3155 = vadd.f32 %v3140, %v3147
      %v3156 = vadd.f32 %v3141, %v3147
      %v3157 = vld [vmem:[%s414] sm:$0xff]
      %v3158 = vld [vmem:[%s414 + $0x10] sm:$0xff]
      %v3159 = vld [vmem:[%s414 + $0x20] sm:$0xff]
      %v3160 = vld [vmem:[%s414 + $0x30] sm:$0xff]
      %v3161 = vld [vmem:[%s414 + $0x40] sm:$0xff]
      %v3162 = vld [vmem:[%s414 + $0x50] sm:$0xff]
      %v3163 = vld [vmem:[%s414 + $0x60] sm:$0xff]
      %v3164 = vld [vmem:[%s414 + $0x70] sm:$0xff]
      %v3165 = vpack.c.bf16 %v3158, %v3157
      %v3166 = vpack.c.bf16 %v3160, %v3159
      %v3167 = vpack.c.bf16 %v3162, %v3161
      %v3168 = vpack.c.bf16 %v3164, %v3163
      %v3169 = vld [vmem:[%s8] sm:$0xf]
      %v3170 = vld [vmem:[%s8 + $0x4] sm:$0xf]
      %v3171 = vld [vmem:[%s8 + $0x8] sm:$0xf]
      %v3172 = vld [vmem:[%s8 + $0xc] sm:$0xf]
      %v3173 = vld [vmem:[%s8 + $0x10] sm:$0xf]
      %v3174 = vld [vmem:[%s8 + $0x14] sm:$0xf]
      %v3175 = vld [vmem:[%s8 + $0x18] sm:$0xf]
      %v3176 = vld [vmem:[%s8 + $0x1c] sm:$0xf]
      %v3177 = vld [vmem:[%s8 + $0x20] sm:$0xf]
      %v3178 = vld [vmem:[%s8 + $0x24] sm:$0xf]
      %v3179 = vld [vmem:[%s8 + $0x28] sm:$0xf]
      %v3180 = vld [vmem:[%s8 + $0x2c] sm:$0xf]
      %v3181 = vld [vmem:[%s8 + $0x30] sm:$0xf]
      %v3182 = vld [vmem:[%s8 + $0x34] sm:$0xf]
      %v3183 = vld [vmem:[%s8 + $0x38] sm:$0xf]
      %v3184 = vld [vmem:[%s8 + $0x3c] sm:$0xf]
      %v3185 = vld [vmem:[%s9] sm:$0x1]
      %v3187 = vlaneseq
      %v3188 = vshrl.u32 %v3187, 7
      %v3189 = vsub.s32 0, %v3188
      %v3190 = vrot.slane %v3185, %v3189
      %v3208 = vunpack.c.l.b16 %v3169
      %v3209 = vunpack.c.l.b16 %v3170
      %v3210 = vunpack.c.l.b16 %v3171
      %v3211 = vunpack.c.l.b16 %v3172
      %v3212 = vunpack.c.l.b16 %v3173
      %v3213 = vunpack.c.l.b16 %v3174
      %v3214 = vunpack.c.l.b16 %v3175
      %v3215 = vunpack.c.l.b16 %v3176
      %v3216 = vunpack.c.l.b16 %v3177
      %v3217 = vunpack.c.l.b16 %v3178
      %v3218 = vunpack.c.l.b16 %v3179
      %v3219 = vunpack.c.l.b16 %v3180
      %v3220 = vunpack.c.l.b16 %v3181
      %v3221 = vunpack.c.l.b16 %v3182
      %v3222 = vunpack.c.l.b16 %v3183
      %v3223 = vunpack.c.l.b16 %v3184
      %v3224 = vpack.c.b16 %v3209, %v3208
      %v3225 = vpack.c.b16 %v3211, %v3210
      %v3226 = vpack.c.b16 %v3213, %v3212
      %v3227 = vpack.c.b16 %v3215, %v3214
      %v3228 = vpack.c.b16 %v3217, %v3216
      %v3229 = vpack.c.b16 %v3219, %v3218
      %v3230 = vpack.c.b16 %v3221, %v3220
      %v3231 = vpack.c.b16 %v3223, %v3222
      %3240 = vmatprep.subr.bf16.mxu0 0
      %3241 = vmatpush1.bf16.msra.mxu0 %v3231
      %3242 = vmatprep.subr.bf16.mxu0 0
      %3243 = vmatpush1.bf16.msra.mxu0 %v3230
      %3244 = vmatprep.subr.bf16.mxu0 0
      %3245 = vmatpush1.bf16.msra.mxu0 %v3229
      %3246 = vmatprep.subr.bf16.mxu0 0
      %3247 = vmatpush1.bf16.msra.mxu0 %v3228
      %3248 = vmatprep.subr.bf16.mxu0 0
      %3249 = vmatpush1.bf16.msra.mxu0 %v3227
      %3250 = vmatprep.subr.bf16.mxu0 0
      %3251 = vmatpush1.bf16.msra.mxu0 %v3226
      %3252 = vmatprep.subr.bf16.mxu0 0
      %3253 = vmatpush1.bf16.msra.mxu0 %v3225
      %3254 = vmatprep.subr.bf16.mxu0 0
      %3255 = vmatpush1.bf16.msra.mxu0 %v3224
      %3256 = vmatprep.subr.bf16.mxu0 0
      %3257 = vmatpush2.bf16.msra.mxu0 0
      %3258 = vmatprep.subr.bf16.mxu0 0
      %3259 = vmatpush2.bf16.msra.mxu0 0
      %3260 = vmatprep.subr.bf16.mxu0 0
      %3261 = vmatpush2.bf16.msra.mxu0 0
      %3262 = vmatprep.subr.bf16.mxu0 0
      %3263 = vmatpush2.bf16.msra.mxu0 0
      %3264 = vmatprep.subr.bf16.mxu0 0
      %3265 = vmatpush2.bf16.msra.mxu0 0
      %3266 = vmatprep.subr.bf16.mxu0 0
      %3267 = vmatpush2.bf16.msra.mxu0 0
      %3268 = vmatprep.subr.bf16.mxu0 0
      %3269 = vmatpush2.bf16.msra.mxu0 0
      %3270 = vmatprep.subr.bf16.mxu0 0
      %3271 = vmatpush2.bf16.msra.mxu0 0
      %3272 = vmatprep.mubr.bf16.mxu0 0
      %3273 = vmatmul.mubr.bf16.gmra.mxu0 %v3165
      %v3274 = vpop.f32.mrf.mxu0
      %v3275 = vadd.f32 %v3190, %v3274
      %v3276 = vpop.f32.mrf.mxu0
      %v3277 = vpop.f32.mrf.mxu0
      %v3278 = vadd.f32 %v3190, %v3277
      %v3279 = vpop.f32.mrf.mxu0
      %3280 = vmatprep.mubr.bf16.mxu0 0
      %3281 = vmatmul.mubr.bf16.gmra.mxu0 %v3166
      %v3282 = vpop.f32.mrf.mxu0
      %v3283 = vadd.f32 %v3190, %v3282
      %v3284 = vpop.f32.mrf.mxu0
      %v3285 = vpop.f32.mrf.mxu0
      %v3286 = vadd.f32 %v3190, %v3285
      %v3287 = vpop.f32.mrf.mxu0
      %3288 = vmatprep.mubr.bf16.mxu0 0
      %3289 = vmatmul.mubr.bf16.gmra.mxu0 %v3167
      %v3290 = vpop.f32.mrf.mxu0
      %v3291 = vadd.f32 %v3190, %v3290
      %v3292 = vpop.f32.mrf.mxu0
      %v3293 = vpop.f32.mrf.mxu0
      %v3294 = vadd.f32 %v3190, %v3293
      %v3295 = vpop.f32.mrf.mxu0
      %3296 = vmatprep.mubr.bf16.mxu0 0
      %3297 = vmatmul.mubr.bf16.gmra.mxu0 %v3168
      %v3298 = vpop.f32.mrf.mxu0
      %v3299 = vadd.f32 %v3190, %v3298
      %v3300 = vpop.f32.mrf.mxu0
      %v3301 = vpop.f32.mrf.mxu0
      %v3302 = vadd.f32 %v3190, %v3301
      %v3303 = vpop.f32.mrf.mxu0
      %3304 = vdwg.mxu0
      %v3305 = vadd.f32 %v3149, %v3275
      %v3306 = vadd.f32 %v3150, %v3278
      %v3307 = vadd.f32 %v3151, %v3283
      %v3308 = vadd.f32 %v3152, %v3286
      %v3309 = vadd.f32 %v3153, %v3291
      %v3310 = vadd.f32 %v3154, %v3294
      %v3311 = vadd.f32 %v3155, %v3299
      %v3312 = vadd.f32 %v3156, %v3302
      %v3313 = vmax.f32 %v3305, 0.0
      %v3314 = vmax.f32 %v3306, 0.0
      %v3315 = vmax.f32 %v3307, 0.0
      %v3316 = vmax.f32 %v3308, 0.0
      %v3317 = vmax.f32 %v3309, 0.0
      %v3318 = vmax.f32 %v3310, 0.0
      %v3319 = vmax.f32 %v3311, 0.0
      %v3320 = vmax.f32 %v3312, 0.0
      %3321 = vst [vmem:[%s419] sm:$0xff] %v3313
      %3322 = vst [vmem:[%s419 + $0x8] sm:$0xff] %v3314
      %3323 = vst [vmem:[%s419 + $0x10] sm:$0xff] %v3315
      %3324 = vst [vmem:[%s419 + $0x18] sm:$0xff] %v3316
      %3325 = vst [vmem:[%s419 + $0x20] sm:$0xff] %v3317
      %3326 = vst [vmem:[%s419 + $0x28] sm:$0xff] %v3318
      %3327 = vst [vmem:[%s419 + $0x30] sm:$0xff] %v3319
      %3328 = vst [vmem:[%s419 + $0x38] sm:$0xff] %v3320
      %p3329 = scmp.lt.s32.totalorder %s21, 1
      %s3330 = scalar_select %p3329, %s21, 1
      %s3331 = smul.addr %s3330, 8
      %s3332 = smul.addr %s3331, 8
      %s3333 = scalar_lea.vmem %s10, %s3332
      // Predicated region
      $region61: #{basic_block_forward.1} parent=59 // pred_check
        %p3334 = pneg %p269
      $region62: #{basic_block_forward.1} parent=59 // pred_check_branch
        %3336 = sbr.rel (%p3334) target = $region64
      $region63: #{basic_block_forward.1} parent=59 // pred_region
        _
      $region64: #{basic_block_forward.1} parent=59 // pred_fallthru
        _
    $region60: #{basic_block_forward.1} parent=5 // pred_fallthru
      _
    %p3337 = scmp.le.s32.totalorder 2, %s16
    // Predicated region
    $region65: #{basic_block_forward.1} parent=5 // pred_check
      %p3338 = pneg %p3337
    $region66: #{basic_block_forward.1} parent=5 // pred_check_branch
      %3340 = sbr.rel (%p3338) target = $region68
    $region67: #{basic_block_forward.1} parent=5 // pred_region
      %s3341 = ssub.s32 %s16, 2
      // Predicated region
      $region69: #{basic_block_forward.1} parent=67 // pred_check
        %p3342 = pneg %p275
      $region70: #{basic_block_forward.1} parent=67 // pred_check_branch
        %3344 = sbr.rel (%p3342) target = $region72
      $region71: #{basic_block_forward.1} parent=67 // pred_region
        %p3345 = scmp.lt.s32.totalorder %s22, 1
        %s3346 = scalar_select %p3345, %s22, 1
        %s3347 = smul.addr %s3346, 8
        %s3348 = smul.addr %s3347, 8
        %s3349 = scalar_lea.vmem %s10, %s3348
      $region72: #{basic_block_forward.1} parent=67 // pred_fallthru
        _
    $region68: #{basic_block_forward.1} parent=5 // pred_fallthru
      _
  $region6: #{basic_block_forward.1} parent=0 // loop_footer
    %s20 = sadd.s32 1, %s16
  $region7: #{basic_block_forward.1} parent=0 // loop_footer_branch
    %15 = sbr.rel target = $region3
  $region8: #{basic_block_forward.1} parent=0 // loop_exit
    _

</llo_original>
